<compile_context>
chip_gen: v6e
topology: v6e:2x2x1
jax: 0.10.0
libtpu: 0.0.40
codegen_flags: <defaults>
</compile_context>

<pallas_src>
import jax
import jax.numpy as jnp
from jax.experimental import pallas as pl
from jax.experimental.pallas import tpu as pltpu

LN_EPS = 1e-5  # GPT-2 LayerNorm eps


# --------------------------------------------------------------------------- #
# shared math helpers (used by kernels and references)
# --------------------------------------------------------------------------- #
def _gelu_new(x):
    # GPT-2 "gelu_new": 0.5*x*(1 + tanh(sqrt(2/pi)*(x + 0.044715*x^3)))
    c = jnp.sqrt(2.0 / jnp.pi).astype(x.dtype)
    return 0.5 * x * (1.0 + jnp.tanh(c * (x + 0.044715 * x * x * x)))


def _layernorm(h, g, b):
    mu = jnp.mean(h, axis=-1, keepdims=True)
    var = jnp.mean(jnp.square(h - mu), axis=-1, keepdims=True)
    return (h - mu) * jax.lax.rsqrt(var + LN_EPS) * g + b


# --------------------------------------------------------------------------- #
# Kernel 1: CLIP.forward = branch1(x), branch2(x), f1 @ f2.T  (fused, single step)
# --------------------------------------------------------------------------- #
def clip_head_kernel(x_ref, w1a_ref, b1a_ref, w1b_ref, b1b_ref,
                     w2a_ref, b2a_ref, w2b_ref, b2b_ref, out_ref):
    f32 = jnp.float32
    x = x_ref[...]
    h1 = jnp.maximum(jnp.dot(x, w1a_ref[...], preferred_element_type=f32) + b1a_ref[...], 0.0)
    f1 = jnp.dot(h1, w1b_ref[...], preferred_element_type=f32) + b1b_ref[...]
    h2 = jnp.maximum(jnp.dot(x, w2a_ref[...], preferred_element_type=f32) + b2a_ref[...], 0.0)
    f2 = jnp.dot(h2, w2b_ref[...], preferred_element_type=f32) + b2b_ref[...]
    # f1 @ f2.T without materializing a transpose: contract both on the feature axis.
    out_ref[...] = jax.lax.dot_general(
        f1, f2, dimension_numbers=(((1,), (1,)), ((), ())), preferred_element_type=f32)


def clip_head(feature, p):
    B, IN = feature.shape
    HID = p["w1a"].shape[1]
    OUT = p["w1b"].shape[1]
    full2d = lambda shp: pl.BlockSpec(shp, lambda i: (0, 0))
    return pl.pallas_call(
        clip_head_kernel,
        out_shape=jax.ShapeDtypeStruct((B, B), jnp.float32),
        grid=(1,),
        in_specs=[
            full2d((B, IN)),
            full2d((IN, HID)), full2d((1, HID)),
            full2d((HID, OUT)), full2d((1, OUT)),
            full2d((IN, HID)), full2d((1, HID)),
            full2d((HID, OUT)), full2d((1, OUT)),
        ],
        out_specs=full2d((B, B)),
        compiler_params=pltpu.CompilerParams(dimension_semantics=("arbitrary",)),
    )(feature, p["w1a"], p["b1a"], p["w1b"], p["b1b"],
      p["w2a"], p["b2a"], p["w2b"], p["b2b"])


def clip_head_ref(x, p):
    h1 = jnp.maximum(x @ p["w1a"] + p["b1a"], 0.0)
    f1 = h1 @ p["w1b"] + p["b1b"]
    h2 = jnp.maximum(x @ p["w2a"] + p["b2a"], 0.0)
    f2 = h2 @ p["w2b"] + p["b2b"]
    return f1 @ f2.T


def init_clip_head_params(key, in_dim, hid, out):
    ks = jax.random.split(key, 8)
    s = 0.02
    return {
        "w1a": s * jax.random.normal(ks[0], (in_dim, hid), jnp.float32),
        "b1a": s * jax.random.normal(ks[1], (1, hid), jnp.float32),
        "w1b": s * jax.random.normal(ks[2], (hid, out), jnp.float32),
        "b1b": s * jax.random.normal(ks[3], (1, out), jnp.float32),
        "w2a": s * jax.random.normal(ks[4], (in_dim, hid), jnp.float32),
        "b2a": s * jax.random.normal(ks[5], (1, hid), jnp.float32),
        "w2b": s * jax.random.normal(ks[6], (hid, out), jnp.float32),
        "b2b": s * jax.random.normal(ks[7], (1, out), jnp.float32),
    }


# --------------------------------------------------------------------------- #
# Kernel 2: VectorDecoder = fc -> GPT-2 (seq_len == 1) -> squeeze
#   grid = (L layers, C MLP H-chunks); hidden state carried in VMEM scratch.
# --------------------------------------------------------------------------- #
def gpt2_stack_kernel(
    h0_ref, vecs_ref, wv_ref, wo_ref, wfc_ref, bfc_ref, wpr_ref, lnf_ref,
    out_ref, h_ref, m_ref, acc_ref,
):
    l = pl.program_id(0)
    c = pl.program_id(1)
    last_l = pl.num_programs(0) - 1
    last_c = pl.num_programs(1) - 1
    bf16, f32 = jnp.bfloat16, jnp.float32

    @pl.when((l == 0) & (c == 0))
    def _init():
        # fc + position-0 embedding were hoisted to XLA; just seed the residual stream.
        h_ref[...] = h0_ref[...]

    # ---- attention sub-block + ln_2 (once per layer, on the first H chunk) ----
    @pl.when(c == 0)
    def _attn():
        h = h_ref[...]
        vec = vecs_ref[0]                                   # (8, D) packed f32 slab
        a = _layernorm(h, vec[0:1], vec[1:2])
        # seq_len == 1 (x.unsqueeze(1)): causal softmax over a single key is exactly 1,
        # so the attention context equals the value -> output projection (q/k cancel).
        v = jnp.dot(a.astype(bf16), wv_ref[0], preferred_element_type=f32) + vec[2:3]
        attn = jnp.dot(v.astype(bf16), wo_ref[0], preferred_element_type=f32) + vec[3:4]
        h = h + attn
        h_ref[...] = h
        m_ref[...] = _layernorm(h, vec[4:5], vec[5:6]).astype(bf16)
        acc_ref[...] = jnp.zeros_like(acc_ref)

    # ---- MLP sub-block: one H chunk per grid step (bf16 weights, f32 accumulation) ----
    f = jnp.dot(m_ref[...], wfc_ref[0], preferred_element_type=f32) + bfc_ref[0]
    f = _gelu_new(f)
    acc_ref[...] += jnp.dot(f.astype(bf16), wpr_ref[0], preferred_element_type=f32)

    @pl.when(c == last_c)
    def _finish_layer():
        h_ref[...] = h_ref[...] + acc_ref[...] + vecs_ref[0][6:7]   # + mlp out-proj bias

    @pl.when((l == last_l) & (c == last_c))
    def _emit():
        # final ln_f of GPT2Model, then .squeeze(1) (seq dim already folded away).
        out_ref[...] = _layernorm(h_ref[...], lnf_ref[0:1], lnf_ref[1:2]).astype(out_ref.dtype)


def _vmem_capacity_bytes():
    try:
        return int(pltpu.get_tpu_info().vmem_capacity_bytes)
    except Exception:
        return 64 << 20          # conservative default (v7x per-core VMEM)


def _per_step_stream_bytes(D, TH):
    # Double-buffered per-grid-step streamed blocks: two (D,D) + (D,TH) + (TH,D) bf16
    # matrices plus the packed (8,D) f32 vector slab and the (1,TH) f32 MLP bias.
    return 2 * ((2 * D * D + 2 * D * TH) * 2 + (8 * D + TH) * 4)


def _auto_h_chunks(D, H, budget_bytes):
    # Split the MLP H dimension only when the double-buffered per-layer block would
    # not fit the VMEM budget (matters for GPT-2-sized widths on v7x's 64 MiB VMEM;
    # on v5e/v6e's 128 MiB a single big block is preferred — fewer, larger DMAs).
    chunks = 1
    while (_per_step_stream_bytes(D, H // chunks) > budget_bytes
           and H % (2 * chunks) == 0 and (H // (2 * chunks)) % 128 == 0):
        chunks *= 2
    return chunks


def _vmem_limit_bytes(B, D, TH, vmem_cap):
    est = (_per_step_stream_bytes(D, TH)          # streamed weights, double-buffered
           + 2 * B * D * 4 + 2 * D * 4            # resident h0, out, ln_f
           + B * D * (4 + 2 + 4)                  # h / m / acc scratch
           + B * TH * 4)                          # MLP intermediate
    return int(min(max(2 * est, 32 << 20), vmem_cap - (8 << 20)))


def vector_decoder(x, params, *, h_chunks=None):
    """fc -> GPT-2 (seq_len == 1) -> squeeze.  x: (B, input_dim) -> (B, D)."""
    B, _ = x.shape
    D = params["fc_w"].shape[1]
    L = params["w_v"].shape[0]
    H = params["w_fc"].shape[2]

    # One-shot work hoisted to XLA (perf review): fc projection + position-0 embedding.
    h0 = (x @ params["fc_w"] + params["fc_b"] + params["wpe0"]).astype(jnp.float32)

    # bf16 weight streaming: halves HBM->VMEM bytes; MXU accumulates in f32.
    w_v = params["w_v"].astype(jnp.bfloat16)
    w_o = params["w_o"].astype(jnp.bfloat16)
    w_fc = params["w_fc"].astype(jnp.bfloat16)
    w_proj = params["w_proj"].astype(jnp.bfloat16)

    vmem_cap = _vmem_capacity_bytes()
    if h_chunks is None:
        h_chunks = _auto_h_chunks(D, H, budget_bytes=int(0.6 * vmem_cap))
    assert H % h_chunks == 0
    TH = H // h_chunks
    assert h_chunks == 1 or TH % 128 == 0, "MLP H chunks must stay lane-aligned"

    grid_spec = pltpu.PrefetchScalarGridSpec(
        num_scalar_prefetch=0,
        grid=(L, h_chunks),                                  # layer outer, H-chunk inner
        in_specs=[
            pl.BlockSpec((B, D), lambda l, c: (0, 0)),       # h0 (resident, tiny)
            pl.BlockSpec((1, 8, D), lambda l, c: (l, 0, 0)),  # packed per-layer vectors
            pl.BlockSpec((1, D, D), lambda l, c: (l, 0, 0)),  # w_v   (bf16, V slice of c_attn)
            pl.BlockSpec((1, D, D), lambda l, c: (l, 0, 0)),  # w_o   (bf16, attn c_proj)
            pl.BlockSpec((1, D, TH), lambda l, c: (l, 0, c)),  # w_fc  (bf16, mlp c_fc chunk)
            pl.BlockSpec((1, 1, TH), lambda l, c: (l, 0, c)),  # b_fc  (f32 chunk)
            pl.BlockSpec((1, TH, D), lambda l, c: (l, c, 0)),  # w_proj(bf16, mlp c_proj chunk)
            pl.BlockSpec((2, D), lambda l, c: (0, 0)),         # ln_f gamma/beta
        ],
        out_specs=pl.BlockSpec((B, D), lambda l, c: (0, 0)),
        scratch_shapes=[
            pltpu.VMEM((B, D), jnp.float32),   # h   (residual stream, layer-resident)
            pltpu.VMEM((B, D), jnp.bfloat16),  # m   (ln_2 output, reused across H chunks)
            pltpu.VMEM((B, D), jnp.float32),   # acc (MLP output accumulator)
        ],
    )

    return pl.pallas_call(
        gpt2_stack_kernel,
        out_shape=jax.ShapeDtypeStruct((B, D), jnp.float32),
        grid_spec=grid_spec,
        compiler_params=pltpu.CompilerParams(
            # Both axes carry VMEM state (h across layers, m/acc across H chunks),
            # so both stay "arbitrary" (never shard the layer axis across cores).
            dimension_semantics=("arbitrary", "arbitrary"),
            vmem_limit_bytes=_vmem_limit_bytes(B, D, TH, vmem_cap),
        ),
    )(h0, params["layer_vecs"], w_v, w_o, w_fc, params["b_fc"], w_proj, params["lnf"])


def init_decoder_params(key, input_dim, d_model, n_layers, mlp_mult=4):
    """Deterministic synthetic GPT-2-style parameters (no checkpoint download)."""
    D, H, L = d_model, mlp_mult * d_model, n_layers
    ks = jax.random.split(key, 17)
    s = 0.02
    # Packed per-layer (8, D) slab (one DMA per layer instead of 7 tiny ones):
    #   0: ln_1 gamma  1: ln_1 beta  2: attn value bias  3: attn out-proj bias
    #   4: ln_2 gamma  5: ln_2 beta  6: mlp out-proj bias 7: zero padding
    layer_vecs = jnp.stack(
        [
            1.0 + 0.05 * jax.random.normal(ks[0], (L, D), jnp.float32),
            0.05 * jax.random.normal(ks[1], (L, D), jnp.float32),
            s * jax.random.normal(ks[2], (L, D), jnp.float32),
            s * jax.random.normal(ks[3], (L, D), jnp.float32),
            1.0 + 0.05 * jax.random.normal(ks[4], (L, D), jnp.float32),
            0.05 * jax.random.normal(ks[5], (L, D), jnp.float32),
            s * jax.random.normal(ks[6], (L, D), jnp.float32),
            jnp.zeros((L, D), jnp.float32),
        ],
        axis=1,
    )  # (L, 8, D)
    lnf = jnp.stack(
        [1.0 + 0.05 * jax.random.normal(ks[7], (D,), jnp.float32),
         0.05 * jax.random.normal(ks[8], (D,), jnp.float32)], axis=0)  # (2, D)
    return {
        "fc_w": s * jax.random.normal(ks[9], (input_dim, D), jnp.float32),
        "fc_b": s * jax.random.normal(ks[10], (1, D), jnp.float32),
        "wpe0": s * jax.random.normal(ks[11], (1, D), jnp.float32),
        "layer_vecs": layer_vecs,
        "w_v": s * jax.random.normal(ks[12], (L, D, D), jnp.float32),
        "w_o": s * jax.random.normal(ks[13], (L, D, D), jnp.float32),
        "w_fc": s * jax.random.normal(ks[14], (L, D, H), jnp.float32),
        "b_fc": s * jax.random.normal(ks[15], (L, 1, H), jnp.float32),
        "w_proj": s * jax.random.normal(ks[16], (L, H, D), jnp.float32),
        "lnf": lnf,
    }


def vector_decoder_ref(x, p):
    """Pure-JAX reference mirroring the kernel's bf16-weight / f32-accumulate precision."""
    bf, f32 = jnp.bfloat16, jnp.float32
    h = x @ p["fc_w"] + p["fc_b"] + p["wpe0"]
    vec = p["layer_vecs"]
    L = p["w_v"].shape[0]
    for l in range(L):
        a = _layernorm(h, vec[l, 0:1], vec[l, 1:2])
        v = jnp.dot(a.astype(bf), p["w_v"][l].astype(bf), preferred_element_type=f32) + vec[l, 2:3]
        h = h + jnp.dot(v.astype(bf), p["w_o"][l].astype(bf), preferred_element_type=f32) + vec[l, 3:4]
        m = _layernorm(h, vec[l, 4:5], vec[l, 5:6]).astype(bf)
        f = _gelu_new(jnp.dot(m, p["w_fc"][l].astype(bf), preferred_element_type=f32) + p["b_fc"][l])
        h = h + jnp.dot(f.astype(bf), p["w_proj"][l].astype(bf), preferred_element_type=f32) + vec[l, 6:7]
    return _layernorm(h, p["lnf"][0:1], p["lnf"][1:2])


if __name__ == "__main__":
    key = jax.random.PRNGKey(0)
    k1, k2, k3, k4 = jax.random.split(key, 4)

    # ---- CLIP.forward: two siamese MLP branches + f1 @ f2.T ----
    B, IN_F, HID, OUT = 16, 1024, 256, 768   # small, lane-aligned stand-ins for 1000/256/768
    feature = jax.random.normal(k1, (B, IN_F), jnp.float32)
    head_params = init_clip_head_params(k2, IN_F, HID, OUT)
    sim = jax.block_until_ready(clip_head(feature, head_params))
    sim_ref = clip_head_ref(feature, head_params)
    assert sim.shape == (B, B)
    err_head = float(jnp.max(jnp.abs(sim - sim_ref)))
    assert err_head < 5e-2, f"CLIP head mismatch vs reference: {err_head}"

    # ---- VectorDecoder (textencoder submodule; unused in CLIP.forward) ----
    DEC_IN, D_MODEL, N_LAYERS = 128, 128, 2   # lane-dense toy GPT-2 config (H = 512)
    x = jax.random.normal(k3, (B, DEC_IN), jnp.float32)
    dec_params = init_decoder_params(k4, DEC_IN, D_MODEL, N_LAYERS)

    out = jax.block_until_ready(vector_decoder(x, dec_params))               # auto chunking
    out_split = jax.block_until_ready(vector_decoder(x, dec_params, h_chunks=2))  # exercise H-split
    ref = vector_decoder_ref(x, dec_params)
    assert out.shape == (B, D_MODEL)
    err = float(jnp.max(jnp.abs(out - ref)))
    err_split = float(jnp.max(jnp.abs(out_split - ref)))
    assert err < 1e-2, f"decoder mismatch vs reference: {err}"
    assert err_split < 1e-2, f"decoder (H-split) mismatch vs reference: {err_split}"

    print("KERNEL_OK")
</pallas_src>

<mosaic_0001>
module attributes {stable_mosaic.version = 11 : i64} {
  func.func @clip_head_kernel(%arg0: i32, %arg1: memref<16x1024xf32, #tpu.memory_space<vmem>>, %arg2: memref<1024x256xf32, #tpu.memory_space<vmem>>, %arg3: memref<1x256xf32, #tpu.memory_space<vmem>>, %arg4: memref<256x768xf32, #tpu.memory_space<vmem>>, %arg5: memref<1x768xf32, #tpu.memory_space<vmem>>, %arg6: memref<1024x256xf32, #tpu.memory_space<vmem>>, %arg7: memref<1x256xf32, #tpu.memory_space<vmem>>, %arg8: memref<256x768xf32, #tpu.memory_space<vmem>>, %arg9: memref<1x768xf32, #tpu.memory_space<vmem>>, %arg10: memref<16x16xf32, #tpu.memory_space<vmem>>) attributes {dimension_semantics = [#tpu.dimension_semantics<arbitrary>], iteration_bounds = array<i64: 1>, scalar_prefetch = 0 : i64, scratch_operands = 0 : i64, tpu.core_type = #tpu.core_type<tc>, window_params = [{pipeline_mode = #tpu.pipeline_mode<synchronous>, transform_indices = @transform_0, window_bounds = array<i64: 16, 1024>}, {pipeline_mode = #tpu.pipeline_mode<synchronous>, transform_indices = @transform_1, window_bounds = array<i64: 1024, 256>}, {pipeline_mode = #tpu.pipeline_mode<synchronous>, transform_indices = @transform_2, window_bounds = array<i64: 1, 256>}, {pipeline_mode = #tpu.pipeline_mode<synchronous>, transform_indices = @transform_3, window_bounds = array<i64: 256, 768>}, {pipeline_mode = #tpu.pipeline_mode<synchronous>, transform_indices = @transform_4, window_bounds = array<i64: 1, 768>}, {pipeline_mode = #tpu.pipeline_mode<synchronous>, transform_indices = @transform_5, window_bounds = array<i64: 1024, 256>}, {pipeline_mode = #tpu.pipeline_mode<synchronous>, transform_indices = @transform_6, window_bounds = array<i64: 1, 256>}, {pipeline_mode = #tpu.pipeline_mode<synchronous>, transform_indices = @transform_7, window_bounds = array<i64: 256, 768>}, {pipeline_mode = #tpu.pipeline_mode<synchronous>, transform_indices = @transform_8, window_bounds = array<i64: 1, 768>}, {pipeline_mode = #tpu.pipeline_mode<synchronous>, transform_indices = @transform_9, window_bounds = array<i64: 16, 16>}]} {
    %c0 = arith.constant 0 : index
    %c0_0 = arith.constant 0 : index
    %0 = vector.load %arg1[%c0, %c0_0] : memref<16x1024xf32, #tpu.memory_space<vmem>>, vector<16x1024xf32>
    %c0_1 = arith.constant 0 : index
    %c0_2 = arith.constant 0 : index
    %1 = vector.load %arg2[%c0_1, %c0_2] : memref<1024x256xf32, #tpu.memory_space<vmem>>, vector<1024x256xf32>
    %cst = arith.constant dense<0.000000e+00> : vector<16x256xf32>
    %2 = tpu.matmul %0, %1, %cst {dimension_numbers = #tpu.dot_dimension_numbers<[1], [0], [0], [1], [0, 0, 1, 1], [], []>} : vector<16x1024xf32>, vector<1024x256xf32>, vector<16x256xf32> -> vector<16x256xf32>
    %c0_3 = arith.constant 0 : index
    %c0_4 = arith.constant 0 : index
    %3 = vector.load %arg3[%c0_3, %c0_4] : memref<1x256xf32, #tpu.memory_space<vmem>>, vector<1x256xf32>
    %4 = vector.broadcast %3 : vector<1x256xf32> to vector<16x256xf32>
    %5 = arith.addf %2, %4 : vector<16x256xf32>
    %cst_5 = arith.constant 0.000000e+00 : f32
    %6 = vector.broadcast %cst_5 : f32 to vector<16x256xf32>
    %7 = arith.maximumf %5, %6 : vector<16x256xf32>
    %c0_6 = arith.constant 0 : index
    %c0_7 = arith.constant 0 : index
    %8 = vector.load %arg4[%c0_6, %c0_7] : memref<256x768xf32, #tpu.memory_space<vmem>>, vector<256x768xf32>
    %cst_8 = arith.constant dense<0.000000e+00> : vector<16x768xf32>
    %9 = tpu.matmul %7, %8, %cst_8 {dimension_numbers = #tpu.dot_dimension_numbers<[1], [0], [0], [1], [0, 0, 1, 1], [], []>} : vector<16x256xf32>, vector<256x768xf32>, vector<16x768xf32> -> vector<16x768xf32>
    %c0_9 = arith.constant 0 : index
    %c0_10 = arith.constant 0 : index
    %10 = vector.load %arg5[%c0_9, %c0_10] : memref<1x768xf32, #tpu.memory_space<vmem>>, vector<1x768xf32>
    %11 = vector.broadcast %10 : vector<1x768xf32> to vector<16x768xf32>
    %12 = arith.addf %9, %11 : vector<16x768xf32>
    %c0_11 = arith.constant 0 : index
    %c0_12 = arith.constant 0 : index
    %13 = vector.load %arg6[%c0_11, %c0_12] : memref<1024x256xf32, #tpu.memory_space<vmem>>, vector<1024x256xf32>
    %cst_13 = arith.constant dense<0.000000e+00> : vector<16x256xf32>
    %14 = tpu.matmul %0, %13, %cst_13 {dimension_numbers = #tpu.dot_dimension_numbers<[1], [0], [0], [1], [0, 0, 1, 1], [], []>} : vector<16x1024xf32>, vector<1024x256xf32>, vector<16x256xf32> -> vector<16x256xf32>
    %c0_14 = arith.constant 0 : index
    %c0_15 = arith.constant 0 : index
    %15 = vector.load %arg7[%c0_14, %c0_15] : memref<1x256xf32, #tpu.memory_space<vmem>>, vector<1x256xf32>
    %16 = vector.broadcast %15 : vector<1x256xf32> to vector<16x256xf32>
    %17 = arith.addf %14, %16 : vector<16x256xf32>
    %cst_16 = arith.constant 0.000000e+00 : f32
    %18 = vector.broadcast %cst_16 : f32 to vector<16x256xf32>
    %19 = arith.maximumf %17, %18 : vector<16x256xf32>
    %c0_17 = arith.constant 0 : index
    %c0_18 = arith.constant 0 : index
    %20 = vector.load %arg8[%c0_17, %c0_18] : memref<256x768xf32, #tpu.memory_space<vmem>>, vector<256x768xf32>
    %cst_19 = arith.constant dense<0.000000e+00> : vector<16x768xf32>
    %21 = tpu.matmul %19, %20, %cst_19 {dimension_numbers = #tpu.dot_dimension_numbers<[1], [0], [0], [1], [0, 0, 1, 1], [], []>} : vector<16x256xf32>, vector<256x768xf32>, vector<16x768xf32> -> vector<16x768xf32>
    %c0_20 = arith.constant 0 : index
    %c0_21 = arith.constant 0 : index
    %22 = vector.load %arg9[%c0_20, %c0_21] : memref<1x768xf32, #tpu.memory_space<vmem>>, vector<1x768xf32>
    %23 = vector.broadcast %22 : vector<1x768xf32> to vector<16x768xf32>
    %24 = arith.addf %21, %23 : vector<16x768xf32>
    %cst_22 = arith.constant dense<0.000000e+00> : vector<16x16xf32>
    %25 = tpu.matmul %12, %24, %cst_22 {dimension_numbers = #tpu.dot_dimension_numbers<[1], [1], [0], [0], [0, 0, 1, 0], [], []>} : vector<16x768xf32>, vector<16x768xf32>, vector<16x16xf32> -> vector<16x16xf32>
    %c0_23 = arith.constant 0 : index
    %c0_24 = arith.constant 0 : index
    %26 = vector.load %arg10[%c0_23, %c0_24] : memref<16x16xf32, #tpu.memory_space<vmem>>, vector<16x16xf32>
    tpu.vector_store %arg10[%c0_23, %c0_24], %25 {strides = array<i32>} : memref<16x16xf32, #tpu.memory_space<vmem>>, vector<16x16xf32>,
    return
  }
  func.func @transform_0(%arg0: i32) -> (i32, i32) {
    %c0_i32 = arith.constant 0 : i32
    %c0_i32_0 = arith.constant 0 : i32
    %c0_i32_1 = arith.constant 0 : i32
    return %c0_i32, %c0_i32_0 : i32, i32
  }
  func.func @transform_1(%arg0: i32) -> (i32, i32) {
    %c0_i32 = arith.constant 0 : i32
    %c0_i32_0 = arith.constant 0 : i32
    %c0_i32_1 = arith.constant 0 : i32
    return %c0_i32, %c0_i32_0 : i32, i32
  }
  func.func @transform_2(%arg0: i32) -> (i32, i32) {
    %c0_i32 = arith.constant 0 : i32
    %c0_i32_0 = arith.constant 0 : i32
    %c0_i32_1 = arith.constant 0 : i32
    return %c0_i32, %c0_i32_0 : i32, i32
  }
  func.func @transform_3(%arg0: i32) -> (i32, i32) {
    %c0_i32 = arith.constant 0 : i32
    %c0_i32_0 = arith.constant 0 : i32
    %c0_i32_1 = arith.constant 0 : i32
    return %c0_i32, %c0_i32_0 : i32, i32
  }
  func.func @transform_4(%arg0: i32) -> (i32, i32) {
    %c0_i32 = arith.constant 0 : i32
    %c0_i32_0 = arith.constant 0 : i32
    %c0_i32_1 = arith.constant 0 : i32
    return %c0_i32, %c0_i32_0 : i32, i32
  }
  func.func @transform_5(%arg0: i32) -> (i32, i32) {
    %c0_i32 = arith.constant 0 : i32
    %c0_i32_0 = arith.constant 0 : i32
    %c0_i32_1 = arith.constant 0 : i32
    return %c0_i32, %c0_i32_0 : i32, i32
  }
  func.func @transform_6(%arg0: i32) -> (i32, i32) {
    %c0_i32 = arith.constant 0 : i32
    %c0_i32_0 = arith.constant 0 : i32
    %c0_i32_1 = arith.constant 0 : i32
    return %c0_i32, %c0_i32_0 : i32, i32
  }
  func.func @transform_7(%arg0: i32) -> (i32, i32) {
    %c0_i32 = arith.constant 0 : i32
    %c0_i32_0 = arith.constant 0 : i32
    %c0_i32_1 = arith.constant 0 : i32
    return %c0_i32, %c0_i32_0 : i32, i32
  }
  func.func @transform_8(%arg0: i32) -> (i32, i32) {
    %c0_i32 = arith.constant 0 : i32
    %c0_i32_0 = arith.constant 0 : i32
    %c0_i32_1 = arith.constant 0 : i32
    return %c0_i32, %c0_i32_0 : i32, i32
  }
  func.func @transform_9(%arg0: i32) -> (i32, i32) {
    %c0_i32 = arith.constant 0 : i32
    %c0_i32_0 = arith.constant 0 : i32
    %c0_i32_1 = arith.constant 0 : i32
    return %c0_i32, %c0_i32_0 : i32, i32
  }
}

</mosaic_0001>

<llo_original>
// kernel: tpu_custom_call.1
$region0: #{tpu_custom_call.1}
  #allocation0 [shape = 'u32[]', space=smem, size = 0x4, offset = 0x4, fixed_abs, tag = 'smem constant byte address 0x4 - core index']
  #allocation1 [shape = 'u32[144,128]{1,0:T(1,128)}', space=vmem, size = 0x12000, scoped, tag = 'internal scratch']
  %s0 = inlined_call_operand.hbm [shape: f32[16,1024], index: 0, kind: input, shape index: {}]
  %s1 = inlined_call_operand.hbm [shape: f32[1024,256], index: 1, kind: input, shape index: {}]
  %s2 = inlined_call_operand.hbm [shape: f32[1,256], index: 2, kind: input, shape index: {}]
  %s3 = inlined_call_operand.hbm [shape: f32[256,768], index: 3, kind: input, shape index: {}]
  %s4 = inlined_call_operand.vmem [shape: f32[1,768], index: 4, kind: input, shape index: {}]
  %s5 = inlined_call_operand.hbm [shape: f32[1024,256], index: 5, kind: input, shape index: {}]
  %s6 = inlined_call_operand.hbm [shape: f32[1,256], index: 6, kind: input, shape index: {}]
  %s7 = inlined_call_operand.hbm [shape: f32[256,768], index: 7, kind: input, shape index: {}]
  %s8 = inlined_call_operand.vmem [shape: f32[1,768], index: 8, kind: input, shape index: {}]
  %s9 = inlined_call_operand.hbm [shape: f32[16,16], index: 9, kind: output, shape index: {}]
  %s10 = sld [smem:[#allocation0]]
  $region74: #{tpu_custom_call.1} parent=0
    _
  %s12 = ssub.s32 1, %s10
  %s13 = scalar_select 0, %s12, %s10
  $region1: #{tpu_custom_call.1} parent=0
    #allocation2 [shape = 'u8[65536]{0}', space=vmem, size = 0x10000, scoped, tag = 'input window, operand 0, single buffered']
    #allocation3 [shape = 's32[1]{0}', space=sflag, size = 0x4, scoped, tag = 'scoped memory for tpu_custom_call.1']
    #allocation4 [shape = 's32[1]{0}', space=sflag, size = 0x4, scoped, tag = 'scoped memory for tpu_custom_call.1']
    #allocation5 [shape = 'u8[1048576]{0}', space=vmem, size = 0x100000, scoped, tag = 'input window, operand 1, single buffered']
    #allocation6 [shape = 's32[1]{0}', space=sflag, size = 0x4, scoped, tag = 'scoped memory for tpu_custom_call.1']
    #allocation7 [shape = 'u8[1024]{0}', space=vmem, size = 0x400, scoped, tag = 'input window, operand 2, single buffered']
    #allocation8 [shape = 'u8[786432]{0}', space=vmem, size = 0xc0000, scoped, tag = 'input window, operand 3, single buffered']
    #allocation9 [shape = 's32[1]{0}', space=sflag, size = 0x4, scoped, tag = 'scoped memory for tpu_custom_call.1']
    #allocation10 [shape = 'u8[1048576]{0}', space=vmem, size = 0x100000, scoped, tag = 'input window, operand 5, single buffered']
    #allocation11 [shape = 'u8[1024]{0}', space=vmem, size = 0x400, scoped, tag = 'input window, operand 6, single buffered']
    #allocation12 [shape = 's32[1]{0}', space=sflag, size = 0x4, scoped, tag = 'scoped memory for tpu_custom_call.1']
    #allocation13 [shape = 'u8[786432]{0}', space=vmem, size = 0xc0000, scoped, tag = 'input window, operand 7, single buffered']
    #allocation14 [shape = 'u8[8192]{0}', space=vmem, size = 0x2000, scoped, tag = 'output window, operand 0, single buffered']
    %14 = vsyncpa [#allocation3], 0
    %15 = vsyncpa [#allocation6], 0
    %16 = vsyncpa [#allocation9], 0
    %17 = vsyncpa [#allocation12], 0
    %18 = vsyncpa [#allocation4], 0
    // Predicated region
    $region2: #{tpu_custom_call.1} parent=1 // pred_check
      _
    $region3: #{tpu_custom_call.1} parent=1 // pred_check_branch
      %20 = sbr.rel (0) target = $region5
    $region4: #{tpu_custom_call.1} parent=1 // pred_region
      %s22 = ssub.s32 2048, 2048
      %23 = vsyncadd [#allocation3], %s22
      %s24 = sshll.u32 [#allocation2], 4
      %s25 = int_to_ptr.vmem [resolvable:$true] %s24
      %30 = dma.hbm_to_vmem [thread:$0]  %s0, 2048, %s25, [#allocation3], 1024, 1024, 64
    $region5: #{tpu_custom_call.1} parent=1 // pred_fallthru
      _
    // Predicated region
    $region6: #{tpu_custom_call.1} parent=1 // pred_check
      _
    $region7: #{tpu_custom_call.1} parent=1 // pred_check_branch
      %32 = sbr.rel (0) target = $region9
    $region8: #{tpu_custom_call.1} parent=1 // pred_region
      %s34 = ssub.s32 32768, 32768
      %35 = vsyncadd [#allocation6], %s34
      %s36 = sshll.u32 [#allocation5], 4
      %s37 = int_to_ptr.vmem [resolvable:$true] %s36
      %42 = dma.hbm_to_vmem [thread:$0]  %s1, 32768, %s37, [#allocation6], 256, 256, 16
    $region9: #{tpu_custom_call.1} parent=1 // pred_fallthru
      _
    // Predicated region
    $region10: #{tpu_custom_call.1} parent=1 // pred_check
      _
    $region11: #{tpu_custom_call.1} parent=1 // pred_check_branch
      %44 = sbr.rel (0) target = $region13
    $region12: #{tpu_custom_call.1} parent=1 // pred_region
      %s46 = ssub.s32 32, 32
      %47 = vsyncadd [#allocation6], %s46
      %s49 = sshll.u32 [#allocation7], 4
      %s50 = int_to_ptr.vmem [resolvable:$true] %s49
      %52 = dma.hbm_to_vmem [thread:$0]  %s2, 32, %s50, [#allocation6]
    $region13: #{tpu_custom_call.1} parent=1 // pred_fallthru
      _
    // Predicated region
    $region14: #{tpu_custom_call.1} parent=1 // pred_check
      _
    $region15: #{tpu_custom_call.1} parent=1 // pred_check_branch
      %54 = sbr.rel (0) target = $region17
    $region16: #{tpu_custom_call.1} parent=1 // pred_region
      %s56 = ssub.s32 24576, 24576
      %57 = vsyncadd [#allocation9], %s56
      %s58 = sshll.u32 [#allocation8], 4
      %s59 = int_to_ptr.vmem [resolvable:$true] %s58
      %64 = dma.hbm_to_vmem [thread:$0]  %s3, 24576, %s59, [#allocation9], 768, 768, 48
    $region17: #{tpu_custom_call.1} parent=1 // pred_fallthru
      _
    // Predicated region
    $region18: #{tpu_custom_call.1} parent=1 // pred_check
      _
    $region19: #{tpu_custom_call.1} parent=1 // pred_check_branch
      %66 = sbr.rel (0) target = $region21
    $region20: #{tpu_custom_call.1} parent=1 // pred_region
      _
    $region21: #{tpu_custom_call.1} parent=1 // pred_fallthru
      _
    // Predicated region
    $region22: #{tpu_custom_call.1} parent=1 // pred_check
      _
    $region23: #{tpu_custom_call.1} parent=1 // pred_check_branch
      %68 = sbr.rel (0) target = $region25
    $region24: #{tpu_custom_call.1} parent=1 // pred_region
      %s70 = ssub.s32 32768, 32768
      %71 = vsyncadd [#allocation9], %s70
      %s72 = sshll.u32 [#allocation10], 4
      %s73 = int_to_ptr.vmem [resolvable:$true] %s72
      %78 = dma.hbm_to_vmem [thread:$0]  %s5, 32768, %s73, [#allocation9], 256, 256, 16
    $region25: #{tpu_custom_call.1} parent=1 // pred_fallthru
      _
    // Predicated region
    $region26: #{tpu_custom_call.1} parent=1 // pred_check
      _
    $region27: #{tpu_custom_call.1} parent=1 // pred_check_branch
      %80 = sbr.rel (0) target = $region29
    $region28: #{tpu_custom_call.1} parent=1 // pred_region
      %s82 = ssub.s32 32, 32
      %83 = vsyncadd [#allocation12], %s82
      %s85 = sshll.u32 [#allocation11], 4
      %s86 = int_to_ptr.vmem [resolvable:$true] %s85
      %88 = dma.hbm_to_vmem [thread:$0]  %s6, 32, %s86, [#allocation12]
    $region29: #{tpu_custom_call.1} parent=1 // pred_fallthru
      _
    // Predicated region
    $region30: #{tpu_custom_call.1} parent=1 // pred_check
      _
    $region31: #{tpu_custom_call.1} parent=1 // pred_check_branch
      %90 = sbr.rel (0) target = $region33
    $region32: #{tpu_custom_call.1} parent=1 // pred_region
      %s92 = ssub.s32 24576, 24576
      %93 = vsyncadd [#allocation12], %s92
      %s94 = sshll.u32 [#allocation13], 4
      %s95 = int_to_ptr.vmem [resolvable:$true] %s94
      %100 = dma.hbm_to_vmem [thread:$0]  %s7, 24576, %s95, [#allocation12], 768, 768, 48
    $region33: #{tpu_custom_call.1} parent=1 // pred_fallthru
      _
    // Predicated region
    $region34: #{tpu_custom_call.1} parent=1 // pred_check
      _
    $region35: #{tpu_custom_call.1} parent=1 // pred_check_branch
      %102 = sbr.rel (0) target = $region37
    $region36: #{tpu_custom_call.1} parent=1 // pred_region
      _
    $region37: #{tpu_custom_call.1} parent=1 // pred_fallthru
      _
    // Predicated region
    $region38: #{tpu_custom_call.1} parent=1 // pred_check
      _
    $region39: #{tpu_custom_call.1} parent=1 // pred_check_branch
      %104 = sbr.rel (0) target = $region41
    $region40: #{tpu_custom_call.1} parent=1 // pred_region
      %105 = dma.done [#allocation3], 2048
    $region41: #{tpu_custom_call.1} parent=1 // pred_fallthru
      _
    // Predicated region
    $region42: #{tpu_custom_call.1} parent=1 // pred_check
      _
    $region43: #{tpu_custom_call.1} parent=1 // pred_check_branch
      %107 = sbr.rel (0) target = $region45
    $region44: #{tpu_custom_call.1} parent=1 // pred_region
      %108 = dma.done [#allocation6], 32768
    $region45: #{tpu_custom_call.1} parent=1 // pred_fallthru
      _
    // Predicated region
    $region46: #{tpu_custom_call.1} parent=1 // pred_check
      _
    $region47: #{tpu_custom_call.1} parent=1 // pred_check_branch
      %110 = sbr.rel (0) target = $region49
    $region48: #{tpu_custom_call.1} parent=1 // pred_region
      %111 = dma.done [#allocation6], 32
    $region49: #{tpu_custom_call.1} parent=1 // pred_fallthru
      _
    // Predicated region
    $region50: #{tpu_custom_call.1} parent=1 // pred_check
      _
    $region51: #{tpu_custom_call.1} parent=1 // pred_check_branch
      %113 = sbr.rel (0) target = $region53
    $region52: #{tpu_custom_call.1} parent=1 // pred_region
      %114 = dma.done [#allocation9], 24576
    $region53: #{tpu_custom_call.1} parent=1 // pred_fallthru
      _
    // Predicated region
    $region54: #{tpu_custom_call.1} parent=1 // pred_check
      _
    $region55: #{tpu_custom_call.1} parent=1 // pred_check_branch
      %116 = sbr.rel (0) target = $region57
    $region56: #{tpu_custom_call.1} parent=1 // pred_region
      %117 = dma.done [#allocation9], 32768
    $region57: #{tpu_custom_call.1} parent=1 // pred_fallthru
      _
    // Predicated region
    $region58: #{tpu_custom_call.1} parent=1 // pred_check
      _
    $region59: #{tpu_custom_call.1} parent=1 // pred_check_branch
      %119 = sbr.rel (0) target = $region61
    $region60: #{tpu_custom_call.1} parent=1 // pred_region
      %120 = dma.done [#allocation12], 32
    $region61: #{tpu_custom_call.1} parent=1 // pred_fallthru
      _
    // Predicated region
    $region62: #{tpu_custom_call.1} parent=1 // pred_check
      _
    $region63: #{tpu_custom_call.1} parent=1 // pred_check_branch
      %122 = sbr.rel (0) target = $region65
    $region64: #{tpu_custom_call.1} parent=1 // pred_region
      %123 = dma.done [#allocation12], 24576
    $region65: #{tpu_custom_call.1} parent=1 // pred_fallthru
      _
    %v124 = vld [vmem:[#allocation2] sm:$0xff]
    %v125 = vld [vmem:[#allocation2 + $0x8] sm:$0xff]
    %v126 = vld [vmem:[#allocation2 + $0x10] sm:$0xff]
    %v127 = vld [vmem:[#allocation2 + $0x18] sm:$0xff]
    %v128 = vld [vmem:[#allocation2 + $0x20] sm:$0xff]
    %v129 = vld [vmem:[#allocation2 + $0x28] sm:$0xff]
    %v130 = vld [vmem:[#allocation2 + $0x30] sm:$0xff]
    %v131 = vld [vmem:[#allocation2 + $0x38] sm:$0xff]
    %v132 = vld [vmem:[#allocation2 + $0x40] sm:$0xff]
    %v133 = vld [vmem:[#allocation2 + $0x48] sm:$0xff]
    %v134 = vld [vmem:[#allocation2 + $0x50] sm:$0xff]
    %v135 = vld [vmem:[#allocation2 + $0x58] sm:$0xff]
    %v136 = vld [vmem:[#allocation2 + $0x60] sm:$0xff]
    %v137 = vld [vmem:[#allocation2 + $0x68] sm:$0xff]
    %v138 = vld [vmem:[#allocation2 + $0x70] sm:$0xff]
    %v139 = vld [vmem:[#allocation2 + $0x78] sm:$0xff]
    %v140 = vld [vmem:[#allocation5] sm:$0xff]
    %v141 = vld [vmem:[#allocation5 + $0x8] sm:$0xff]
    %v142 = vld [vmem:[#allocation5 + $0x10] sm:$0xff]
    %v143 = vld [vmem:[#allocation5 + $0x18] sm:$0xff]
    %v144 = vld [vmem:[#allocation5 + $0x20] sm:$0xff]
    %v145 = vld [vmem:[#allocation5 + $0x28] sm:$0xff]
    %v146 = vld [vmem:[#allocation5 + $0x30] sm:$0xff]
    %v147 = vld [vmem:[#allocation5 + $0x38] sm:$0xff]
    %v148 = vld [vmem:[#allocation5 + $0x40] sm:$0xff]
    %v149 = vld [vmem:[#allocation5 + $0x48] sm:$0xff]
    %v150 = vld [vmem:[#allocation5 + $0x50] sm:$0xff]
    %v151 = vld [vmem:[#allocation5 + $0x58] sm:$0xff]
    %v152 = vld [vmem:[#allocation5 + $0x60] sm:$0xff]
    %v153 = vld [vmem:[#allocation5 + $0x68] sm:$0xff]
    %v154 = vld [vmem:[#allocation5 + $0x70] sm:$0xff]
    %v155 = vld [vmem:[#allocation5 + $0x78] sm:$0xff]
    %v156 = vld [vmem:[#allocation5 + $0x80] sm:$0xff]
    %v157 = vld [vmem:[#allocation5 + $0x88] sm:$0xff]
    %v158 = vld [vmem:[#allocation5 + $0x90] sm:$0xff]
    %v159 = vld [vmem:[#allocation5 + $0x98] sm:$0xff]
    %v160 = vld [vmem:[#allocation5 + $0xa0] sm:$0xff]
    %v161 = vld [vmem:[#allocation5 + $0xa8] sm:$0xff]
    %v162 = vld [vmem:[#allocation5 + $0xb0] sm:$0xff]
    %v163 = vld [vmem:[#allocation5 + $0xb8] sm:$0xff]
    %v164 = vld [vmem:[#allocation5 + $0xc0] sm:$0xff]
    %v165 = vld [vmem:[#allocation5 + $0xc8] sm:$0xff]
    %v166 = vld [vmem:[#allocation5 + $0xd0] sm:$0xff]
    %v167 = vld [vmem:[#allocation5 + $0xd8] sm:$0xff]
    %v168 = vld [vmem:[#allocation5 + $0xe0] sm:$0xff]
    %v169 = vld [vmem:[#allocation5 + $0xe8] sm:$0xff]
    %v170 = vld [vmem:[#allocation5 + $0xf0] sm:$0xff]
    %v171 = vld [vmem:[#allocation5 + $0xf8] sm:$0xff]
    %v172 = vld [vmem:[#allocation5 + $0x100] sm:$0xff]
    %v173 = vld [vmem:[#allocation5 + $0x108] sm:$0xff]
    %v174 = vld [vmem:[#allocation5 + $0x110] sm:$0xff]
    %v175 = vld [vmem:[#allocation5 + $0x118] sm:$0xff]
    %v176 = vld [vmem:[#allocation5 + $0x120] sm:$0xff]
    %v177 = vld [vmem:[#allocation5 + $0x128] sm:$0xff]
    %v178 = vld [vmem:[#allocation5 + $0x130] sm:$0xff]
    %v179 = vld [vmem:[#allocation5 + $0x138] sm:$0xff]
    %v180 = vld [vmem:[#allocation5 + $0x140] sm:$0xff]
    %v181 = vld [vmem:[#allocation5 + $0x148] sm:$0xff]
    %v182 = vld [vmem:[#allocation5 + $0x150] sm:$0xff]
    %v183 = vld [vmem:[#allocation5 + $0x158] sm:$0xff]
    %v184 = vld [vmem:[#allocation5 + $0x160] sm:$0xff]
    %v185 = vld [vmem:[#allocation5 + $0x168] sm:$0xff]
    %v186 = vld [vmem:[#allocation5 + $0x170] sm:$0xff]
    %v187 = vld [vmem:[#allocation5 + $0x178] sm:$0xff]
    %v188 = vld [vmem:[#allocation5 + $0x180] sm:$0xff]
    %v189 = vld [vmem:[#allocation5 + $0x188] sm:$0xff]
    %v190 = vld [vmem:[#allocation5 + $0x190] sm:$0xff]
    %v191 = vld [vmem:[#allocation5 + $0x198] sm:$0xff]
    %v192 = vld [vmem:[#allocation5 + $0x1a0] sm:$0xff]
    %v193 = vld [vmem:[#allocation5 + $0x1a8] sm:$0xff]
    %v194 = vld [vmem:[#allocation5 + $0x1b0] sm:$0xff]
    %v195 = vld [vmem:[#allocation5 + $0x1b8] sm:$0xff]
    %v196 = vld [vmem:[#allocation5 + $0x1c0] sm:$0xff]
    %v197 = vld [vmem:[#allocation5 + $0x1c8] sm:$0xff]
    %v198 = vld [vmem:[#allocation5 + $0x1d0] sm:$0xff]
    %v199 = vld [vmem:[#allocation5 + $0x1d8] sm:$0xff]
    %v200 = vld [vmem:[#allocation5 + $0x1e0] sm:$0xff]
    %v201 = vld [vmem:[#allocation5 + $0x1e8] sm:$0xff]
    %v202 = vld [vmem:[#allocation5 + $0x1f0] sm:$0xff]
    %v203 = vld [vmem:[#allocation5 + $0x1f8] sm:$0xff]
    %v204 = vld [vmem:[#allocation5 + $0x200] sm:$0xff]
    %v205 = vld [vmem:[#allocation5 + $0x208] sm:$0xff]
    %v206 = vld [vmem:[#allocation5 + $0x210] sm:$0xff]
    %v207 = vld [vmem:[#allocation5 + $0x218] sm:$0xff]
    %v208 = vld [vmem:[#allocation5 + $0x220] sm:$0xff]
    %v209 = vld [vmem:[#allocation5 + $0x228] sm:$0xff]
    %v210 = vld [vmem:[#allocation5 + $0x230] sm:$0xff]
    %v211 = vld [vmem:[#allocation5 + $0x238] sm:$0xff]
    %v212 = vld [vmem:[#allocation5 + $0x240] sm:$0xff]
    %v213 = vld [vmem:[#allocation5 + $0x248] sm:$0xff]
    %v214 = vld [vmem:[#allocation5 + $0x250] sm:$0xff]
    %v215 = vld [vmem:[#allocation5 + $0x258] sm:$0xff]
    %v216 = vld [vmem:[#allocation5 + $0x260] sm:$0xff]
    %v217 = vld [vmem:[#allocation5 + $0x268] sm:$0xff]
    %v218 = vld [vmem:[#allocation5 + $0x270] sm:$0xff]
    %v219 = vld [vmem:[#allocation5 + $0x278] sm:$0xff]
    %v220 = vld [vmem:[#allocation5 + $0x280] sm:$0xff]
    %v221 = vld [vmem:[#allocation5 + $0x288] sm:$0xff]
    %v222 = vld [vmem:[#allocation5 + $0x290] sm:$0xff]
    %v223 = vld [vmem:[#allocation5 + $0x298] sm:$0xff]
    %v224 = vld [vmem:[#allocation5 + $0x2a0] sm:$0xff]
    %v225 = vld [vmem:[#allocation5 + $0x2a8] sm:$0xff]
    %v226 = vld [vmem:[#allocation5 + $0x2b0] sm:$0xff]
    %v227 = vld [vmem:[#allocation5 + $0x2b8] sm:$0xff]
    %v228 = vld [vmem:[#allocation5 + $0x2c0] sm:$0xff]
    %v229 = vld [vmem:[#allocation5 + $0x2c8] sm:$0xff]
    %v230 = vld [vmem:[#allocation5 + $0x2d0] sm:$0xff]
    %v231 = vld [vmem:[#allocation5 + $0x2d8] sm:$0xff]
    %v232 = vld [vmem:[#allocation5 + $0x2e0] sm:$0xff]
    %v233 = vld [vmem:[#allocation5 + $0x2e8] sm:$0xff]
    %v234 = vld [vmem:[#allocation5 + $0x2f0] sm:$0xff]
    %v235 = vld [vmem:[#allocation5 + $0x2f8] sm:$0xff]
    %v236 = vld [vmem:[#allocation5 + $0x300] sm:$0xff]
    %v237 = vld [vmem:[#allocation5 + $0x308] sm:$0xff]
    %v238 = vld [vmem:[#allocation5 + $0x310] sm:$0xff]
    %v239 = vld [vmem:[#allocation5 + $0x318] sm:$0xff]
    %v240 = vld [vmem:[#allocation5 + $0x320] sm:$0xff]
    %v241 = vld [vmem:[#allocation5 + $0x328] sm:$0xff]
    %v242 = vld [vmem:[#allocation5 + $0x330] sm:$0xff]
    %v243 = vld [vmem:[#allocation5 + $0x338] sm:$0xff]
    %v244 = vld [vmem:[#allocation5 + $0x340] sm:$0xff]
    %v245 = vld [vmem:[#allocation5 + $0x348] sm:$0xff]
    %v246 = vld [vmem:[#allocation5 + $0x350] sm:$0xff]
    %v247 = vld [vmem:[#allocation5 + $0x358] sm:$0xff]
    %v248 = vld [vmem:[#allocation5 + $0x360] sm:$0xff]
    %v249 = vld [vmem:[#allocation5 + $0x368] sm:$0xff]
    %v250 = vld [vmem:[#allocation5 + $0x370] sm:$0xff]
    %v251 = vld [vmem:[#allocation5 + $0x378] sm:$0xff]
    %v252 = vld [vmem:[#allocation5 + $0x380] sm:$0xff]
    %v253 = vld [vmem:[#allocation5 + $0x388] sm:$0xff]
    %v254 = vld [vmem:[#allocation5 + $0x390] sm:$0xff]
    %v255 = vld [vmem:[#allocation5 + $0x398] sm:$0xff]
    %v256 = vld [vmem:[#allocation5 + $0x3a0] sm:$0xff]
    %v257 = vld [vmem:[#allocation5 + $0x3a8] sm:$0xff]
    %v258 = vld [vmem:[#allocation5 + $0x3b0] sm:$0xff]
    %v259 = vld [vmem:[#allocation5 + $0x3b8] sm:$0xff]
    %v260 = vld [vmem:[#allocation5 + $0x3c0] sm:$0xff]
    %v261 = vld [vmem:[#allocation5 + $0x3c8] sm:$0xff]
    %v262 = vld [vmem:[#allocation5 + $0x3d0] sm:$0xff]
    %v263 = vld [vmem:[#allocation5 + $0x3d8] sm:$0xff]
    %v264 = vld [vmem:[#allocation5 + $0x3e0] sm:$0xff]
    %v265 = vld [vmem:[#allocation5 + $0x3e8] sm:$0xff]
    %v266 = vld [vmem:[#allocation5 + $0x3f0] sm:$0xff]
    %v267 = vld [vmem:[#allocation5 + $0x3f8] sm:$0xff]
    %v268 = vld [vmem:[#allocation5 + $0x400] sm:$0xff]
    %v269 = vld [vmem:[#allocation5 + $0x408] sm:$0xff]
    %v270 = vld [vmem:[#allocation5 + $0x410] sm:$0xff]
    %v271 = vld [vmem:[#allocation5 + $0x418] sm:$0xff]
    %v272 = vld [vmem:[#allocation5 + $0x420] sm:$0xff]
    %v273 = vld [vmem:[#allocation5 + $0x428] sm:$0xff]
    %v274 = vld [vmem:[#allocation5 + $0x430] sm:$0xff]
    %v275 = vld [vmem:[#allocation5 + $0x438] sm:$0xff]
    %v276 = vld [vmem:[#allocation5 + $0x440] sm:$0xff]
    %v277 = vld [vmem:[#allocation5 + $0x448] sm:$0xff]
    %v278 = vld [vmem:[#allocation5 + $0x450] sm:$0xff]
    %v279 = vld [vmem:[#allocation5 + $0x458] sm:$0xff]
    %v280 = vld [vmem:[#allocation5 + $0x460] sm:$0xff]
    %v281 = vld [vmem:[#allocation5 + $0x468] sm:$0xff]
    %v282 = vld [vmem:[#allocation5 + $0x470] sm:$0xff]
    %v283 = vld [vmem:[#allocation5 + $0x478] sm:$0xff]
    %v284 = vld [vmem:[#allocation5 + $0x480] sm:$0xff]
    %v285 = vld [vmem:[#allocation5 + $0x488] sm:$0xff]
    %v286 = vld [vmem:[#allocation5 + $0x490] sm:$0xff]
    %v287 = vld [vmem:[#allocation5 + $0x498] sm:$0xff]
    %v288 = vld [vmem:[#allocation5 + $0x4a0] sm:$0xff]
    %v289 = vld [vmem:[#allocation5 + $0x4a8] sm:$0xff]
    %v290 = vld [vmem:[#allocation5 + $0x4b0] sm:$0xff]
    %v291 = vld [vmem:[#allocation5 + $0x4b8] sm:$0xff]
    %v292 = vld [vmem:[#allocation5 + $0x4c0] sm:$0xff]
    %v293 = vld [vmem:[#allocation5 + $0x4c8] sm:$0xff]
    %v294 = vld [vmem:[#allocation5 + $0x4d0] sm:$0xff]
    %v295 = vld [vmem:[#allocation5 + $0x4d8] sm:$0xff]
    %v296 = vld [vmem:[#allocation5 + $0x4e0] sm:$0xff]
    %v297 = vld [vmem:[#allocation5 + $0x4e8] sm:$0xff]
    %v298 = vld [vmem:[#allocation5 + $0x4f0] sm:$0xff]
    %v299 = vld [vmem:[#allocation5 + $0x4f8] sm:$0xff]
    %v300 = vld [vmem:[#allocation5 + $0x500] sm:$0xff]
    %v301 = vld [vmem:[#allocation5 + $0x508] sm:$0xff]
    %v302 = vld [vmem:[#allocation5 + $0x510] sm:$0xff]
    %v303 = vld [vmem:[#allocation5 + $0x518] sm:$0xff]
    %v304 = vld [vmem:[#allocation5 + $0x520] sm:$0xff]
    %v305 = vld [vmem:[#allocation5 + $0x528] sm:$0xff]
    %v306 = vld [vmem:[#allocation5 + $0x530] sm:$0xff]
    %v307 = vld [vmem:[#allocation5 + $0x538] sm:$0xff]
    %v308 = vld [vmem:[#allocation5 + $0x540] sm:$0xff]
    %v309 = vld [vmem:[#allocation5 + $0x548] sm:$0xff]
    %v310 = vld [vmem:[#allocation5 + $0x550] sm:$0xff]
    %v311 = vld [vmem:[#allocation5 + $0x558] sm:$0xff]
    %v312 = vld [vmem:[#allocation5 + $0x560] sm:$0xff]
    %v313 = vld [vmem:[#allocation5 + $0x568] sm:$0xff]
    %v314 = vld [vmem:[#allocation5 + $0x570] sm:$0xff]
    %v315 = vld [vmem:[#allocation5 + $0x578] sm:$0xff]
    %v316 = vld [vmem:[#allocation5 + $0x580] sm:$0xff]
    %v317 = vld [vmem:[#allocation5 + $0x588] sm:$0xff]
    %v318 = vld [vmem:[#allocation5 + $0x590] sm:$0xff]
    %v319 = vld [vmem:[#allocation5 + $0x598] sm:$0xff]
    %v320 = vld [vmem:[#allocation5 + $0x5a0] sm:$0xff]
    %v321 = vld [vmem:[#allocation5 + $0x5a8] sm:$0xff]
    %v322 = vld [vmem:[#allocation5 + $0x5b0] sm:$0xff]
    %v323 = vld [vmem:[#allocation5 + $0x5b8] sm:$0xff]
    %v324 = vld [vmem:[#allocation5 + $0x5c0] sm:$0xff]
    %v325 = vld [vmem:[#allocation5 + $0x5c8] sm:$0xff]
    %v326 = vld [vmem:[#allocation5 + $0x5d0] sm:$0xff]
    %v327 = vld [vmem:[#allocation5 + $0x5d8] sm:$0xff]
    %v328 = vld [vmem:[#allocation5 + $0x5e0] sm:$0xff]
    %v329 = vld [vmem:[#allocation5 + $0x5e8] sm:$0xff]
    %v330 = vld [vmem:[#allocation5 + $0x5f0] sm:$0xff]
    %v331 = vld [vmem:[#allocation5 + $0x5f8] sm:$0xff]
    %v332 = vld [vmem:[#allocation5 + $0x600] sm:$0xff]
    %v333 = vld [vmem:[#allocation5 + $0x608] sm:$0xff]
    %v334 = vld [vmem:[#allocation5 + $0x610] sm:$0xff]
    %v335 = vld [vmem:[#allocation5 + $0x618] sm:$0xff]
    %v336 = vld [vmem:[#allocation5 + $0x620] sm:$0xff]
    %v337 = vld [vmem:[#allocation5 + $0x628] sm:$0xff]
    %v338 = vld [vmem:[#allocation5 + $0x630] sm:$0xff]
    %v339 = vld [vmem:[#allocation5 + $0x638] sm:$0xff]
    %v340 = vld [vmem:[#allocation5 + $0x640] sm:$0xff]
    %v341 = vld [vmem:[#allocation5 + $0x648] sm:$0xff]
    %v342 = vld [vmem:[#allocation5 + $0x650] sm:$0xff]
    %v343 = vld [vmem:[#allocation5 + $0x658] sm:$0xff]
    %v344 = vld [vmem:[#allocation5 + $0x660] sm:$0xff]
    %v345 = vld [vmem:[#allocation5 + $0x668] sm:$0xff]
    %v346 = vld [vmem:[#allocation5 + $0x670] sm:$0xff]
    %v347 = vld [vmem:[#allocation5 + $0x678] sm:$0xff]
    %v348 = vld [vmem:[#allocation5 + $0x680] sm:$0xff]
    %v349 = vld [vmem:[#allocation5 + $0x688] sm:$0xff]
    %v350 = vld [vmem:[#allocation5 + $0x690] sm:$0xff]
    %v351 = vld [vmem:[#allocation5 + $0x698] sm:$0xff]
    %v352 = vld [vmem:[#allocation5 + $0x6a0] sm:$0xff]
    %v353 = vld [vmem:[#allocation5 + $0x6a8] sm:$0xff]
    %v354 = vld [vmem:[#allocation5 + $0x6b0] sm:$0xff]
    %v355 = vld [vmem:[#allocation5 + $0x6b8] sm:$0xff]
    %v356 = vld [vmem:[#allocation5 + $0x6c0] sm:$0xff]
    %v357 = vld [vmem:[#allocation5 + $0x6c8] sm:$0xff]
    %v358 = vld [vmem:[#allocation5 + $0x6d0] sm:$0xff]
    %v359 = vld [vmem:[#allocation5 + $0x6d8] sm:$0xff]
    %v360 = vld [vmem:[#allocation5 + $0x6e0] sm:$0xff]
    %v361 = vld [vmem:[#allocation5 + $0x6e8] sm:$0xff]
    %v362 = vld [vmem:[#allocation5 + $0x6f0] sm:$0xff]
    %v363 = vld [vmem:[#allocation5 + $0x6f8] sm:$0xff]
    %v364 = vld [vmem:[#allocation5 + $0x700] sm:$0xff]
    %v365 = vld [vmem:[#allocation5 + $0x708] sm:$0xff]
    %v366 = vld [vmem:[#allocation5 + $0x710] sm:$0xff]
    %v367 = vld [vmem:[#allocation5 + $0x718] sm:$0xff]
    %v368 = vld [vmem:[#allocation5 + $0x720] sm:$0xff]
    %v369 = vld [vmem:[#allocation5 + $0x728] sm:$0xff]
    %v370 = vld [vmem:[#allocation5 + $0x730] sm:$0xff]
    %v371 = vld [vmem:[#allocation5 + $0x738] sm:$0xff]
    %v372 = vld [vmem:[#allocation5 + $0x740] sm:$0xff]
    %v373 = vld [vmem:[#allocation5 + $0x748] sm:$0xff]
    %v374 = vld [vmem:[#allocation5 + $0x750] sm:$0xff]
    %v375 = vld [vmem:[#allocation5 + $0x758] sm:$0xff]
    %v376 = vld [vmem:[#allocation5 + $0x760] sm:$0xff]
    %v377 = vld [vmem:[#allocation5 + $0x768] sm:$0xff]
    %v378 = vld [vmem:[#allocation5 + $0x770] sm:$0xff]
    %v379 = vld [vmem:[#allocation5 + $0x778] sm:$0xff]
    %v380 = vld [vmem:[#allocation5 + $0x780] sm:$0xff]
    %v381 = vld [vmem:[#allocation5 + $0x788] sm:$0xff]
    %v382 = vld [vmem:[#allocation5 + $0x790] sm:$0xff]
    %v383 = vld [vmem:[#allocation5 + $0x798] sm:$0xff]
    %v384 = vld [vmem:[#allocation5 + $0x7a0] sm:$0xff]
    %v385 = vld [vmem:[#allocation5 + $0x7a8] sm:$0xff]
    %v386 = vld [vmem:[#allocation5 + $0x7b0] sm:$0xff]
    %v387 = vld [vmem:[#allocation5 + $0x7b8] sm:$0xff]
    %v388 = vld [vmem:[#allocation5 + $0x7c0] sm:$0xff]
    %v389 = vld [vmem:[#allocation5 + $0x7c8] sm:$0xff]
    %v390 = vld [vmem:[#allocation5 + $0x7d0] sm:$0xff]
    %v391 = vld [vmem:[#allocation5 + $0x7d8] sm:$0xff]
    %v392 = vld [vmem:[#allocation5 + $0x7e0] sm:$0xff]
    %v393 = vld [vmem:[#allocation5 + $0x7e8] sm:$0xff]
    %v394 = vld [vmem:[#allocation5 + $0x7f0] sm:$0xff]
    %v395 = vld [vmem:[#allocation5 + $0x7f8] sm:$0xff]
    %v396 = vld [vmem:[#allocation7] sm:$0x3]
    %v398 = vlaneseq
    %v399 = vshrl.u32 %v398, 7
    %v400 = vsub.s32 0, %v399
    %v401 = vrot.slane %v396, %v400
    %v402 = vlaneseq
    %v403 = vshrl.u32 %v402, 7
    %v404 = vsub.s32 1, %v403
    %v405 = vrot.slane %v396, %v404
    %408 = vmatprep.subr.mxu0 %v171
    %409 = vmatpush1.msra.mxu0 %v170
    %410 = vmatprep.subr.mxu0 %v169
    %411 = vmatpush1.msra.mxu0 %v168
    %412 = vmatprep.subr.mxu0 %v167
    %413 = vmatpush1.msra.mxu0 %v166
    %414 = vmatprep.subr.mxu0 %v165
    %415 = vmatpush1.msra.mxu0 %v164
    %416 = vmatprep.subr.mxu0 %v163
    %417 = vmatpush1.msra.mxu0 %v162
    %418 = vmatprep.subr.mxu0 %v161
    %419 = vmatpush1.msra.mxu0 %v160
    %420 = vmatprep.subr.mxu0 %v159
    %421 = vmatpush1.msra.mxu0 %v158
    %422 = vmatprep.subr.mxu0 %v157
    %423 = vmatpush1.msra.mxu0 %v156
    %424 = vmatprep.subr.mxu0 %v155
    %425 = vmatpush1.msra.mxu0 %v154
    %426 = vmatprep.subr.mxu0 %v153
    %427 = vmatpush1.msra.mxu0 %v152
    %428 = vmatprep.subr.mxu0 %v151
    %429 = vmatpush1.msra.mxu0 %v150
    %430 = vmatprep.subr.mxu0 %v149
    %431 = vmatpush1.msra.mxu0 %v148
    %432 = vmatprep.subr.mxu0 %v147
    %433 = vmatpush1.msra.mxu0 %v146
    %434 = vmatprep.subr.mxu0 %v145
    %435 = vmatpush1.msra.mxu0 %v144
    %436 = vmatprep.subr.mxu0 %v143
    %437 = vmatpush1.msra.mxu0 %v142
    %438 = vmatprep.subr.mxu0 %v141
    %439 = vmatpush1.msra.mxu0 %v140
    %440 = vmatprep.subr.mxu0 %v203
    %441 = vmatpush2.msra.mxu0 %v202
    %442 = vmatprep.subr.mxu0 %v201
    %443 = vmatpush2.msra.mxu0 %v200
    %444 = vmatprep.subr.mxu0 %v199
    %445 = vmatpush2.msra.mxu0 %v198
    %446 = vmatprep.subr.mxu0 %v197
    %447 = vmatpush2.msra.mxu0 %v196
    %448 = vmatprep.subr.mxu0 %v195
    %449 = vmatpush2.msra.mxu0 %v194
    %450 = vmatprep.subr.mxu0 %v193
    %451 = vmatpush2.msra.mxu0 %v192
    %452 = vmatprep.subr.mxu0 %v191
    %453 = vmatpush2.msra.mxu0 %v190
    %454 = vmatprep.subr.mxu0 %v189
    %455 = vmatpush2.msra.mxu0 %v188
    %456 = vmatprep.subr.mxu0 %v187
    %457 = vmatpush2.msra.mxu0 %v186
    %458 = vmatprep.subr.mxu0 %v185
    %459 = vmatpush2.msra.mxu0 %v184
    %460 = vmatprep.subr.mxu0 %v183
    %461 = vmatpush2.msra.mxu0 %v182
    %462 = vmatprep.subr.mxu0 %v181
    %463 = vmatpush2.msra.mxu0 %v180
    %464 = vmatprep.subr.mxu0 %v179
    %465 = vmatpush2.msra.mxu0 %v178
    %466 = vmatprep.subr.mxu0 %v177
    %467 = vmatpush2.msra.mxu0 %v176
    %468 = vmatprep.subr.mxu0 %v175
    %469 = vmatpush2.msra.mxu0 %v174
    %470 = vmatprep.subr.mxu0 %v173
    %471 = vmatpush2.msra.mxu0 %v172
    %472 = vmatprep.mubr.f32.mxu0 %v125
    %473 = vmatmul.mubr.f32.gmra.mxu0 %v124
    %v474 = vpop.f32.mrf.mxu0
    %v475 = vadd.f32 %v401, %v474
    %v476 = vpop.f32.mrf.mxu0
    %v477 = vadd.f32 %v405, %v476
    %478 = vmatprep.mubr.f32.mxu0 %v133
    %479 = vmatmul.mubr.f32.gmra.mxu0 %v132
    %v480 = vpop.f32.mrf.mxu0
    %v481 = vadd.f32 %v401, %v480
    %v482 = vpop.f32.mrf.mxu0
    %v483 = vadd.f32 %v405, %v482
    %484 = vdwg.mxu0
    %485 = vmatprep.subr.mxu0 %v235
    %486 = vmatpush1.msra.mxu0 %v234
    %487 = vmatprep.subr.mxu0 %v233
    %488 = vmatpush1.msra.mxu0 %v232
    %489 = vmatprep.subr.mxu0 %v231
    %490 = vmatpush1.msra.mxu0 %v230
    %491 = vmatprep.subr.mxu0 %v229
    %492 = vmatpush1.msra.mxu0 %v228
    %493 = vmatprep.subr.mxu0 %v227
    %494 = vmatpush1.msra.mxu0 %v226
    %495 = vmatprep.subr.mxu0 %v225
    %496 = vmatpush1.msra.mxu0 %v224
    %497 = vmatprep.subr.mxu0 %v223
    %498 = vmatpush1.msra.mxu0 %v222
    %499 = vmatprep.subr.mxu0 %v221
    %500 = vmatpush1.msra.mxu0 %v220
    %501 = vmatprep.subr.mxu0 %v219
    %502 = vmatpush1.msra.mxu0 %v218
    %503 = vmatprep.subr.mxu0 %v217
    %504 = vmatpush1.msra.mxu0 %v216
    %505 = vmatprep.subr.mxu0 %v215
    %506 = vmatpush1.msra.mxu0 %v214
    %507 = vmatprep.subr.mxu0 %v213
    %508 = vmatpush1.msra.mxu0 %v212
    %509 = vmatprep.subr.mxu0 %v211
    %510 = vmatpush1.msra.mxu0 %v210
    %511 = vmatprep.subr.mxu0 %v209
    %512 = vmatpush1.msra.mxu0 %v208
    %513 = vmatprep.subr.mxu0 %v207
    %514 = vmatpush1.msra.mxu0 %v206
    %515 = vmatprep.subr.mxu0 %v205
    %516 = vmatpush1.msra.mxu0 %v204
    %517 = vmatprep.subr.mxu0 %v267
    %518 = vmatpush2.msra.mxu0 %v266
    %519 = vmatprep.subr.mxu0 %v265
    %520 = vmatpush2.msra.mxu0 %v264
    %521 = vmatprep.subr.mxu0 %v263
    %522 = vmatpush2.msra.mxu0 %v262
    %523 = vmatprep.subr.mxu0 %v261
    %524 = vmatpush2.msra.mxu0 %v260
    %525 = vmatprep.subr.mxu0 %v259
    %526 = vmatpush2.msra.mxu0 %v258
    %527 = vmatprep.subr.mxu0 %v257
    %528 = vmatpush2.msra.mxu0 %v256
    %529 = vmatprep.subr.mxu0 %v255
    %530 = vmatpush2.msra.mxu0 %v254
    %531 = vmatprep.subr.mxu0 %v253
    %532 = vmatpush2.msra.mxu0 %v252
    %533 = vmatprep.subr.mxu0 %v251
    %534 = vmatpush2.msra.mxu0 %v250
    %535 = vmatprep.subr.mxu0 %v249
    %536 = vmatpush2.msra.mxu0 %v248
    %537 = vmatprep.subr.mxu0 %v247
    %538 = vmatpush2.msra.mxu0 %v246
    %539 = vmatprep.subr.mxu0 %v245
    %540 = vmatpush2.msra.mxu0 %v244
    %541 = vmatprep.subr.mxu0 %v243
    %542 = vmatpush2.msra.mxu0 %v242
    %543 = vmatprep.subr.mxu0 %v241
    %544 = vmatpush2.msra.mxu0 %v240
    %545 = vmatprep.subr.mxu0 %v239
    %546 = vmatpush2.msra.mxu0 %v238
    %547 = vmatprep.subr.mxu0 %v237
    %548 = vmatpush2.msra.mxu0 %v236
    %549 = vmatprep.mubr.f32.mxu0 %v127
    %550 = vmatmul.mubr.f32.gmra.mxu0 %v126
    %v551 = vpop.f32.mrf.mxu0
    %v552 = vadd.f32 %v475, %v551
    %v553 = vpop.f32.mrf.mxu0
    %v554 = vadd.f32 %v477, %v553
    %555 = vmatprep.mubr.f32.mxu0 %v135
    %556 = vmatmul.mubr.f32.gmra.mxu0 %v134
    %v557 = vpop.f32.mrf.mxu0
    %v558 = vadd.f32 %v481, %v557
    %v559 = vpop.f32.mrf.mxu0
    %v560 = vadd.f32 %v483, %v559
    %561 = vdwg.mxu0
    %562 = vmatprep.subr.mxu0 %v299
    %563 = vmatpush1.msra.mxu0 %v298
    %564 = vmatprep.subr.mxu0 %v297
    %565 = vmatpush1.msra.mxu0 %v296
    %566 = vmatprep.subr.mxu0 %v295
    %567 = vmatpush1.msra.mxu0 %v294
    %568 = vmatprep.subr.mxu0 %v293
    %569 = vmatpush1.msra.mxu0 %v292
    %570 = vmatprep.subr.mxu0 %v291
    %571 = vmatpush1.msra.mxu0 %v290
    %572 = vmatprep.subr.mxu0 %v289
    %573 = vmatpush1.msra.mxu0 %v288
    %574 = vmatprep.subr.mxu0 %v287
    %575 = vmatpush1.msra.mxu0 %v286
    %576 = vmatprep.subr.mxu0 %v285
    %577 = vmatpush1.msra.mxu0 %v284
    %578 = vmatprep.subr.mxu0 %v283
    %579 = vmatpush1.msra.mxu0 %v282
    %580 = vmatprep.subr.mxu0 %v281
    %581 = vmatpush1.msra.mxu0 %v280
    %582 = vmatprep.subr.mxu0 %v279
    %583 = vmatpush1.msra.mxu0 %v278
    %584 = vmatprep.subr.mxu0 %v277
    %585 = vmatpush1.msra.mxu0 %v276
    %586 = vmatprep.subr.mxu0 %v275
    %587 = vmatpush1.msra.mxu0 %v274
    %588 = vmatprep.subr.mxu0 %v273
    %589 = vmatpush1.msra.mxu0 %v272
    %590 = vmatprep.subr.mxu0 %v271
    %591 = vmatpush1.msra.mxu0 %v270
    %592 = vmatprep.subr.mxu0 %v269
    %593 = vmatpush1.msra.mxu0 %v268
    %594 = vmatprep.subr.mxu0 %v331
    %595 = vmatpush2.msra.mxu0 %v330
    %596 = vmatprep.subr.mxu0 %v329
    %597 = vmatpush2.msra.mxu0 %v328
    %598 = vmatprep.subr.mxu0 %v327
    %599 = vmatpush2.msra.mxu0 %v326
    %600 = vmatprep.subr.mxu0 %v325
    %601 = vmatpush2.msra.mxu0 %v324
    %602 = vmatprep.subr.mxu0 %v323
    %603 = vmatpush2.msra.mxu0 %v322
    %604 = vmatprep.subr.mxu0 %v321
    %605 = vmatpush2.msra.mxu0 %v320
    %606 = vmatprep.subr.mxu0 %v319
    %607 = vmatpush2.msra.mxu0 %v318
    %608 = vmatprep.subr.mxu0 %v317
    %609 = vmatpush2.msra.mxu0 %v316
    %610 = vmatprep.subr.mxu0 %v315
    %611 = vmatpush2.msra.mxu0 %v314
    %612 = vmatprep.subr.mxu0 %v313
    %613 = vmatpush2.msra.mxu0 %v312
    %614 = vmatprep.subr.mxu0 %v311
    %615 = vmatpush2.msra.mxu0 %v310
    %616 = vmatprep.subr.mxu0 %v309
    %617 = vmatpush2.msra.mxu0 %v308
    %618 = vmatprep.subr.mxu0 %v307
    %619 = vmatpush2.msra.mxu0 %v306
    %620 = vmatprep.subr.mxu0 %v305
    %621 = vmatpush2.msra.mxu0 %v304
    %622 = vmatprep.subr.mxu0 %v303
    %623 = vmatpush2.msra.mxu0 %v302
    %624 = vmatprep.subr.mxu0 %v301
    %625 = vmatpush2.msra.mxu0 %v300
    %626 = vmatprep.mubr.f32.mxu0 %v129
    %627 = vmatmul.mubr.f32.gmra.mxu0 %v128
    %v628 = vpop.f32.mrf.mxu0
    %v629 = vadd.f32 %v552, %v628
    %v630 = vpop.f32.mrf.mxu0
    %v631 = vadd.f32 %v554, %v630
    %632 = vmatprep.mubr.f32.mxu0 %v137
    %633 = vmatmul.mubr.f32.gmra.mxu0 %v136
    %v634 = vpop.f32.mrf.mxu0
    %v635 = vadd.f32 %v558, %v634
    %v636 = vpop.f32.mrf.mxu0
    %v637 = vadd.f32 %v560, %v636
    %638 = vdwg.mxu0
    %639 = vmatprep.subr.mxu0 %v363
    %640 = vmatpush1.msra.mxu0 %v362
    %641 = vmatprep.subr.mxu0 %v361
    %642 = vmatpush1.msra.mxu0 %v360
    %643 = vmatprep.subr.mxu0 %v359
    %644 = vmatpush1.msra.mxu0 %v358
    %645 = vmatprep.subr.mxu0 %v357
    %646 = vmatpush1.msra.mxu0 %v356
    %647 = vmatprep.subr.mxu0 %v355
    %648 = vmatpush1.msra.mxu0 %v354
    %649 = vmatprep.subr.mxu0 %v353
    %650 = vmatpush1.msra.mxu0 %v352
    %651 = vmatprep.subr.mxu0 %v351
    %652 = vmatpush1.msra.mxu0 %v350
    %653 = vmatprep.subr.mxu0 %v349
    %654 = vmatpush1.msra.mxu0 %v348
    %655 = vmatprep.subr.mxu0 %v347
    %656 = vmatpush1.msra.mxu0 %v346
    %657 = vmatprep.subr.mxu0 %v345
    %658 = vmatpush1.msra.mxu0 %v344
    %659 = vmatprep.subr.mxu0 %v343
    %660 = vmatpush1.msra.mxu0 %v342
    %661 = vmatprep.subr.mxu0 %v341
    %662 = vmatpush1.msra.mxu0 %v340
    %663 = vmatprep.subr.mxu0 %v339
    %664 = vmatpush1.msra.mxu0 %v338
    %665 = vmatprep.subr.mxu0 %v337
    %666 = vmatpush1.msra.mxu0 %v336
    %667 = vmatprep.subr.mxu0 %v335
    %668 = vmatpush1.msra.mxu0 %v334
    %669 = vmatprep.subr.mxu0 %v333
    %670 = vmatpush1.msra.mxu0 %v332
    %671 = vmatprep.subr.mxu0 %v395
    %672 = vmatpush2.msra.mxu0 %v394
    %673 = vmatprep.subr.mxu0 %v393
    %674 = vmatpush2.msra.mxu0 %v392
    %675 = vmatprep.subr.mxu0 %v391
    %676 = vmatpush2.msra.mxu0 %v390
    %677 = vmatprep.subr.mxu0 %v389
    %678 = vmatpush2.msra.mxu0 %v388
    %679 = vmatprep.subr.mxu0 %v387
    %680 = vmatpush2.msra.mxu0 %v386
    %681 = vmatprep.subr.mxu0 %v385
    %682 = vmatpush2.msra.mxu0 %v384
    %683 = vmatprep.subr.mxu0 %v383
    %684 = vmatpush2.msra.mxu0 %v382
    %685 = vmatprep.subr.mxu0 %v381
    %686 = vmatpush2.msra.mxu0 %v380
    %687 = vmatprep.subr.mxu0 %v379
    %688 = vmatpush2.msra.mxu0 %v378
    %689 = vmatprep.subr.mxu0 %v377
    %690 = vmatpush2.msra.mxu0 %v376
    %691 = vmatprep.subr.mxu0 %v375
    %692 = vmatpush2.msra.mxu0 %v374
    %693 = vmatprep.subr.mxu0 %v373
    %694 = vmatpush2.msra.mxu0 %v372
    %695 = vmatprep.subr.mxu0 %v371
    %696 = vmatpush2.msra.mxu0 %v370
    %697 = vmatprep.subr.mxu0 %v369
    %698 = vmatpush2.msra.mxu0 %v368
    %699 = vmatprep.subr.mxu0 %v367
    %700 = vmatpush2.msra.mxu0 %v366
    %701 = vmatprep.subr.mxu0 %v365
    %702 = vmatpush2.msra.mxu0 %v364
    %703 = vmatprep.mubr.f32.mxu0 %v131
    %704 = vmatmul.mubr.f32.gmra.mxu0 %v130
    %v705 = vpop.f32.mrf.mxu0
    %v706 = vadd.f32 %v629, %v705
    %v707 = vpop.f32.mrf.mxu0
    %v708 = vadd.f32 %v631, %v707
    %709 = vmatprep.mubr.f32.mxu0 %v139
    %710 = vmatmul.mubr.f32.gmra.mxu0 %v138
    %v711 = vpop.f32.mrf.mxu0
    %v712 = vadd.f32 %v635, %v711
    %v713 = vpop.f32.mrf.mxu0
    %v714 = vadd.f32 %v637, %v713
    %715 = vdwg.mxu0
    %v716 = vmax.f32 %v706, 0.0
    %v717 = vmax.f32 %v708, 0.0
    %v718 = vmax.f32 %v712, 0.0
    %v719 = vmax.f32 %v714, 0.0
    %v720 = vld [vmem:[#allocation8] sm:$0xff]
    %v721 = vld [vmem:[#allocation8 + $0x8] sm:$0xff]
    %v722 = vld [vmem:[#allocation8 + $0x10] sm:$0xff]
    %v723 = vld [vmem:[#allocation8 + $0x18] sm:$0xff]
    %v724 = vld [vmem:[#allocation8 + $0x20] sm:$0xff]
    %v725 = vld [vmem:[#allocation8 + $0x28] sm:$0xff]
    %v726 = vld [vmem:[#allocation8 + $0x30] sm:$0xff]
    %v727 = vld [vmem:[#allocation8 + $0x38] sm:$0xff]
    %v728 = vld [vmem:[#allocation8 + $0x40] sm:$0xff]
    %v729 = vld [vmem:[#allocation8 + $0x48] sm:$0xff]
    %v730 = vld [vmem:[#allocation8 + $0x50] sm:$0xff]
    %v731 = vld [vmem:[#allocation8 + $0x58] sm:$0xff]
    %v732 = vld [vmem:[#allocation8 + $0x60] sm:$0xff]
    %v733 = vld [vmem:[#allocation8 + $0x68] sm:$0xff]
    %v734 = vld [vmem:[#allocation8 + $0x70] sm:$0xff]
    %v735 = vld [vmem:[#allocation8 + $0x78] sm:$0xff]
    %v736 = vld [vmem:[#allocation8 + $0x80] sm:$0xff]
    %v737 = vld [vmem:[#allocation8 + $0x88] sm:$0xff]
    %v738 = vld [vmem:[#allocation8 + $0x90] sm:$0xff]
    %v739 = vld [vmem:[#allocation8 + $0x98] sm:$0xff]
    %v740 = vld [vmem:[#allocation8 + $0xa0] sm:$0xff]
    %v741 = vld [vmem:[#allocation8 + $0xa8] sm:$0xff]
    %v742 = vld [vmem:[#allocation8 + $0xb0] sm:$0xff]
    %v743 = vld [vmem:[#allocation8 + $0xb8] sm:$0xff]
    %v744 = vld [vmem:[#allocation8 + $0xc0] sm:$0xff]
    %v745 = vld [vmem:[#allocation8 + $0xc8] sm:$0xff]
    %v746 = vld [vmem:[#allocation8 + $0xd0] sm:$0xff]
    %v747 = vld [vmem:[#allocation8 + $0xd8] sm:$0xff]
    %v748 = vld [vmem:[#allocation8 + $0xe0] sm:$0xff]
    %v749 = vld [vmem:[#allocation8 + $0xe8] sm:$0xff]
    %v750 = vld [vmem:[#allocation8 + $0xf0] sm:$0xff]
    %v751 = vld [vmem:[#allocation8 + $0xf8] sm:$0xff]
    %v752 = vld [vmem:[#allocation8 + $0x100] sm:$0xff]
    %v753 = vld [vmem:[#allocation8 + $0x108] sm:$0xff]
    %v754 = vld [vmem:[#allocation8 + $0x110] sm:$0xff]
    %v755 = vld [vmem:[#allocation8 + $0x118] sm:$0xff]
    %v756 = vld [vmem:[#allocation8 + $0x120] sm:$0xff]
    %v757 = vld [vmem:[#allocation8 + $0x128] sm:$0xff]
    %v758 = vld [vmem:[#allocation8 + $0x130] sm:$0xff]
    %v759 = vld [vmem:[#allocation8 + $0x138] sm:$0xff]
    %v760 = vld [vmem:[#allocation8 + $0x140] sm:$0xff]
    %v761 = vld [vmem:[#allocation8 + $0x148] sm:$0xff]
    %v762 = vld [vmem:[#allocation8 + $0x150] sm:$0xff]
    %v763 = vld [vmem:[#allocation8 + $0x158] sm:$0xff]
    %v764 = vld [vmem:[#allocation8 + $0x160] sm:$0xff]
    %v765 = vld [vmem:[#allocation8 + $0x168] sm:$0xff]
    %v766 = vld [vmem:[#allocation8 + $0x170] sm:$0xff]
    %v767 = vld [vmem:[#allocation8 + $0x178] sm:$0xff]
    %v768 = vld [vmem:[#allocation8 + $0x180] sm:$0xff]
    %v769 = vld [vmem:[#allocation8 + $0x188] sm:$0xff]
    %v770 = vld [vmem:[#allocation8 + $0x190] sm:$0xff]
    %v771 = vld [vmem:[#allocation8 + $0x198] sm:$0xff]
    %v772 = vld [vmem:[#allocation8 + $0x1a0] sm:$0xff]
    %v773 = vld [vmem:[#allocation8 + $0x1a8] sm:$0xff]
    %v774 = vld [vmem:[#allocation8 + $0x1b0] sm:$0xff]
    %v775 = vld [vmem:[#allocation8 + $0x1b8] sm:$0xff]
    %v776 = vld [vmem:[#allocation8 + $0x1c0] sm:$0xff]
    %v777 = vld [vmem:[#allocation8 + $0x1c8] sm:$0xff]
    %v778 = vld [vmem:[#allocation8 + $0x1d0] sm:$0xff]
    %v779 = vld [vmem:[#allocation8 + $0x1d8] sm:$0xff]
    %v780 = vld [vmem:[#allocation8 + $0x1e0] sm:$0xff]
    %v781 = vld [vmem:[#allocation8 + $0x1e8] sm:$0xff]
    %v782 = vld [vmem:[#allocation8 + $0x1f0] sm:$0xff]
    %v783 = vld [vmem:[#allocation8 + $0x1f8] sm:$0xff]
    %v784 = vld [vmem:[#allocation8 + $0x200] sm:$0xff]
    %v785 = vld [vmem:[#allocation8 + $0x208] sm:$0xff]
    %v786 = vld [vmem:[#allocation8 + $0x210] sm:$0xff]
    %v787 = vld [vmem:[#allocation8 + $0x218] sm:$0xff]
    %v788 = vld [vmem:[#allocation8 + $0x220] sm:$0xff]
    %v789 = vld [vmem:[#allocation8 + $0x228] sm:$0xff]
    %v790 = vld [vmem:[#allocation8 + $0x230] sm:$0xff]
    %v791 = vld [vmem:[#allocation8 + $0x238] sm:$0xff]
    %v792 = vld [vmem:[#allocation8 + $0x240] sm:$0xff]
    %v793 = vld [vmem:[#allocation8 + $0x248] sm:$0xff]
    %v794 = vld [vmem:[#allocation8 + $0x250] sm:$0xff]
    %v795 = vld [vmem:[#allocation8 + $0x258] sm:$0xff]
    %v796 = vld [vmem:[#allocation8 + $0x260] sm:$0xff]
    %v797 = vld [vmem:[#allocation8 + $0x268] sm:$0xff]
    %v798 = vld [vmem:[#allocation8 + $0x270] sm:$0xff]
    %v799 = vld [vmem:[#allocation8 + $0x278] sm:$0xff]
    %v800 = vld [vmem:[#allocation8 + $0x280] sm:$0xff]
    %v801 = vld [vmem:[#allocation8 + $0x288] sm:$0xff]
    %v802 = vld [vmem:[#allocation8 + $0x290] sm:$0xff]
    %v803 = vld [vmem:[#allocation8 + $0x298] sm:$0xff]
    %v804 = vld [vmem:[#allocation8 + $0x2a0] sm:$0xff]
    %v805 = vld [vmem:[#allocation8 + $0x2a8] sm:$0xff]
    %v806 = vld [vmem:[#allocation8 + $0x2b0] sm:$0xff]
    %v807 = vld [vmem:[#allocation8 + $0x2b8] sm:$0xff]
    %v808 = vld [vmem:[#allocation8 + $0x2c0] sm:$0xff]
    %v809 = vld [vmem:[#allocation8 + $0x2c8] sm:$0xff]
    %v810 = vld [vmem:[#allocation8 + $0x2d0] sm:$0xff]
    %v811 = vld [vmem:[#allocation8 + $0x2d8] sm:$0xff]
    %v812 = vld [vmem:[#allocation8 + $0x2e0] sm:$0xff]
    %v813 = vld [vmem:[#allocation8 + $0x2e8] sm:$0xff]
    %v814 = vld [vmem:[#allocation8 + $0x2f0] sm:$0xff]
    %v815 = vld [vmem:[#allocation8 + $0x2f8] sm:$0xff]
    %v816 = vld [vmem:[#allocation8 + $0x300] sm:$0xff]
    %v817 = vld [vmem:[#allocation8 + $0x308] sm:$0xff]
    %v818 = vld [vmem:[#allocation8 + $0x310] sm:$0xff]
    %v819 = vld [vmem:[#allocation8 + $0x318] sm:$0xff]
    %v820 = vld [vmem:[#allocation8 + $0x320] sm:$0xff]
    %v821 = vld [vmem:[#allocation8 + $0x328] sm:$0xff]
    %v822 = vld [vmem:[#allocation8 + $0x330] sm:$0xff]
    %v823 = vld [vmem:[#allocation8 + $0x338] sm:$0xff]
    %v824 = vld [vmem:[#allocation8 + $0x340] sm:$0xff]
    %v825 = vld [vmem:[#allocation8 + $0x348] sm:$0xff]
    %v826 = vld [vmem:[#allocation8 + $0x350] sm:$0xff]
    %v827 = vld [vmem:[#allocation8 + $0x358] sm:$0xff]
    %v828 = vld [vmem:[#allocation8 + $0x360] sm:$0xff]
    %v829 = vld [vmem:[#allocation8 + $0x368] sm:$0xff]
    %v830 = vld [vmem:[#allocation8 + $0x370] sm:$0xff]
    %v831 = vld [vmem:[#allocation8 + $0x378] sm:$0xff]
    %v832 = vld [vmem:[#allocation8 + $0x380] sm:$0xff]
    %v833 = vld [vmem:[#allocation8 + $0x388] sm:$0xff]
    %v834 = vld [vmem:[#allocation8 + $0x390] sm:$0xff]
    %v835 = vld [vmem:[#allocation8 + $0x398] sm:$0xff]
    %v836 = vld [vmem:[#allocation8 + $0x3a0] sm:$0xff]
    %v837 = vld [vmem:[#allocation8 + $0x3a8] sm:$0xff]
    %v838 = vld [vmem:[#allocation8 + $0x3b0] sm:$0xff]
    %v839 = vld [vmem:[#allocation8 + $0x3b8] sm:$0xff]
    %v840 = vld [vmem:[#allocation8 + $0x3c0] sm:$0xff]
    %v841 = vld [vmem:[#allocation8 + $0x3c8] sm:$0xff]
    %v842 = vld [vmem:[#allocation8 + $0x3d0] sm:$0xff]
    %v843 = vld [vmem:[#allocation8 + $0x3d8] sm:$0xff]
    %v844 = vld [vmem:[#allocation8 + $0x3e0] sm:$0xff]
    %v845 = vld [vmem:[#allocation8 + $0x3e8] sm:$0xff]
    %v846 = vld [vmem:[#allocation8 + $0x3f0] sm:$0xff]
    %v847 = vld [vmem:[#allocation8 + $0x3f8] sm:$0xff]
    %v848 = vld [vmem:[#allocation8 + $0x400] sm:$0xff]
    %v849 = vld [vmem:[#allocation8 + $0x408] sm:$0xff]
    %v850 = vld [vmem:[#allocation8 + $0x410] sm:$0xff]
    %v851 = vld [vmem:[#allocation8 + $0x418] sm:$0xff]
    %v852 = vld [vmem:[#allocation8 + $0x420] sm:$0xff]
    %v853 = vld [vmem:[#allocation8 + $0x428] sm:$0xff]
    %v854 = vld [vmem:[#allocation8 + $0x430] sm:$0xff]
    %v855 = vld [vmem:[#allocation8 + $0x438] sm:$0xff]
    %v856 = vld [vmem:[#allocation8 + $0x440] sm:$0xff]
    %v857 = vld [vmem:[#allocation8 + $0x448] sm:$0xff]
    %v858 = vld [vmem:[#allocation8 + $0x450] sm:$0xff]
    %v859 = vld [vmem:[#allocation8 + $0x458] sm:$0xff]
    %v860 = vld [vmem:[#allocation8 + $0x460] sm:$0xff]
    %v861 = vld [vmem:[#allocation8 + $0x468] sm:$0xff]
    %v862 = vld [vmem:[#allocation8 + $0x470] sm:$0xff]
    %v863 = vld [vmem:[#allocation8 + $0x478] sm:$0xff]
    %v864 = vld [vmem:[#allocation8 + $0x480] sm:$0xff]
    %v865 = vld [vmem:[#allocation8 + $0x488] sm:$0xff]
    %v866 = vld [vmem:[#allocation8 + $0x490] sm:$0xff]
    %v867 = vld [vmem:[#allocation8 + $0x498] sm:$0xff]
    %v868 = vld [vmem:[#allocation8 + $0x4a0] sm:$0xff]
    %v869 = vld [vmem:[#allocation8 + $0x4a8] sm:$0xff]
    %v870 = vld [vmem:[#allocation8 + $0x4b0] sm:$0xff]
    %v871 = vld [vmem:[#allocation8 + $0x4b8] sm:$0xff]
    %v872 = vld [vmem:[#allocation8 + $0x4c0] sm:$0xff]
    %v873 = vld [vmem:[#allocation8 + $0x4c8] sm:$0xff]
    %v874 = vld [vmem:[#allocation8 + $0x4d0] sm:$0xff]
    %v875 = vld [vmem:[#allocation8 + $0x4d8] sm:$0xff]
    %v876 = vld [vmem:[#allocation8 + $0x4e0] sm:$0xff]
    %v877 = vld [vmem:[#allocation8 + $0x4e8] sm:$0xff]
    %v878 = vld [vmem:[#allocation8 + $0x4f0] sm:$0xff]
    %v879 = vld [vmem:[#allocation8 + $0x4f8] sm:$0xff]
    %v880 = vld [vmem:[#allocation8 + $0x500] sm:$0xff]
    %v881 = vld [vmem:[#allocation8 + $0x508] sm:$0xff]
    %v882 = vld [vmem:[#allocation8 + $0x510] sm:$0xff]
    %v883 = vld [vmem:[#allocation8 + $0x518] sm:$0xff]
    %v884 = vld [vmem:[#allocation8 + $0x520] sm:$0xff]
    %v885 = vld [vmem:[#allocation8 + $0x528] sm:$0xff]
    %v886 = vld [vmem:[#allocation8 + $0x530] sm:$0xff]
    %v887 = vld [vmem:[#allocation8 + $0x538] sm:$0xff]
    %v888 = vld [vmem:[#allocation8 + $0x540] sm:$0xff]
    %v889 = vld [vmem:[#allocation8 + $0x548] sm:$0xff]
    %v890 = vld [vmem:[#allocation8 + $0x550] sm:$0xff]
    %v891 = vld [vmem:[#allocation8 + $0x558] sm:$0xff]
    %v892 = vld [vmem:[#allocation8 + $0x560] sm:$0xff]
    %v893 = vld [vmem:[#allocation8 + $0x568] sm:$0xff]
    %v894 = vld [vmem:[#allocation8 + $0x570] sm:$0xff]
    %v895 = vld [vmem:[#allocation8 + $0x578] sm:$0xff]
    %v896 = vld [vmem:[#allocation8 + $0x580] sm:$0xff]
    %v897 = vld [vmem:[#allocation8 + $0x588] sm:$0xff]
    %v898 = vld [vmem:[#allocation8 + $0x590] sm:$0xff]
    %v899 = vld [vmem:[#allocation8 + $0x598] sm:$0xff]
    %v900 = vld [vmem:[#allocation8 + $0x5a0] sm:$0xff]
    %v901 = vld [vmem:[#allocation8 + $0x5a8] sm:$0xff]
    %v902 = vld [vmem:[#allocation8 + $0x5b0] sm:$0xff]
    %v903 = vld [vmem:[#allocation8 + $0x5b8] sm:$0xff]
    %v904 = vld [vmem:[#allocation8 + $0x5c0] sm:$0xff]
    %v905 = vld [vmem:[#allocation8 + $0x5c8] sm:$0xff]
    %v906 = vld [vmem:[#allocation8 + $0x5d0] sm:$0xff]
    %v907 = vld [vmem:[#allocation8 + $0x5d8] sm:$0xff]
    %v908 = vld [vmem:[#allocation8 + $0x5e0] sm:$0xff]
    %v909 = vld [vmem:[#allocation8 + $0x5e8] sm:$0xff]
    %v910 = vld [vmem:[#allocation8 + $0x5f0] sm:$0xff]
    %v911 = vld [vmem:[#allocation8 + $0x5f8] sm:$0xff]
    %v912 = vld [vmem:[%s4] sm:$0x3f]
    %v914 = vlaneseq
    %v915 = vshrl.u32 %v914, 7
    %v916 = vsub.s32 0, %v915
    %v917 = vrot.slane %v912, %v916
    %v918 = vlaneseq
    %v919 = vshrl.u32 %v918, 7
    %v920 = vsub.s32 1, %v919
    %v921 = vrot.slane %v912, %v920
    %v922 = vlaneseq
    %v923 = vshrl.u32 %v922, 7
    %v924 = vsub.s32 2, %v923
    %v925 = vrot.slane %v912, %v924
    %v926 = vlaneseq
    %v927 = vshrl.u32 %v926, 7
    %v928 = vsub.s32 3, %v927
    %v929 = vrot.slane %v912, %v928
    %v930 = vlaneseq
    %v931 = vshrl.u32 %v930, 7
    %v932 = vsub.s32 4, %v931
    %v933 = vrot.slane %v912, %v932
    %v934 = vlaneseq
    %v935 = vshrl.u32 %v934, 7
    %v936 = vsub.s32 5, %v935
    %v937 = vrot.slane %v912, %v936
    %944 = vmatprep.subr.mxu0 %v811
    %945 = vmatpush1.msra.mxu0 %v810
    %946 = vmatprep.subr.mxu0 %v805
    %947 = vmatpush1.msra.mxu0 %v804
    %948 = vmatprep.subr.mxu0 %v799
    %949 = vmatpush1.msra.mxu0 %v798
    %950 = vmatprep.subr.mxu0 %v793
    %951 = vmatpush1.msra.mxu0 %v792
    %952 = vmatprep.subr.mxu0 %v787
    %953 = vmatpush1.msra.mxu0 %v786
    %954 = vmatprep.subr.mxu0 %v781
    %955 = vmatpush1.msra.mxu0 %v780
    %956 = vmatprep.subr.mxu0 %v775
    %957 = vmatpush1.msra.mxu0 %v774
    %958 = vmatprep.subr.mxu0 %v769
    %959 = vmatpush1.msra.mxu0 %v768
    %960 = vmatprep.subr.mxu0 %v763
    %961 = vmatpush1.msra.mxu0 %v762
    %962 = vmatprep.subr.mxu0 %v757
    %963 = vmatpush1.msra.mxu0 %v756
    %964 = vmatprep.subr.mxu0 %v751
    %965 = vmatpush1.msra.mxu0 %v750
    %966 = vmatprep.subr.mxu0 %v745
    %967 = vmatpush1.msra.mxu0 %v744
    %968 = vmatprep.subr.mxu0 %v739
    %969 = vmatpush1.msra.mxu0 %v738
    %970 = vmatprep.subr.mxu0 %v733
    %971 = vmatpush1.msra.mxu0 %v732
    %972 = vmatprep.subr.mxu0 %v727
    %973 = vmatpush1.msra.mxu0 %v726
    %974 = vmatprep.subr.mxu0 %v721
    %975 = vmatpush1.msra.mxu0 %v720
    %976 = vmatprep.subr.mxu0 %v907
    %977 = vmatpush2.msra.mxu0 %v906
    %978 = vmatprep.subr.mxu0 %v901
    %979 = vmatpush2.msra.mxu0 %v900
    %980 = vmatprep.subr.mxu0 %v895
    %981 = vmatpush2.msra.mxu0 %v894
    %982 = vmatprep.subr.mxu0 %v889
    %983 = vmatpush2.msra.mxu0 %v888
    %984 = vmatprep.subr.mxu0 %v883
    %985 = vmatpush2.msra.mxu0 %v882
    %986 = vmatprep.subr.mxu0 %v877
    %987 = vmatpush2.msra.mxu0 %v876
    %988 = vmatprep.subr.mxu0 %v871
    %989 = vmatpush2.msra.mxu0 %v870
    %990 = vmatprep.subr.mxu0 %v865
    %991 = vmatpush2.msra.mxu0 %v864
    %992 = vmatprep.subr.mxu0 %v859
    %993 = vmatpush2.msra.mxu0 %v858
    %994 = vmatprep.subr.mxu0 %v853
    %995 = vmatpush2.msra.mxu0 %v852
    %996 = vmatprep.subr.mxu0 %v847
    %997 = vmatpush2.msra.mxu0 %v846
    %998 = vmatprep.subr.mxu0 %v841
    %999 = vmatpush2.msra.mxu0 %v840
    %1000 = vmatprep.subr.mxu0 %v835
    %1001 = vmatpush2.msra.mxu0 %v834
    %1002 = vmatprep.subr.mxu0 %v829
    %1003 = vmatpush2.msra.mxu0 %v828
    %1004 = vmatprep.subr.mxu0 %v823
    %1005 = vmatpush2.msra.mxu0 %v822
    %1006 = vmatprep.subr.mxu0 %v817
    %1007 = vmatpush2.msra.mxu0 %v816
    %1008 = vmatprep.mubr.f32.mxu0 %v717
    %1009 = vmatmul.mubr.f32.gmra.mxu0 %v716
    %v1010 = vpop.f32.mrf.mxu0
    %v1011 = vadd.f32 %v917, %v1010
    %v1012 = vpop.f32.mrf.mxu0
    %v1013 = vadd.f32 %v921, %v1012
    %1014 = vmatprep.mubr.f32.mxu0 %v719
    %1015 = vmatmul.mubr.f32.gmra.mxu0 %v718
    %v1016 = vpop.f32.mrf.mxu0
    %v1017 = vadd.f32 %v917, %v1016
    %v1018 = vpop.f32.mrf.mxu0
    %v1019 = vadd.f32 %v921, %v1018
    %1020 = vdwg.mxu0
    %1021 = vmatprep.subr.mxu0 %v813
    %1022 = vmatpush1.msra.mxu0 %v812
    %1023 = vmatprep.subr.mxu0 %v807
    %1024 = vmatpush1.msra.mxu0 %v806
    %1025 = vmatprep.subr.mxu0 %v801
    %1026 = vmatpush1.msra.mxu0 %v800
    %1027 = vmatprep.subr.mxu0 %v795
    %1028 = vmatpush1.msra.mxu0 %v794
    %1029 = vmatprep.subr.mxu0 %v789
    %1030 = vmatpush1.msra.mxu0 %v788
    %1031 = vmatprep.subr.mxu0 %v783
    %1032 = vmatpush1.msra.mxu0 %v782
    %1033 = vmatprep.subr.mxu0 %v777
    %1034 = vmatpush1.msra.mxu0 %v776
    %1035 = vmatprep.subr.mxu0 %v771
    %1036 = vmatpush1.msra.mxu0 %v770
    %1037 = vmatprep.subr.mxu0 %v765
    %1038 = vmatpush1.msra.mxu0 %v764
    %1039 = vmatprep.subr.mxu0 %v759
    %1040 = vmatpush1.msra.mxu0 %v758
    %1041 = vmatprep.subr.mxu0 %v753
    %1042 = vmatpush1.msra.mxu0 %v752
    %1043 = vmatprep.subr.mxu0 %v747
    %1044 = vmatpush1.msra.mxu0 %v746
    %1045 = vmatprep.subr.mxu0 %v741
    %1046 = vmatpush1.msra.mxu0 %v740
    %1047 = vmatprep.subr.mxu0 %v735
    %1048 = vmatpush1.msra.mxu0 %v734
    %1049 = vmatprep.subr.mxu0 %v729
    %1050 = vmatpush1.msra.mxu0 %v728
    %1051 = vmatprep.subr.mxu0 %v723
    %1052 = vmatpush1.msra.mxu0 %v722
    %1053 = vmatprep.subr.mxu0 %v909
    %1054 = vmatpush2.msra.mxu0 %v908
    %1055 = vmatprep.subr.mxu0 %v903
    %1056 = vmatpush2.msra.mxu0 %v902
    %1057 = vmatprep.subr.mxu0 %v897
    %1058 = vmatpush2.msra.mxu0 %v896
    %1059 = vmatprep.subr.mxu0 %v891
    %1060 = vmatpush2.msra.mxu0 %v890
    %1061 = vmatprep.subr.mxu0 %v885
    %1062 = vmatpush2.msra.mxu0 %v884
    %1063 = vmatprep.subr.mxu0 %v879
    %1064 = vmatpush2.msra.mxu0 %v878
    %1065 = vmatprep.subr.mxu0 %v873
    %1066 = vmatpush2.msra.mxu0 %v872
    %1067 = vmatprep.subr.mxu0 %v867
    %1068 = vmatpush2.msra.mxu0 %v866
    %1069 = vmatprep.subr.mxu0 %v861
    %1070 = vmatpush2.msra.mxu0 %v860
    %1071 = vmatprep.subr.mxu0 %v855
    %1072 = vmatpush2.msra.mxu0 %v854
    %1073 = vmatprep.subr.mxu0 %v849
    %1074 = vmatpush2.msra.mxu0 %v848
    %1075 = vmatprep.subr.mxu0 %v843
    %1076 = vmatpush2.msra.mxu0 %v842
    %1077 = vmatprep.subr.mxu0 %v837
    %1078 = vmatpush2.msra.mxu0 %v836
    %1079 = vmatprep.subr.mxu0 %v831
    %1080 = vmatpush2.msra.mxu0 %v830
    %1081 = vmatprep.subr.mxu0 %v825
    %1082 = vmatpush2.msra.mxu0 %v824
    %1083 = vmatprep.subr.mxu0 %v819
    %1084 = vmatpush2.msra.mxu0 %v818
    %1085 = vmatprep.mubr.f32.mxu0 %v717
    %1086 = vmatmul.mubr.f32.gmra.mxu0 %v716
    %v1087 = vpop.f32.mrf.mxu0
    %v1088 = vadd.f32 %v925, %v1087
    %v1089 = vpop.f32.mrf.mxu0
    %v1090 = vadd.f32 %v929, %v1089
    %1091 = vmatprep.mubr.f32.mxu0 %v719
    %1092 = vmatmul.mubr.f32.gmra.mxu0 %v718
    %v1093 = vpop.f32.mrf.mxu0
    %v1094 = vadd.f32 %v925, %v1093
    %v1095 = vpop.f32.mrf.mxu0
    %v1096 = vadd.f32 %v929, %v1095
    %1097 = vdwg.mxu0
    %1098 = vmatprep.subr.mxu0 %v815
    %1099 = vmatpush1.msra.mxu0 %v814
    %1100 = vmatprep.subr.mxu0 %v809
    %1101 = vmatpush1.msra.mxu0 %v808
    %1102 = vmatprep.subr.mxu0 %v803
    %1103 = vmatpush1.msra.mxu0 %v802
    %1104 = vmatprep.subr.mxu0 %v797
    %1105 = vmatpush1.msra.mxu0 %v796
    %1106 = vmatprep.subr.mxu0 %v791
    %1107 = vmatpush1.msra.mxu0 %v790
    %1108 = vmatprep.subr.mxu0 %v785
    %1109 = vmatpush1.msra.mxu0 %v784
    %1110 = vmatprep.subr.mxu0 %v779
    %1111 = vmatpush1.msra.mxu0 %v778
    %1112 = vmatprep.subr.mxu0 %v773
    %1113 = vmatpush1.msra.mxu0 %v772
    %1114 = vmatprep.subr.mxu0 %v767
    %1115 = vmatpush1.msra.mxu0 %v766
    %1116 = vmatprep.subr.mxu0 %v761
    %1117 = vmatpush1.msra.mxu0 %v760
    %1118 = vmatprep.subr.mxu0 %v755
    %1119 = vmatpush1.msra.mxu0 %v754
    %1120 = vmatprep.subr.mxu0 %v749
    %1121 = vmatpush1.msra.mxu0 %v748
    %1122 = vmatprep.subr.mxu0 %v743
    %1123 = vmatpush1.msra.mxu0 %v742
    %1124 = vmatprep.subr.mxu0 %v737
    %1125 = vmatpush1.msra.mxu0 %v736
    %1126 = vmatprep.subr.mxu0 %v731
    %1127 = vmatpush1.msra.mxu0 %v730
    %1128 = vmatprep.subr.mxu0 %v725
    %1129 = vmatpush1.msra.mxu0 %v724
    %1130 = vmatprep.subr.mxu0 %v911
    %1131 = vmatpush2.msra.mxu0 %v910
    %1132 = vmatprep.subr.mxu0 %v905
    %1133 = vmatpush2.msra.mxu0 %v904
    %1134 = vmatprep.subr.mxu0 %v899
    %1135 = vmatpush2.msra.mxu0 %v898
    %1136 = vmatprep.subr.mxu0 %v893
    %1137 = vmatpush2.msra.mxu0 %v892
    %1138 = vmatprep.subr.mxu0 %v887
    %1139 = vmatpush2.msra.mxu0 %v886
    %1140 = vmatprep.subr.mxu0 %v881
    %1141 = vmatpush2.msra.mxu0 %v880
    %1142 = vmatprep.subr.mxu0 %v875
    %1143 = vmatpush2.msra.mxu0 %v874
    %1144 = vmatprep.subr.mxu0 %v869
    %1145 = vmatpush2.msra.mxu0 %v868
    %1146 = vmatprep.subr.mxu0 %v863
    %1147 = vmatpush2.msra.mxu0 %v862
    %1148 = vmatprep.subr.mxu0 %v857
    %1149 = vmatpush2.msra.mxu0 %v856
    %1150 = vmatprep.subr.mxu0 %v851
    %1151 = vmatpush2.msra.mxu0 %v850
    %1152 = vmatprep.subr.mxu0 %v845
    %1153 = vmatpush2.msra.mxu0 %v844
    %1154 = vmatprep.subr.mxu0 %v839
    %1155 = vmatpush2.msra.mxu0 %v838
    %1156 = vmatprep.subr.mxu0 %v833
    %1157 = vmatpush2.msra.mxu0 %v832
    %1158 = vmatprep.subr.mxu0 %v827
    %1159 = vmatpush2.msra.mxu0 %v826
    %1160 = vmatprep.subr.mxu0 %v821
    %1161 = vmatpush2.msra.mxu0 %v820
    %1162 = vmatprep.mubr.f32.mxu0 %v717
    %1163 = vmatmul.mubr.f32.gmra.mxu0 %v716
    %v1164 = vpop.f32.mrf.mxu0
    %v1165 = vadd.f32 %v933, %v1164
    %v1166 = vpop.f32.mrf.mxu0
    %v1167 = vadd.f32 %v937, %v1166
    %1168 = vmatprep.mubr.f32.mxu0 %v719
    %1169 = vmatmul.mubr.f32.gmra.mxu0 %v718
    %v1170 = vpop.f32.mrf.mxu0
    %v1171 = vadd.f32 %v933, %v1170
    %v1172 = vpop.f32.mrf.mxu0
    %v1173 = vadd.f32 %v937, %v1172
    %1174 = vdwg.mxu0
    %v1175 = vld [vmem:[#allocation10] sm:$0xff]
    %v1176 = vld [vmem:[#allocation10 + $0x8] sm:$0xff]
    %v1177 = vld [vmem:[#allocation10 + $0x10] sm:$0xff]
    %v1178 = vld [vmem:[#allocation10 + $0x18] sm:$0xff]
    %v1179 = vld [vmem:[#allocation10 + $0x20] sm:$0xff]
    %v1180 = vld [vmem:[#allocation10 + $0x28] sm:$0xff]
    %v1181 = vld [vmem:[#allocation10 + $0x30] sm:$0xff]
    %v1182 = vld [vmem:[#allocation10 + $0x38] sm:$0xff]
    %v1183 = vld [vmem:[#allocation10 + $0x40] sm:$0xff]
    %v1184 = vld [vmem:[#allocation10 + $0x48] sm:$0xff]
    %v1185 = vld [vmem:[#allocation10 + $0x50] sm:$0xff]
    %v1186 = vld [vmem:[#allocation10 + $0x58] sm:$0xff]
    %v1187 = vld [vmem:[#allocation10 + $0x60] sm:$0xff]
    %v1188 = vld [vmem:[#allocation10 + $0x68] sm:$0xff]
    %v1189 = vld [vmem:[#allocation10 + $0x70] sm:$0xff]
    %v1190 = vld [vmem:[#allocation10 + $0x78] sm:$0xff]
    %v1191 = vld [vmem:[#allocation10 + $0x80] sm:$0xff]
    %v1192 = vld [vmem:[#allocation10 + $0x88] sm:$0xff]
    %v1193 = vld [vmem:[#allocation10 + $0x90] sm:$0xff]
    %v1194 = vld [vmem:[#allocation10 + $0x98] sm:$0xff]
    %v1195 = vld [vmem:[#allocation10 + $0xa0] sm:$0xff]
    %v1196 = vld [vmem:[#allocation10 + $0xa8] sm:$0xff]
    %v1197 = vld [vmem:[#allocation10 + $0xb0] sm:$0xff]
    %v1198 = vld [vmem:[#allocation10 + $0xb8] sm:$0xff]
    %v1199 = vld [vmem:[#allocation10 + $0xc0] sm:$0xff]
    %v1200 = vld [vmem:[#allocation10 + $0xc8] sm:$0xff]
    %v1201 = vld [vmem:[#allocation10 + $0xd0] sm:$0xff]
    %v1202 = vld [vmem:[#allocation10 + $0xd8] sm:$0xff]
    %v1203 = vld [vmem:[#allocation10 + $0xe0] sm:$0xff]
    %v1204 = vld [vmem:[#allocation10 + $0xe8] sm:$0xff]
    %v1205 = vld [vmem:[#allocation10 + $0xf0] sm:$0xff]
    %v1206 = vld [vmem:[#allocation10 + $0xf8] sm:$0xff]
    %v1207 = vld [vmem:[#allocation10 + $0x100] sm:$0xff]
    %v1208 = vld [vmem:[#allocation10 + $0x108] sm:$0xff]
    %v1209 = vld [vmem:[#allocation10 + $0x110] sm:$0xff]
    %v1210 = vld [vmem:[#allocation10 + $0x118] sm:$0xff]
    %v1211 = vld [vmem:[#allocation10 + $0x120] sm:$0xff]
    %v1212 = vld [vmem:[#allocation10 + $0x128] sm:$0xff]
    %v1213 = vld [vmem:[#allocation10 + $0x130] sm:$0xff]
    %v1214 = vld [vmem:[#allocation10 + $0x138] sm:$0xff]
    %v1215 = vld [vmem:[#allocation10 + $0x140] sm:$0xff]
    %v1216 = vld [vmem:[#allocation10 + $0x148] sm:$0xff]
    %v1217 = vld [vmem:[#allocation10 + $0x150] sm:$0xff]
    %v1218 = vld [vmem:[#allocation10 + $0x158] sm:$0xff]
    %v1219 = vld [vmem:[#allocation10 + $0x160] sm:$0xff]
    %v1220 = vld [vmem:[#allocation10 + $0x168] sm:$0xff]
    %v1221 = vld [vmem:[#allocation10 + $0x170] sm:$0xff]
    %v1222 = vld [vmem:[#allocation10 + $0x178] sm:$0xff]
    %v1223 = vld [vmem:[#allocation10 + $0x180] sm:$0xff]
    %v1224 = vld [vmem:[#allocation10 + $0x188] sm:$0xff]
    %v1225 = vld [vmem:[#allocation10 + $0x190] sm:$0xff]
    %v1226 = vld [vmem:[#allocation10 + $0x198] sm:$0xff]
    %v1227 = vld [vmem:[#allocation10 + $0x1a0] sm:$0xff]
    %v1228 = vld [vmem:[#allocation10 + $0x1a8] sm:$0xff]
    %v1229 = vld [vmem:[#allocation10 + $0x1b0] sm:$0xff]
    %v1230 = vld [vmem:[#allocation10 + $0x1b8] sm:$0xff]
    %v1231 = vld [vmem:[#allocation10 + $0x1c0] sm:$0xff]
    %v1232 = vld [vmem:[#allocation10 + $0x1c8] sm:$0xff]
    %v1233 = vld [vmem:[#allocation10 + $0x1d0] sm:$0xff]
    %v1234 = vld [vmem:[#allocation10 + $0x1d8] sm:$0xff]
    %v1235 = vld [vmem:[#allocation10 + $0x1e0] sm:$0xff]
    %v1236 = vld [vmem:[#allocation10 + $0x1e8] sm:$0xff]
    %v1237 = vld [vmem:[#allocation10 + $0x1f0] sm:$0xff]
    %v1238 = vld [vmem:[#allocation10 + $0x1f8] sm:$0xff]
    %v1239 = vld [vmem:[#allocation10 + $0x200] sm:$0xff]
    %v1240 = vld [vmem:[#allocation10 + $0x208] sm:$0xff]
    %v1241 = vld [vmem:[#allocation10 + $0x210] sm:$0xff]
    %v1242 = vld [vmem:[#allocation10 + $0x218] sm:$0xff]
    %v1243 = vld [vmem:[#allocation10 + $0x220] sm:$0xff]
    %v1244 = vld [vmem:[#allocation10 + $0x228] sm:$0xff]
    %v1245 = vld [vmem:[#allocation10 + $0x230] sm:$0xff]
    %v1246 = vld [vmem:[#allocation10 + $0x238] sm:$0xff]
    %v1247 = vld [vmem:[#allocation10 + $0x240] sm:$0xff]
    %v1248 = vld [vmem:[#allocation10 + $0x248] sm:$0xff]
    %v1249 = vld [vmem:[#allocation10 + $0x250] sm:$0xff]
    %v1250 = vld [vmem:[#allocation10 + $0x258] sm:$0xff]
    %v1251 = vld [vmem:[#allocation10 + $0x260] sm:$0xff]
    %v1252 = vld [vmem:[#allocation10 + $0x268] sm:$0xff]
    %v1253 = vld [vmem:[#allocation10 + $0x270] sm:$0xff]
    %v1254 = vld [vmem:[#allocation10 + $0x278] sm:$0xff]
    %v1255 = vld [vmem:[#allocation10 + $0x280] sm:$0xff]
    %v1256 = vld [vmem:[#allocation10 + $0x288] sm:$0xff]
    %v1257 = vld [vmem:[#allocation10 + $0x290] sm:$0xff]
    %v1258 = vld [vmem:[#allocation10 + $0x298] sm:$0xff]
    %v1259 = vld [vmem:[#allocation10 + $0x2a0] sm:$0xff]
    %v1260 = vld [vmem:[#allocation10 + $0x2a8] sm:$0xff]
    %v1261 = vld [vmem:[#allocation10 + $0x2b0] sm:$0xff]
    %v1262 = vld [vmem:[#allocation10 + $0x2b8] sm:$0xff]
    %v1263 = vld [vmem:[#allocation10 + $0x2c0] sm:$0xff]
    %v1264 = vld [vmem:[#allocation10 + $0x2c8] sm:$0xff]
    %v1265 = vld [vmem:[#allocation10 + $0x2d0] sm:$0xff]
    %v1266 = vld [vmem:[#allocation10 + $0x2d8] sm:$0xff]
    %v1267 = vld [vmem:[#allocation10 + $0x2e0] sm:$0xff]
    %v1268 = vld [vmem:[#allocation10 + $0x2e8] sm:$0xff]
    %v1269 = vld [vmem:[#allocation10 + $0x2f0] sm:$0xff]
    %v1270 = vld [vmem:[#allocation10 + $0x2f8] sm:$0xff]
    %v1271 = vld [vmem:[#allocation10 + $0x300] sm:$0xff]
    %v1272 = vld [vmem:[#allocation10 + $0x308] sm:$0xff]
    %v1273 = vld [vmem:[#allocation10 + $0x310] sm:$0xff]
    %v1274 = vld [vmem:[#allocation10 + $0x318] sm:$0xff]
    %v1275 = vld [vmem:[#allocation10 + $0x320] sm:$0xff]
    %v1276 = vld [vmem:[#allocation10 + $0x328] sm:$0xff]
    %v1277 = vld [vmem:[#allocation10 + $0x330] sm:$0xff]
    %v1278 = vld [vmem:[#allocation10 + $0x338] sm:$0xff]
    %v1279 = vld [vmem:[#allocation10 + $0x340] sm:$0xff]
    %v1280 = vld [vmem:[#allocation10 + $0x348] sm:$0xff]
    %v1281 = vld [vmem:[#allocation10 + $0x350] sm:$0xff]
    %v1282 = vld [vmem:[#allocation10 + $0x358] sm:$0xff]
    %v1283 = vld [vmem:[#allocation10 + $0x360] sm:$0xff]
    %v1284 = vld [vmem:[#allocation10 + $0x368] sm:$0xff]
    %v1285 = vld [vmem:[#allocation10 + $0x370] sm:$0xff]
    %v1286 = vld [vmem:[#allocation10 + $0x378] sm:$0xff]
    %v1287 = vld [vmem:[#allocation10 + $0x380] sm:$0xff]
    %v1288 = vld [vmem:[#allocation10 + $0x388] sm:$0xff]
    %v1289 = vld [vmem:[#allocation10 + $0x390] sm:$0xff]
    %v1290 = vld [vmem:[#allocation10 + $0x398] sm:$0xff]
    %v1291 = vld [vmem:[#allocation10 + $0x3a0] sm:$0xff]
    %v1292 = vld [vmem:[#allocation10 + $0x3a8] sm:$0xff]
    %v1293 = vld [vmem:[#allocation10 + $0x3b0] sm:$0xff]
    %v1294 = vld [vmem:[#allocation10 + $0x3b8] sm:$0xff]
    %v1295 = vld [vmem:[#allocation10 + $0x3c0] sm:$0xff]
    %v1296 = vld [vmem:[#allocation10 + $0x3c8] sm:$0xff]
    %v1297 = vld [vmem:[#allocation10 + $0x3d0] sm:$0xff]
    %v1298 = vld [vmem:[#allocation10 + $0x3d8] sm:$0xff]
    %v1299 = vld [vmem:[#allocation10 + $0x3e0] sm:$0xff]
    %v1300 = vld [vmem:[#allocation10 + $0x3e8] sm:$0xff]
    %v1301 = vld [vmem:[#allocation10 + $0x3f0] sm:$0xff]
    %v1302 = vld [vmem:[#allocation10 + $0x3f8] sm:$0xff]
    %v1303 = vld [vmem:[#allocation10 + $0x400] sm:$0xff]
    %v1304 = vld [vmem:[#allocation10 + $0x408] sm:$0xff]
    %v1305 = vld [vmem:[#allocation10 + $0x410] sm:$0xff]
    %v1306 = vld [vmem:[#allocation10 + $0x418] sm:$0xff]
    %v1307 = vld [vmem:[#allocation10 + $0x420] sm:$0xff]
    %v1308 = vld [vmem:[#allocation10 + $0x428] sm:$0xff]
    %v1309 = vld [vmem:[#allocation10 + $0x430] sm:$0xff]
    %v1310 = vld [vmem:[#allocation10 + $0x438] sm:$0xff]
    %v1311 = vld [vmem:[#allocation10 + $0x440] sm:$0xff]
    %v1312 = vld [vmem:[#allocation10 + $0x448] sm:$0xff]
    %v1313 = vld [vmem:[#allocation10 + $0x450] sm:$0xff]
    %v1314 = vld [vmem:[#allocation10 + $0x458] sm:$0xff]
    %v1315 = vld [vmem:[#allocation10 + $0x460] sm:$0xff]
    %v1316 = vld [vmem:[#allocation10 + $0x468] sm:$0xff]
    %v1317 = vld [vmem:[#allocation10 + $0x470] sm:$0xff]
    %v1318 = vld [vmem:[#allocation10 + $0x478] sm:$0xff]
    %v1319 = vld [vmem:[#allocation10 + $0x480] sm:$0xff]
    %v1320 = vld [vmem:[#allocation10 + $0x488] sm:$0xff]
    %v1321 = vld [vmem:[#allocation10 + $0x490] sm:$0xff]
    %v1322 = vld [vmem:[#allocation10 + $0x498] sm:$0xff]
    %v1323 = vld [vmem:[#allocation10 + $0x4a0] sm:$0xff]
    %v1324 = vld [vmem:[#allocation10 + $0x4a8] sm:$0xff]
    %v1325 = vld [vmem:[#allocation10 + $0x4b0] sm:$0xff]
    %v1326 = vld [vmem:[#allocation10 + $0x4b8] sm:$0xff]
    %v1327 = vld [vmem:[#allocation10 + $0x4c0] sm:$0xff]
    %v1328 = vld [vmem:[#allocation10 + $0x4c8] sm:$0xff]
    %v1329 = vld [vmem:[#allocation10 + $0x4d0] sm:$0xff]
    %v1330 = vld [vmem:[#allocation10 + $0x4d8] sm:$0xff]
    %v1331 = vld [vmem:[#allocation10 + $0x4e0] sm:$0xff]
    %v1332 = vld [vmem:[#allocation10 + $0x4e8] sm:$0xff]
    %v1333 = vld [vmem:[#allocation10 + $0x4f0] sm:$0xff]
    %v1334 = vld [vmem:[#allocation10 + $0x4f8] sm:$0xff]
    %v1335 = vld [vmem:[#allocation10 + $0x500] sm:$0xff]
    %v1336 = vld [vmem:[#allocation10 + $0x508] sm:$0xff]
    %v1337 = vld [vmem:[#allocation10 + $0x510] sm:$0xff]
    %v1338 = vld [vmem:[#allocation10 + $0x518] sm:$0xff]
    %v1339 = vld [vmem:[#allocation10 + $0x520] sm:$0xff]
    %v1340 = vld [vmem:[#allocation10 + $0x528] sm:$0xff]
    %v1341 = vld [vmem:[#allocation10 + $0x530] sm:$0xff]
    %v1342 = vld [vmem:[#allocation10 + $0x538] sm:$0xff]
    %v1343 = vld [vmem:[#allocation10 + $0x540] sm:$0xff]
    %v1344 = vld [vmem:[#allocation10 + $0x548] sm:$0xff]
    %v1345 = vld [vmem:[#allocation10 + $0x550] sm:$0xff]
    %v1346 = vld [vmem:[#allocation10 + $0x558] sm:$0xff]
    %v1347 = vld [vmem:[#allocation10 + $0x560] sm:$0xff]
    %v1348 = vld [vmem:[#allocation10 + $0x568] sm:$0xff]
    %v1349 = vld [vmem:[#allocation10 + $0x570] sm:$0xff]
    %v1350 = vld [vmem:[#allocation10 + $0x578] sm:$0xff]
    %v1351 = vld [vmem:[#allocation10 + $0x580] sm:$0xff]
    %v1352 = vld [vmem:[#allocation10 + $0x588] sm:$0xff]
    %v1353 = vld [vmem:[#allocation10 + $0x590] sm:$0xff]
    %v1354 = vld [vmem:[#allocation10 + $0x598] sm:$0xff]
    %v1355 = vld [vmem:[#allocation10 + $0x5a0] sm:$0xff]
    %v1356 = vld [vmem:[#allocation10 + $0x5a8] sm:$0xff]
    %v1357 = vld [vmem:[#allocation10 + $0x5b0] sm:$0xff]
    %v1358 = vld [vmem:[#allocation10 + $0x5b8] sm:$0xff]
    %v1359 = vld [vmem:[#allocation10 + $0x5c0] sm:$0xff]
    %v1360 = vld [vmem:[#allocation10 + $0x5c8] sm:$0xff]
    %v1361 = vld [vmem:[#allocation10 + $0x5d0] sm:$0xff]
    %v1362 = vld [vmem:[#allocation10 + $0x5d8] sm:$0xff]
    %v1363 = vld [vmem:[#allocation10 + $0x5e0] sm:$0xff]
    %v1364 = vld [vmem:[#allocation10 + $0x5e8] sm:$0xff]
    %v1365 = vld [vmem:[#allocation10 + $0x5f0] sm:$0xff]
    %v1366 = vld [vmem:[#allocation10 + $0x5f8] sm:$0xff]
    %v1367 = vld [vmem:[#allocation10 + $0x600] sm:$0xff]
    %v1368 = vld [vmem:[#allocation10 + $0x608] sm:$0xff]
    %v1369 = vld [vmem:[#allocation10 + $0x610] sm:$0xff]
    %v1370 = vld [vmem:[#allocation10 + $0x618] sm:$0xff]
    %v1371 = vld [vmem:[#allocation10 + $0x620] sm:$0xff]
    %v1372 = vld [vmem:[#allocation10 + $0x628] sm:$0xff]
    %v1373 = vld [vmem:[#allocation10 + $0x630] sm:$0xff]
    %v1374 = vld [vmem:[#allocation10 + $0x638] sm:$0xff]
    %v1375 = vld [vmem:[#allocation10 + $0x640] sm:$0xff]
    %v1376 = vld [vmem:[#allocation10 + $0x648] sm:$0xff]
    %v1377 = vld [vmem:[#allocation10 + $0x650] sm:$0xff]
    %v1378 = vld [vmem:[#allocation10 + $0x658] sm:$0xff]
    %v1379 = vld [vmem:[#allocation10 + $0x660] sm:$0xff]
    %v1380 = vld [vmem:[#allocation10 + $0x668] sm:$0xff]
    %v1381 = vld [vmem:[#allocation10 + $0x670] sm:$0xff]
    %v1382 = vld [vmem:[#allocation10 + $0x678] sm:$0xff]
    %v1383 = vld [vmem:[#allocation10 + $0x680] sm:$0xff]
    %v1384 = vld [vmem:[#allocation10 + $0x688] sm:$0xff]
    %v1385 = vld [vmem:[#allocation10 + $0x690] sm:$0xff]
    %v1386 = vld [vmem:[#allocation10 + $0x698] sm:$0xff]
    %v1387 = vld [vmem:[#allocation10 + $0x6a0] sm:$0xff]
    %v1388 = vld [vmem:[#allocation10 + $0x6a8] sm:$0xff]
    %v1389 = vld [vmem:[#allocation10 + $0x6b0] sm:$0xff]
    %v1390 = vld [vmem:[#allocation10 + $0x6b8] sm:$0xff]
    %v1391 = vld [vmem:[#allocation10 + $0x6c0] sm:$0xff]
    %v1392 = vld [vmem:[#allocation10 + $0x6c8] sm:$0xff]
    %v1393 = vld [vmem:[#allocation10 + $0x6d0] sm:$0xff]
    %v1394 = vld [vmem:[#allocation10 + $0x6d8] sm:$0xff]
    %v1395 = vld [vmem:[#allocation10 + $0x6e0] sm:$0xff]
    %v1396 = vld [vmem:[#allocation10 + $0x6e8] sm:$0xff]
    %v1397 = vld [vmem:[#allocation10 + $0x6f0] sm:$0xff]
    %v1398 = vld [vmem:[#allocation10 + $0x6f8] sm:$0xff]
    %v1399 = vld [vmem:[#allocation10 + $0x700] sm:$0xff]
    %v1400 = vld [vmem:[#allocation10 + $0x708] sm:$0xff]
    %v1401 = vld [vmem:[#allocation10 + $0x710] sm:$0xff]
    %v1402 = vld [vmem:[#allocation10 + $0x718] sm:$0xff]
    %v1403 = vld [vmem:[#allocation10 + $0x720] sm:$0xff]
    %v1404 = vld [vmem:[#allocation10 + $0x728] sm:$0xff]
    %v1405 = vld [vmem:[#allocation10 + $0x730] sm:$0xff]
    %v1406 = vld [vmem:[#allocation10 + $0x738] sm:$0xff]
    %v1407 = vld [vmem:[#allocation10 + $0x740] sm:$0xff]
    %v1408 = vld [vmem:[#allocation10 + $0x748] sm:$0xff]
    %v1409 = vld [vmem:[#allocation10 + $0x750] sm:$0xff]
    %v1410 = vld [vmem:[#allocation10 + $0x758] sm:$0xff]
    %v1411 = vld [vmem:[#allocation10 + $0x760] sm:$0xff]
    %v1412 = vld [vmem:[#allocation10 + $0x768] sm:$0xff]
    %v1413 = vld [vmem:[#allocation10 + $0x770] sm:$0xff]
    %v1414 = vld [vmem:[#allocation10 + $0x778] sm:$0xff]
    %v1415 = vld [vmem:[#allocation10 + $0x780] sm:$0xff]
    %v1416 = vld [vmem:[#allocation10 + $0x788] sm:$0xff]
    %v1417 = vld [vmem:[#allocation10 + $0x790] sm:$0xff]
    %v1418 = vld [vmem:[#allocation10 + $0x798] sm:$0xff]
    %v1419 = vld [vmem:[#allocation10 + $0x7a0] sm:$0xff]
    %v1420 = vld [vmem:[#allocation10 + $0x7a8] sm:$0xff]
    %v1421 = vld [vmem:[#allocation10 + $0x7b0] sm:$0xff]
    %v1422 = vld [vmem:[#allocation10 + $0x7b8] sm:$0xff]
    %v1423 = vld [vmem:[#allocation10 + $0x7c0] sm:$0xff]
    %v1424 = vld [vmem:[#allocation10 + $0x7c8] sm:$0xff]
    %v1425 = vld [vmem:[#allocation10 + $0x7d0] sm:$0xff]
    %v1426 = vld [vmem:[#allocation10 + $0x7d8] sm:$0xff]
    %v1427 = vld [vmem:[#allocation10 + $0x7e0] sm:$0xff]
    %v1428 = vld [vmem:[#allocation10 + $0x7e8] sm:$0xff]
    %v1429 = vld [vmem:[#allocation10 + $0x7f0] sm:$0xff]
    %v1430 = vld [vmem:[#allocation10 + $0x7f8] sm:$0xff]
    %v1431 = vld [vmem:[#allocation11] sm:$0x3]
    %v1433 = vlaneseq
    %v1434 = vshrl.u32 %v1433, 7
    %v1435 = vsub.s32 0, %v1434
    %v1436 = vrot.slane %v1431, %v1435
    %v1437 = vlaneseq
    %v1438 = vshrl.u32 %v1437, 7
    %v1439 = vsub.s32 1, %v1438
    %v1440 = vrot.slane %v1431, %v1439
    %1443 = vmatprep.subr.mxu0 %v1206
    %1444 = vmatpush1.msra.mxu0 %v1205
    %1445 = vmatprep.subr.mxu0 %v1204
    %1446 = vmatpush1.msra.mxu0 %v1203
    %1447 = vmatprep.subr.mxu0 %v1202
    %1448 = vmatpush1.msra.mxu0 %v1201
    %1449 = vmatprep.subr.mxu0 %v1200
    %1450 = vmatpush1.msra.mxu0 %v1199
    %1451 = vmatprep.subr.mxu0 %v1198
    %1452 = vmatpush1.msra.mxu0 %v1197
    %1453 = vmatprep.subr.mxu0 %v1196
    %1454 = vmatpush1.msra.mxu0 %v1195
    %1455 = vmatprep.subr.mxu0 %v1194
    %1456 = vmatpush1.msra.mxu0 %v1193
    %1457 = vmatprep.subr.mxu0 %v1192
    %1458 = vmatpush1.msra.mxu0 %v1191
    %1459 = vmatprep.subr.mxu0 %v1190
    %1460 = vmatpush1.msra.mxu0 %v1189
    %1461 = vmatprep.subr.mxu0 %v1188
    %1462 = vmatpush1.msra.mxu0 %v1187
    %1463 = vmatprep.subr.mxu0 %v1186
    %1464 = vmatpush1.msra.mxu0 %v1185
    %1465 = vmatprep.subr.mxu0 %v1184
    %1466 = vmatpush1.msra.mxu0 %v1183
    %1467 = vmatprep.subr.mxu0 %v1182
    %1468 = vmatpush1.msra.mxu0 %v1181
    %1469 = vmatprep.subr.mxu0 %v1180
    %1470 = vmatpush1.msra.mxu0 %v1179
    %1471 = vmatprep.subr.mxu0 %v1178
    %1472 = vmatpush1.msra.mxu0 %v1177
    %1473 = vmatprep.subr.mxu0 %v1176
    %1474 = vmatpush1.msra.mxu0 %v1175
    %1475 = vmatprep.subr.mxu0 %v1238
    %1476 = vmatpush2.msra.mxu0 %v1237
    %1477 = vmatprep.subr.mxu0 %v1236
    %1478 = vmatpush2.msra.mxu0 %v1235
    %1479 = vmatprep.subr.mxu0 %v1234
    %1480 = vmatpush2.msra.mxu0 %v1233
    %1481 = vmatprep.subr.mxu0 %v1232
    %1482 = vmatpush2.msra.mxu0 %v1231
    %1483 = vmatprep.subr.mxu0 %v1230
    %1484 = vmatpush2.msra.mxu0 %v1229
    %1485 = vmatprep.subr.mxu0 %v1228
    %1486 = vmatpush2.msra.mxu0 %v1227
    %1487 = vmatprep.subr.mxu0 %v1226
    %1488 = vmatpush2.msra.mxu0 %v1225
    %1489 = vmatprep.subr.mxu0 %v1224
    %1490 = vmatpush2.msra.mxu0 %v1223
    %1491 = vmatprep.subr.mxu0 %v1222
    %1492 = vmatpush2.msra.mxu0 %v1221
    %1493 = vmatprep.subr.mxu0 %v1220
    %1494 = vmatpush2.msra.mxu0 %v1219
    %1495 = vmatprep.subr.mxu0 %v1218
    %1496 = vmatpush2.msra.mxu0 %v1217
    %1497 = vmatprep.subr.mxu0 %v1216
    %1498 = vmatpush2.msra.mxu0 %v1215
    %1499 = vmatprep.subr.mxu0 %v1214
    %1500 = vmatpush2.msra.mxu0 %v1213
    %1501 = vmatprep.subr.mxu0 %v1212
    %1502 = vmatpush2.msra.mxu0 %v1211
    %1503 = vmatprep.subr.mxu0 %v1210
    %1504 = vmatpush2.msra.mxu0 %v1209
    %1505 = vmatprep.subr.mxu0 %v1208
    %1506 = vmatpush2.msra.mxu0 %v1207
    %1507 = vmatprep.mubr.f32.mxu0 %v125
    %1508 = vmatmul.mubr.f32.gmra.mxu0 %v124
    %v1509 = vpop.f32.mrf.mxu0
    %v1510 = vadd.f32 %v1436, %v1509
    %v1511 = vpop.f32.mrf.mxu0
    %v1512 = vadd.f32 %v1440, %v1511
    %1513 = vmatprep.mubr.f32.mxu0 %v133
    %1514 = vmatmul.mubr.f32.gmra.mxu0 %v132
    %v1515 = vpop.f32.mrf.mxu0
    %v1516 = vadd.f32 %v1436, %v1515
    %v1517 = vpop.f32.mrf.mxu0
    %v1518 = vadd.f32 %v1440, %v1517
    %1519 = vdwg.mxu0
    %1520 = vmatprep.subr.mxu0 %v1270
    %1521 = vmatpush1.msra.mxu0 %v1269
    %1522 = vmatprep.subr.mxu0 %v1268
    %1523 = vmatpush1.msra.mxu0 %v1267
    %1524 = vmatprep.subr.mxu0 %v1266
    %1525 = vmatpush1.msra.mxu0 %v1265
    %1526 = vmatprep.subr.mxu0 %v1264
    %1527 = vmatpush1.msra.mxu0 %v1263
    %1528 = vmatprep.subr.mxu0 %v1262
    %1529 = vmatpush1.msra.mxu0 %v1261
    %1530 = vmatprep.subr.mxu0 %v1260
    %1531 = vmatpush1.msra.mxu0 %v1259
    %1532 = vmatprep.subr.mxu0 %v1258
    %1533 = vmatpush1.msra.mxu0 %v1257
    %1534 = vmatprep.subr.mxu0 %v1256
    %1535 = vmatpush1.msra.mxu0 %v1255
    %1536 = vmatprep.subr.mxu0 %v1254
    %1537 = vmatpush1.msra.mxu0 %v1253
    %1538 = vmatprep.subr.mxu0 %v1252
    %1539 = vmatpush1.msra.mxu0 %v1251
    %1540 = vmatprep.subr.mxu0 %v1250
    %1541 = vmatpush1.msra.mxu0 %v1249
    %1542 = vmatprep.subr.mxu0 %v1248
    %1543 = vmatpush1.msra.mxu0 %v1247
    %1544 = vmatprep.subr.mxu0 %v1246
    %1545 = vmatpush1.msra.mxu0 %v1245
    %1546 = vmatprep.subr.mxu0 %v1244
    %1547 = vmatpush1.msra.mxu0 %v1243
    %1548 = vmatprep.subr.mxu0 %v1242
    %1549 = vmatpush1.msra.mxu0 %v1241
    %1550 = vmatprep.subr.mxu0 %v1240
    %1551 = vmatpush1.msra.mxu0 %v1239
    %1552 = vmatprep.subr.mxu0 %v1302
    %1553 = vmatpush2.msra.mxu0 %v1301
    %1554 = vmatprep.subr.mxu0 %v1300
    %1555 = vmatpush2.msra.mxu0 %v1299
    %1556 = vmatprep.subr.mxu0 %v1298
    %1557 = vmatpush2.msra.mxu0 %v1297
    %1558 = vmatprep.subr.mxu0 %v1296
    %1559 = vmatpush2.msra.mxu0 %v1295
    %1560 = vmatprep.subr.mxu0 %v1294
    %1561 = vmatpush2.msra.mxu0 %v1293
    %1562 = vmatprep.subr.mxu0 %v1292
    %1563 = vmatpush2.msra.mxu0 %v1291
    %1564 = vmatprep.subr.mxu0 %v1290
    %1565 = vmatpush2.msra.mxu0 %v1289
    %1566 = vmatprep.subr.mxu0 %v1288
    %1567 = vmatpush2.msra.mxu0 %v1287
    %1568 = vmatprep.subr.mxu0 %v1286
    %1569 = vmatpush2.msra.mxu0 %v1285
    %1570 = vmatprep.subr.mxu0 %v1284
    %1571 = vmatpush2.msra.mxu0 %v1283
    %1572 = vmatprep.subr.mxu0 %v1282
    %1573 = vmatpush2.msra.mxu0 %v1281
    %1574 = vmatprep.subr.mxu0 %v1280
    %1575 = vmatpush2.msra.mxu0 %v1279
    %1576 = vmatprep.subr.mxu0 %v1278
    %1577 = vmatpush2.msra.mxu0 %v1277
    %1578 = vmatprep.subr.mxu0 %v1276
    %1579 = vmatpush2.msra.mxu0 %v1275
    %1580 = vmatprep.subr.mxu0 %v1274
    %1581 = vmatpush2.msra.mxu0 %v1273
    %1582 = vmatprep.subr.mxu0 %v1272
    %1583 = vmatpush2.msra.mxu0 %v1271
    %1584 = vmatprep.mubr.f32.mxu0 %v127
    %1585 = vmatmul.mubr.f32.gmra.mxu0 %v126
    %v1586 = vpop.f32.mrf.mxu0
    %v1587 = vadd.f32 %v1510, %v1586
    %v1588 = vpop.f32.mrf.mxu0
    %v1589 = vadd.f32 %v1512, %v1588
    %1590 = vmatprep.mubr.f32.mxu0 %v135
    %1591 = vmatmul.mubr.f32.gmra.mxu0 %v134
    %v1592 = vpop.f32.mrf.mxu0
    %v1593 = vadd.f32 %v1516, %v1592
    %v1594 = vpop.f32.mrf.mxu0
    %v1595 = vadd.f32 %v1518, %v1594
    %1596 = vdwg.mxu0
    %1597 = vmatprep.subr.mxu0 %v1334
    %1598 = vmatpush1.msra.mxu0 %v1333
    %1599 = vmatprep.subr.mxu0 %v1332
    %1600 = vmatpush1.msra.mxu0 %v1331
    %1601 = vmatprep.subr.mxu0 %v1330
    %1602 = vmatpush1.msra.mxu0 %v1329
    %1603 = vmatprep.subr.mxu0 %v1328
    %1604 = vmatpush1.msra.mxu0 %v1327
    %1605 = vmatprep.subr.mxu0 %v1326
    %1606 = vmatpush1.msra.mxu0 %v1325
    %1607 = vmatprep.subr.mxu0 %v1324
    %1608 = vmatpush1.msra.mxu0 %v1323
    %1609 = vmatprep.subr.mxu0 %v1322
    %1610 = vmatpush1.msra.mxu0 %v1321
    %1611 = vmatprep.subr.mxu0 %v1320
    %1612 = vmatpush1.msra.mxu0 %v1319
    %1613 = vmatprep.subr.mxu0 %v1318
    %1614 = vmatpush1.msra.mxu0 %v1317
    %1615 = vmatprep.subr.mxu0 %v1316
    %1616 = vmatpush1.msra.mxu0 %v1315
    %1617 = vmatprep.subr.mxu0 %v1314
    %1618 = vmatpush1.msra.mxu0 %v1313
    %1619 = vmatprep.subr.mxu0 %v1312
    %1620 = vmatpush1.msra.mxu0 %v1311
    %1621 = vmatprep.subr.mxu0 %v1310
    %1622 = vmatpush1.msra.mxu0 %v1309
    %1623 = vmatprep.subr.mxu0 %v1308
    %1624 = vmatpush1.msra.mxu0 %v1307
    %1625 = vmatprep.subr.mxu0 %v1306
    %1626 = vmatpush1.msra.mxu0 %v1305
    %1627 = vmatprep.subr.mxu0 %v1304
    %1628 = vmatpush1.msra.mxu0 %v1303
    %1629 = vmatprep.subr.mxu0 %v1366
    %1630 = vmatpush2.msra.mxu0 %v1365
    %1631 = vmatprep.subr.mxu0 %v1364
    %1632 = vmatpush2.msra.mxu0 %v1363
    %1633 = vmatprep.subr.mxu0 %v1362
    %1634 = vmatpush2.msra.mxu0 %v1361
    %1635 = vmatprep.subr.mxu0 %v1360
    %1636 = vmatpush2.msra.mxu0 %v1359
    %1637 = vmatprep.subr.mxu0 %v1358
    %1638 = vmatpush2.msra.mxu0 %v1357
    %1639 = vmatprep.subr.mxu0 %v1356
    %1640 = vmatpush2.msra.mxu0 %v1355
    %1641 = vmatprep.subr.mxu0 %v1354
    %1642 = vmatpush2.msra.mxu0 %v1353
    %1643 = vmatprep.subr.mxu0 %v1352
    %1644 = vmatpush2.msra.mxu0 %v1351
    %1645 = vmatprep.subr.mxu0 %v1350
    %1646 = vmatpush2.msra.mxu0 %v1349
    %1647 = vmatprep.subr.mxu0 %v1348
    %1648 = vmatpush2.msra.mxu0 %v1347
    %1649 = vmatprep.subr.mxu0 %v1346
    %1650 = vmatpush2.msra.mxu0 %v1345
    %1651 = vmatprep.subr.mxu0 %v1344
    %1652 = vmatpush2.msra.mxu0 %v1343
    %1653 = vmatprep.subr.mxu0 %v1342
    %1654 = vmatpush2.msra.mxu0 %v1341
    %1655 = vmatprep.subr.mxu0 %v1340
    %1656 = vmatpush2.msra.mxu0 %v1339
    %1657 = vmatprep.subr.mxu0 %v1338
    %1658 = vmatpush2.msra.mxu0 %v1337
    %1659 = vmatprep.subr.mxu0 %v1336
    %1660 = vmatpush2.msra.mxu0 %v1335
    %1661 = vmatprep.mubr.f32.mxu0 %v129
    %1662 = vmatmul.mubr.f32.gmra.mxu0 %v128
    %v1663 = vpop.f32.mrf.mxu0
    %v1664 = vadd.f32 %v1587, %v1663
    %v1665 = vpop.f32.mrf.mxu0
    %v1666 = vadd.f32 %v1589, %v1665
    %1667 = vmatprep.mubr.f32.mxu0 %v137
    %1668 = vmatmul.mubr.f32.gmra.mxu0 %v136
    %v1669 = vpop.f32.mrf.mxu0
    %v1670 = vadd.f32 %v1593, %v1669
    %v1671 = vpop.f32.mrf.mxu0
    %v1672 = vadd.f32 %v1595, %v1671
    %1673 = vdwg.mxu0
    %1674 = vmatprep.subr.mxu0 %v1398
    %1675 = vmatpush1.msra.mxu0 %v1397
    %1676 = vmatprep.subr.mxu0 %v1396
    %1677 = vmatpush1.msra.mxu0 %v1395
    %1678 = vmatprep.subr.mxu0 %v1394
    %1679 = vmatpush1.msra.mxu0 %v1393
    %1680 = vmatprep.subr.mxu0 %v1392
    %1681 = vmatpush1.msra.mxu0 %v1391
    %1682 = vmatprep.subr.mxu0 %v1390
    %1683 = vmatpush1.msra.mxu0 %v1389
    %1684 = vmatprep.subr.mxu0 %v1388
    %1685 = vmatpush1.msra.mxu0 %v1387
    %1686 = vmatprep.subr.mxu0 %v1386
    %1687 = vmatpush1.msra.mxu0 %v1385
    %1688 = vmatprep.subr.mxu0 %v1384
    %1689 = vmatpush1.msra.mxu0 %v1383
    %1690 = vmatprep.subr.mxu0 %v1382
    %1691 = vmatpush1.msra.mxu0 %v1381
    %1692 = vmatprep.subr.mxu0 %v1380
    %1693 = vmatpush1.msra.mxu0 %v1379
    %1694 = vmatprep.subr.mxu0 %v1378
    %1695 = vmatpush1.msra.mxu0 %v1377
    %1696 = vmatprep.subr.mxu0 %v1376
    %1697 = vmatpush1.msra.mxu0 %v1375
    %1698 = vmatprep.subr.mxu0 %v1374
    %1699 = vmatpush1.msra.mxu0 %v1373
    %1700 = vmatprep.subr.mxu0 %v1372
    %1701 = vmatpush1.msra.mxu0 %v1371
    %1702 = vmatprep.subr.mxu0 %v1370
    %1703 = vmatpush1.msra.mxu0 %v1369
    %1704 = vmatprep.subr.mxu0 %v1368
    %1705 = vmatpush1.msra.mxu0 %v1367
    %1706 = vmatprep.subr.mxu0 %v1430
    %1707 = vmatpush2.msra.mxu0 %v1429
    %1708 = vmatprep.subr.mxu0 %v1428
    %1709 = vmatpush2.msra.mxu0 %v1427
    %1710 = vmatprep.subr.mxu0 %v1426
    %1711 = vmatpush2.msra.mxu0 %v1425
    %1712 = vmatprep.subr.mxu0 %v1424
    %1713 = vmatpush2.msra.mxu0 %v1423
    %1714 = vmatprep.subr.mxu0 %v1422
    %1715 = vmatpush2.msra.mxu0 %v1421
    %1716 = vmatprep.subr.mxu0 %v1420
    %1717 = vmatpush2.msra.mxu0 %v1419
    %1718 = vmatprep.subr.mxu0 %v1418
    %1719 = vmatpush2.msra.mxu0 %v1417
    %1720 = vmatprep.subr.mxu0 %v1416
    %1721 = vmatpush2.msra.mxu0 %v1415
    %1722 = vmatprep.subr.mxu0 %v1414
    %1723 = vmatpush2.msra.mxu0 %v1413
    %1724 = vmatprep.subr.mxu0 %v1412
    %1725 = vmatpush2.msra.mxu0 %v1411
    %1726 = vmatprep.subr.mxu0 %v1410
    %1727 = vmatpush2.msra.mxu0 %v1409
    %1728 = vmatprep.subr.mxu0 %v1408
    %1729 = vmatpush2.msra.mxu0 %v1407
    %1730 = vmatprep.subr.mxu0 %v1406
    %1731 = vmatpush2.msra.mxu0 %v1405
    %1732 = vmatprep.subr.mxu0 %v1404
    %1733 = vmatpush2.msra.mxu0 %v1403
    %1734 = vmatprep.subr.mxu0 %v1402
    %1735 = vmatpush2.msra.mxu0 %v1401
    %1736 = vmatprep.subr.mxu0 %v1400
    %1737 = vmatpush2.msra.mxu0 %v1399
    %1738 = vmatprep.mubr.f32.mxu0 %v131
    %1739 = vmatmul.mubr.f32.gmra.mxu0 %v130
    %v1740 = vpop.f32.mrf.mxu0
    %v1741 = vadd.f32 %v1664, %v1740
    %v1742 = vpop.f32.mrf.mxu0
    %v1743 = vadd.f32 %v1666, %v1742
    %1744 = vmatprep.mubr.f32.mxu0 %v139
    %1745 = vmatmul.mubr.f32.gmra.mxu0 %v138
    %v1746 = vpop.f32.mrf.mxu0
    %v1747 = vadd.f32 %v1670, %v1746
    %v1748 = vpop.f32.mrf.mxu0
    %v1749 = vadd.f32 %v1672, %v1748
    %1750 = vdwg.mxu0
    %v1751 = vmax.f32 %v1741, 0.0
    %v1752 = vmax.f32 %v1743, 0.0
    %v1753 = vmax.f32 %v1747, 0.0
    %v1754 = vmax.f32 %v1749, 0.0
    %v1755 = vld [vmem:[#allocation13] sm:$0xff]
    %v1756 = vld [vmem:[#allocation13 + $0x8] sm:$0xff]
    %v1757 = vld [vmem:[#allocation13 + $0x10] sm:$0xff]
    %v1758 = vld [vmem:[#allocation13 + $0x18] sm:$0xff]
    %v1759 = vld [vmem:[#allocation13 + $0x20] sm:$0xff]
    %v1760 = vld [vmem:[#allocation13 + $0x28] sm:$0xff]
    %v1761 = vld [vmem:[#allocation13 + $0x30] sm:$0xff]
    %v1762 = vld [vmem:[#allocation13 + $0x38] sm:$0xff]
    %v1763 = vld [vmem:[#allocation13 + $0x40] sm:$0xff]
    %v1764 = vld [vmem:[#allocation13 + $0x48] sm:$0xff]
    %v1765 = vld [vmem:[#allocation13 + $0x50] sm:$0xff]
    %v1766 = vld [vmem:[#allocation13 + $0x58] sm:$0xff]
    %v1767 = vld [vmem:[#allocation13 + $0x60] sm:$0xff]
    %v1768 = vld [vmem:[#allocation13 + $0x68] sm:$0xff]
    %v1769 = vld [vmem:[#allocation13 + $0x70] sm:$0xff]
    %v1770 = vld [vmem:[#allocation13 + $0x78] sm:$0xff]
    %v1771 = vld [vmem:[#allocation13 + $0x80] sm:$0xff]
    %v1772 = vld [vmem:[#allocation13 + $0x88] sm:$0xff]
    %v1773 = vld [vmem:[#allocation13 + $0x90] sm:$0xff]
    %v1774 = vld [vmem:[#allocation13 + $0x98] sm:$0xff]
    %v1775 = vld [vmem:[#allocation13 + $0xa0] sm:$0xff]
    %v1776 = vld [vmem:[#allocation13 + $0xa8] sm:$0xff]
    %v1777 = vld [vmem:[#allocation13 + $0xb0] sm:$0xff]
    %v1778 = vld [vmem:[#allocation13 + $0xb8] sm:$0xff]
    %v1779 = vld [vmem:[#allocation13 + $0xc0] sm:$0xff]
    %v1780 = vld [vmem:[#allocation13 + $0xc8] sm:$0xff]
    %v1781 = vld [vmem:[#allocation13 + $0xd0] sm:$0xff]
    %v1782 = vld [vmem:[#allocation13 + $0xd8] sm:$0xff]
    %v1783 = vld [vmem:[#allocation13 + $0xe0] sm:$0xff]
    %v1784 = vld [vmem:[#allocation13 + $0xe8] sm:$0xff]
    %v1785 = vld [vmem:[#allocation13 + $0xf0] sm:$0xff]
    %v1786 = vld [vmem:[#allocation13 + $0xf8] sm:$0xff]
    %v1787 = vld [vmem:[#allocation13 + $0x100] sm:$0xff]
    %v1788 = vld [vmem:[#allocation13 + $0x108] sm:$0xff]
    %v1789 = vld [vmem:[#allocation13 + $0x110] sm:$0xff]
    %v1790 = vld [vmem:[#allocation13 + $0x118] sm:$0xff]
    %v1791 = vld [vmem:[#allocation13 + $0x120] sm:$0xff]
    %v1792 = vld [vmem:[#allocation13 + $0x128] sm:$0xff]
    %v1793 = vld [vmem:[#allocation13 + $0x130] sm:$0xff]
    %v1794 = vld [vmem:[#allocation13 + $0x138] sm:$0xff]
    %v1795 = vld [vmem:[#allocation13 + $0x140] sm:$0xff]
    %v1796 = vld [vmem:[#allocation13 + $0x148] sm:$0xff]
    %v1797 = vld [vmem:[#allocation13 + $0x150] sm:$0xff]
    %v1798 = vld [vmem:[#allocation13 + $0x158] sm:$0xff]
    %v1799 = vld [vmem:[#allocation13 + $0x160] sm:$0xff]
    %v1800 = vld [vmem:[#allocation13 + $0x168] sm:$0xff]
    %v1801 = vld [vmem:[#allocation13 + $0x170] sm:$0xff]
    %v1802 = vld [vmem:[#allocation13 + $0x178] sm:$0xff]
    %v1803 = vld [vmem:[#allocation13 + $0x180] sm:$0xff]
    %v1804 = vld [vmem:[#allocation13 + $0x188] sm:$0xff]
    %v1805 = vld [vmem:[#allocation13 + $0x190] sm:$0xff]
    %v1806 = vld [vmem:[#allocation13 + $0x198] sm:$0xff]
    %v1807 = vld [vmem:[#allocation13 + $0x1a0] sm:$0xff]
    %v1808 = vld [vmem:[#allocation13 + $0x1a8] sm:$0xff]
    %v1809 = vld [vmem:[#allocation13 + $0x1b0] sm:$0xff]
    %v1810 = vld [vmem:[#allocation13 + $0x1b8] sm:$0xff]
    %v1811 = vld [vmem:[#allocation13 + $0x1c0] sm:$0xff]
    %v1812 = vld [vmem:[#allocation13 + $0x1c8] sm:$0xff]
    %v1813 = vld [vmem:[#allocation13 + $0x1d0] sm:$0xff]
    %v1814 = vld [vmem:[#allocation13 + $0x1d8] sm:$0xff]
    %v1815 = vld [vmem:[#allocation13 + $0x1e0] sm:$0xff]
    %v1816 = vld [vmem:[#allocation13 + $0x1e8] sm:$0xff]
    %v1817 = vld [vmem:[#allocation13 + $0x1f0] sm:$0xff]
    %v1818 = vld [vmem:[#allocation13 + $0x1f8] sm:$0xff]
    %v1819 = vld [vmem:[#allocation13 + $0x200] sm:$0xff]
    %v1820 = vld [vmem:[#allocation13 + $0x208] sm:$0xff]
    %v1821 = vld [vmem:[#allocation13 + $0x210] sm:$0xff]
    %v1822 = vld [vmem:[#allocation13 + $0x218] sm:$0xff]
    %v1823 = vld [vmem:[#allocation13 + $0x220] sm:$0xff]
    %v1824 = vld [vmem:[#allocation13 + $0x228] sm:$0xff]
    %v1825 = vld [vmem:[#allocation13 + $0x230] sm:$0xff]
    %v1826 = vld [vmem:[#allocation13 + $0x238] sm:$0xff]
    %v1827 = vld [vmem:[#allocation13 + $0x240] sm:$0xff]
    %v1828 = vld [vmem:[#allocation13 + $0x248] sm:$0xff]
    %v1829 = vld [vmem:[#allocation13 + $0x250] sm:$0xff]
    %v1830 = vld [vmem:[#allocation13 + $0x258] sm:$0xff]
    %v1831 = vld [vmem:[#allocation13 + $0x260] sm:$0xff]
    %v1832 = vld [vmem:[#allocation13 + $0x268] sm:$0xff]
    %v1833 = vld [vmem:[#allocation13 + $0x270] sm:$0xff]
    %v1834 = vld [vmem:[#allocation13 + $0x278] sm:$0xff]
    %v1835 = vld [vmem:[#allocation13 + $0x280] sm:$0xff]
    %v1836 = vld [vmem:[#allocation13 + $0x288] sm:$0xff]
    %v1837 = vld [vmem:[#allocation13 + $0x290] sm:$0xff]
    %v1838 = vld [vmem:[#allocation13 + $0x298] sm:$0xff]
    %v1839 = vld [vmem:[#allocation13 + $0x2a0] sm:$0xff]
    %v1840 = vld [vmem:[#allocation13 + $0x2a8] sm:$0xff]
    %v1841 = vld [vmem:[#allocation13 + $0x2b0] sm:$0xff]
    %v1842 = vld [vmem:[#allocation13 + $0x2b8] sm:$0xff]
    %v1843 = vld [vmem:[#allocation13 + $0x2c0] sm:$0xff]
    %v1844 = vld [vmem:[#allocation13 + $0x2c8] sm:$0xff]
    %v1845 = vld [vmem:[#allocation13 + $0x2d0] sm:$0xff]
    %v1846 = vld [vmem:[#allocation13 + $0x2d8] sm:$0xff]
    %v1847 = vld [vmem:[#allocation13 + $0x2e0] sm:$0xff]
    %v1848 = vld [vmem:[#allocation13 + $0x2e8] sm:$0xff]
    %v1849 = vld [vmem:[#allocation13 + $0x2f0] sm:$0xff]
    %v1850 = vld [vmem:[#allocation13 + $0x2f8] sm:$0xff]
    %v1851 = vld [vmem:[#allocation13 + $0x300] sm:$0xff]
    %v1852 = vld [vmem:[#allocation13 + $0x308] sm:$0xff]
    %v1853 = vld [vmem:[#allocation13 + $0x310] sm:$0xff]
    %v1854 = vld [vmem:[#allocation13 + $0x318] sm:$0xff]
    %v1855 = vld [vmem:[#allocation13 + $0x320] sm:$0xff]
    %v1856 = vld [vmem:[#allocation13 + $0x328] sm:$0xff]
    %v1857 = vld [vmem:[#allocation13 + $0x330] sm:$0xff]
    %v1858 = vld [vmem:[#allocation13 + $0x338] sm:$0xff]
    %v1859 = vld [vmem:[#allocation13 + $0x340] sm:$0xff]
    %v1860 = vld [vmem:[#allocation13 + $0x348] sm:$0xff]
    %v1861 = vld [vmem:[#allocation13 + $0x350] sm:$0xff]
    %v1862 = vld [vmem:[#allocation13 + $0x358] sm:$0xff]
    %v1863 = vld [vmem:[#allocation13 + $0x360] sm:$0xff]
    %v1864 = vld [vmem:[#allocation13 + $0x368] sm:$0xff]
    %v1865 = vld [vmem:[#allocation13 + $0x370] sm:$0xff]
    %v1866 = vld [vmem:[#allocation13 + $0x378] sm:$0xff]
    %v1867 = vld [vmem:[#allocation13 + $0x380] sm:$0xff]
    %v1868 = vld [vmem:[#allocation13 + $0x388] sm:$0xff]
    %v1869 = vld [vmem:[#allocation13 + $0x390] sm:$0xff]
    %v1870 = vld [vmem:[#allocation13 + $0x398] sm:$0xff]
    %v1871 = vld [vmem:[#allocation13 + $0x3a0] sm:$0xff]
    %v1872 = vld [vmem:[#allocation13 + $0x3a8] sm:$0xff]
    %v1873 = vld [vmem:[#allocation13 + $0x3b0] sm:$0xff]
    %v1874 = vld [vmem:[#allocation13 + $0x3b8] sm:$0xff]
    %v1875 = vld [vmem:[#allocation13 + $0x3c0] sm:$0xff]
    %v1876 = vld [vmem:[#allocation13 + $0x3c8] sm:$0xff]
    %v1877 = vld [vmem:[#allocation13 + $0x3d0] sm:$0xff]
    %v1878 = vld [vmem:[#allocation13 + $0x3d8] sm:$0xff]
    %v1879 = vld [vmem:[#allocation13 + $0x3e0] sm:$0xff]
    %v1880 = vld [vmem:[#allocation13 + $0x3e8] sm:$0xff]
    %v1881 = vld [vmem:[#allocation13 + $0x3f0] sm:$0xff]
    %v1882 = vld [vmem:[#allocation13 + $0x3f8] sm:$0xff]
    %v1883 = vld [vmem:[#allocation13 + $0x400] sm:$0xff]
    %v1884 = vld [vmem:[#allocation13 + $0x408] sm:$0xff]
    %v1885 = vld [vmem:[#allocation13 + $0x410] sm:$0xff]
    %v1886 = vld [vmem:[#allocation13 + $0x418] sm:$0xff]
    %v1887 = vld [vmem:[#allocation13 + $0x420] sm:$0xff]
    %v1888 = vld [vmem:[#allocation13 + $0x428] sm:$0xff]
    %v1889 = vld [vmem:[#allocation13 + $0x430] sm:$0xff]
    %v1890 = vld [vmem:[#allocation13 + $0x438] sm:$0xff]
    %v1891 = vld [vmem:[#allocation13 + $0x440] sm:$0xff]
    %v1892 = vld [vmem:[#allocation13 + $0x448] sm:$0xff]
    %v1893 = vld [vmem:[#allocation13 + $0x450] sm:$0xff]
    %v1894 = vld [vmem:[#allocation13 + $0x458] sm:$0xff]
    %v1895 = vld [vmem:[#allocation13 + $0x460] sm:$0xff]
    %v1896 = vld [vmem:[#allocation13 + $0x468] sm:$0xff]
    %v1897 = vld [vmem:[#allocation13 + $0x470] sm:$0xff]
    %v1898 = vld [vmem:[#allocation13 + $0x478] sm:$0xff]
    %v1899 = vld [vmem:[#allocation13 + $0x480] sm:$0xff]
    %v1900 = vld [vmem:[#allocation13 + $0x488] sm:$0xff]
    %v1901 = vld [vmem:[#allocation13 + $0x490] sm:$0xff]
    %v1902 = vld [vmem:[#allocation13 + $0x498] sm:$0xff]
    %v1903 = vld [vmem:[#allocation13 + $0x4a0] sm:$0xff]
    %v1904 = vld [vmem:[#allocation13 + $0x4a8] sm:$0xff]
    %v1905 = vld [vmem:[#allocation13 + $0x4b0] sm:$0xff]
    %v1906 = vld [vmem:[#allocation13 + $0x4b8] sm:$0xff]
    %v1907 = vld [vmem:[#allocation13 + $0x4c0] sm:$0xff]
    %v1908 = vld [vmem:[#allocation13 + $0x4c8] sm:$0xff]
    %v1909 = vld [vmem:[#allocation13 + $0x4d0] sm:$0xff]
    %v1910 = vld [vmem:[#allocation13 + $0x4d8] sm:$0xff]
    %v1911 = vld [vmem:[#allocation13 + $0x4e0] sm:$0xff]
    %v1912 = vld [vmem:[#allocation13 + $0x4e8] sm:$0xff]
    %v1913 = vld [vmem:[#allocation13 + $0x4f0] sm:$0xff]
    %v1914 = vld [vmem:[#allocation13 + $0x4f8] sm:$0xff]
    %v1915 = vld [vmem:[#allocation13 + $0x500] sm:$0xff]
    %v1916 = vld [vmem:[#allocation13 + $0x508] sm:$0xff]
    %v1917 = vld [vmem:[#allocation13 + $0x510] sm:$0xff]
    %v1918 = vld [vmem:[#allocation13 + $0x518] sm:$0xff]
    %v1919 = vld [vmem:[#allocation13 + $0x520] sm:$0xff]
    %v1920 = vld [vmem:[#allocation13 + $0x528] sm:$0xff]
    %v1921 = vld [vmem:[#allocation13 + $0x530] sm:$0xff]
    %v1922 = vld [vmem:[#allocation13 + $0x538] sm:$0xff]
    %v1923 = vld [vmem:[#allocation13 + $0x540] sm:$0xff]
    %v1924 = vld [vmem:[#allocation13 + $0x548] sm:$0xff]
    %v1925 = vld [vmem:[#allocation13 + $0x550] sm:$0xff]
    %v1926 = vld [vmem:[#allocation13 + $0x558] sm:$0xff]
    %v1927 = vld [vmem:[#allocation13 + $0x560] sm:$0xff]
    %v1928 = vld [vmem:[#allocation13 + $0x568] sm:$0xff]
    %v1929 = vld [vmem:[#allocation13 + $0x570] sm:$0xff]
    %v1930 = vld [vmem:[#allocation13 + $0x578] sm:$0xff]
    %v1931 = vld [vmem:[#allocation13 + $0x580] sm:$0xff]
    %v1932 = vld [vmem:[#allocation13 + $0x588] sm:$0xff]
    %v1933 = vld [vmem:[#allocation13 + $0x590] sm:$0xff]
    %v1934 = vld [vmem:[#allocation13 + $0x598] sm:$0xff]
    %v1935 = vld [vmem:[#allocation13 + $0x5a0] sm:$0xff]
    %v1936 = vld [vmem:[#allocation13 + $0x5a8] sm:$0xff]
    %v1937 = vld [vmem:[#allocation13 + $0x5b0] sm:$0xff]
    %v1938 = vld [vmem:[#allocation13 + $0x5b8] sm:$0xff]
    %v1939 = vld [vmem:[#allocation13 + $0x5c0] sm:$0xff]
    %v1940 = vld [vmem:[#allocation13 + $0x5c8] sm:$0xff]
    %v1941 = vld [vmem:[#allocation13 + $0x5d0] sm:$0xff]
    %v1942 = vld [vmem:[#allocation13 + $0x5d8] sm:$0xff]
    %v1943 = vld [vmem:[#allocation13 + $0x5e0] sm:$0xff]
    %v1944 = vld [vmem:[#allocation13 + $0x5e8] sm:$0xff]
    %v1945 = vld [vmem:[#allocation13 + $0x5f0] sm:$0xff]
    %v1946 = vld [vmem:[#allocation13 + $0x5f8] sm:$0xff]
    %v1947 = vld [vmem:[%s8] sm:$0x3f]
    %v1949 = vlaneseq
    %v1950 = vshrl.u32 %v1949, 7
    %v1951 = vsub.s32 0, %v1950
    %v1952 = vrot.slane %v1947, %v1951
    %v1953 = vlaneseq
    %v1954 = vshrl.u32 %v1953, 7
    %v1955 = vsub.s32 1, %v1954
    %v1956 = vrot.slane %v1947, %v1955
    %v1957 = vlaneseq
    %v1958 = vshrl.u32 %v1957, 7
    %v1959 = vsub.s32 2, %v1958
    %v1960 = vrot.slane %v1947, %v1959
    %v1961 = vlaneseq
    %v1962 = vshrl.u32 %v1961, 7
    %v1963 = vsub.s32 3, %v1962
    %v1964 = vrot.slane %v1947, %v1963
    %v1965 = vlaneseq
    %v1966 = vshrl.u32 %v1965, 7
    %v1967 = vsub.s32 4, %v1966
    %v1968 = vrot.slane %v1947, %v1967
    %v1969 = vlaneseq
    %v1970 = vshrl.u32 %v1969, 7
    %v1971 = vsub.s32 5, %v1970
    %v1972 = vrot.slane %v1947, %v1971
    %1979 = vmatprep.subr.mxu0 %v1846
    %1980 = vmatpush1.msra.mxu0 %v1845
    %1981 = vmatprep.subr.mxu0 %v1840
    %1982 = vmatpush1.msra.mxu0 %v1839
    %1983 = vmatprep.subr.mxu0 %v1834
    %1984 = vmatpush1.msra.mxu0 %v1833
    %1985 = vmatprep.subr.mxu0 %v1828
    %1986 = vmatpush1.msra.mxu0 %v1827
    %1987 = vmatprep.subr.mxu0 %v1822
    %1988 = vmatpush1.msra.mxu0 %v1821
    %1989 = vmatprep.subr.mxu0 %v1816
    %1990 = vmatpush1.msra.mxu0 %v1815
    %1991 = vmatprep.subr.mxu0 %v1810
    %1992 = vmatpush1.msra.mxu0 %v1809
    %1993 = vmatprep.subr.mxu0 %v1804
    %1994 = vmatpush1.msra.mxu0 %v1803
    %1995 = vmatprep.subr.mxu0 %v1798
    %1996 = vmatpush1.msra.mxu0 %v1797
    %1997 = vmatprep.subr.mxu0 %v1792
    %1998 = vmatpush1.msra.mxu0 %v1791
    %1999 = vmatprep.subr.mxu0 %v1786
    %2000 = vmatpush1.msra.mxu0 %v1785
    %2001 = vmatprep.subr.mxu0 %v1780
    %2002 = vmatpush1.msra.mxu0 %v1779
    %2003 = vmatprep.subr.mxu0 %v1774
    %2004 = vmatpush1.msra.mxu0 %v1773
    %2005 = vmatprep.subr.mxu0 %v1768
    %2006 = vmatpush1.msra.mxu0 %v1767
    %2007 = vmatprep.subr.mxu0 %v1762
    %2008 = vmatpush1.msra.mxu0 %v1761
    %2009 = vmatprep.subr.mxu0 %v1756
    %2010 = vmatpush1.msra.mxu0 %v1755
    %2011 = vmatprep.subr.mxu0 %v1942
    %2012 = vmatpush2.msra.mxu0 %v1941
    %2013 = vmatprep.subr.mxu0 %v1936
    %2014 = vmatpush2.msra.mxu0 %v1935
    %2015 = vmatprep.subr.mxu0 %v1930
    %2016 = vmatpush2.msra.mxu0 %v1929
    %2017 = vmatprep.subr.mxu0 %v1924
    %2018 = vmatpush2.msra.mxu0 %v1923
    %2019 = vmatprep.subr.mxu0 %v1918
    %2020 = vmatpush2.msra.mxu0 %v1917
    %2021 = vmatprep.subr.mxu0 %v1912
    %2022 = vmatpush2.msra.mxu0 %v1911
    %2023 = vmatprep.subr.mxu0 %v1906
    %2024 = vmatpush2.msra.mxu0 %v1905
    %2025 = vmatprep.subr.mxu0 %v1900
    %2026 = vmatpush2.msra.mxu0 %v1899
    %2027 = vmatprep.subr.mxu0 %v1894
    %2028 = vmatpush2.msra.mxu0 %v1893
    %2029 = vmatprep.subr.mxu0 %v1888
    %2030 = vmatpush2.msra.mxu0 %v1887
    %2031 = vmatprep.subr.mxu0 %v1882
    %2032 = vmatpush2.msra.mxu0 %v1881
    %2033 = vmatprep.subr.mxu0 %v1876
    %2034 = vmatpush2.msra.mxu0 %v1875
    %2035 = vmatprep.subr.mxu0 %v1870
    %2036 = vmatpush2.msra.mxu0 %v1869
    %2037 = vmatprep.subr.mxu0 %v1864
    %2038 = vmatpush2.msra.mxu0 %v1863
    %2039 = vmatprep.subr.mxu0 %v1858
    %2040 = vmatpush2.msra.mxu0 %v1857
    %2041 = vmatprep.subr.mxu0 %v1852
    %2042 = vmatpush2.msra.mxu0 %v1851
    %2043 = vmatprep.mubr.f32.mxu0 %v1752
    %2044 = vmatmul.mubr.f32.gmra.mxu0 %v1751
    %v2045 = vpop.f32.mrf.mxu0
    %v2046 = vadd.f32 %v1952, %v2045
    %v2047 = vpop.f32.mrf.mxu0
    %v2048 = vadd.f32 %v1956, %v2047
    %2049 = vmatprep.mubr.f32.mxu0 %v1754
    %2050 = vmatmul.mubr.f32.gmra.mxu0 %v1753
    %v2051 = vpop.f32.mrf.mxu0
    %v2052 = vadd.f32 %v1952, %v2051
    %v2053 = vpop.f32.mrf.mxu0
    %v2054 = vadd.f32 %v1956, %v2053
    %2055 = vdwg.mxu0
    %2056 = vmatprep.subr.mxu0 %v1848
    %2057 = vmatpush1.msra.mxu0 %v1847
    %2058 = vmatprep.subr.mxu0 %v1842
    %2059 = vmatpush1.msra.mxu0 %v1841
    %2060 = vmatprep.subr.mxu0 %v1836
    %2061 = vmatpush1.msra.mxu0 %v1835
    %2062 = vmatprep.subr.mxu0 %v1830
    %2063 = vmatpush1.msra.mxu0 %v1829
    %2064 = vmatprep.subr.mxu0 %v1824
    %2065 = vmatpush1.msra.mxu0 %v1823
    %2066 = vmatprep.subr.mxu0 %v1818
    %2067 = vmatpush1.msra.mxu0 %v1817
    %2068 = vmatprep.subr.mxu0 %v1812
    %2069 = vmatpush1.msra.mxu0 %v1811
    %2070 = vmatprep.subr.mxu0 %v1806
    %2071 = vmatpush1.msra.mxu0 %v1805
    %2072 = vmatprep.subr.mxu0 %v1800
    %2073 = vmatpush1.msra.mxu0 %v1799
    %2074 = vmatprep.subr.mxu0 %v1794
    %2075 = vmatpush1.msra.mxu0 %v1793
    %2076 = vmatprep.subr.mxu0 %v1788
    %2077 = vmatpush1.msra.mxu0 %v1787
    %2078 = vmatprep.subr.mxu0 %v1782
    %2079 = vmatpush1.msra.mxu0 %v1781
    %2080 = vmatprep.subr.mxu0 %v1776
    %2081 = vmatpush1.msra.mxu0 %v1775
    %2082 = vmatprep.subr.mxu0 %v1770
    %2083 = vmatpush1.msra.mxu0 %v1769
    %2084 = vmatprep.subr.mxu0 %v1764
    %2085 = vmatpush1.msra.mxu0 %v1763
    %2086 = vmatprep.subr.mxu0 %v1758
    %2087 = vmatpush1.msra.mxu0 %v1757
    %2088 = vmatprep.subr.mxu0 %v1944
    %2089 = vmatpush2.msra.mxu0 %v1943
    %2090 = vmatprep.subr.mxu0 %v1938
    %2091 = vmatpush2.msra.mxu0 %v1937
    %2092 = vmatprep.subr.mxu0 %v1932
    %2093 = vmatpush2.msra.mxu0 %v1931
    %2094 = vmatprep.subr.mxu0 %v1926
    %2095 = vmatpush2.msra.mxu0 %v1925
    %2096 = vmatprep.subr.mxu0 %v1920
    %2097 = vmatpush2.msra.mxu0 %v1919
    %2098 = vmatprep.subr.mxu0 %v1914
    %2099 = vmatpush2.msra.mxu0 %v1913
    %2100 = vmatprep.subr.mxu0 %v1908
    %2101 = vmatpush2.msra.mxu0 %v1907
    %2102 = vmatprep.subr.mxu0 %v1902
    %2103 = vmatpush2.msra.mxu0 %v1901
    %2104 = vmatprep.subr.mxu0 %v1896
    %2105 = vmatpush2.msra.mxu0 %v1895
    %2106 = vmatprep.subr.mxu0 %v1890
    %2107 = vmatpush2.msra.mxu0 %v1889
    %2108 = vmatprep.subr.mxu0 %v1884
    %2109 = vmatpush2.msra.mxu0 %v1883
    %2110 = vmatprep.subr.mxu0 %v1878
    %2111 = vmatpush2.msra.mxu0 %v1877
    %2112 = vmatprep.subr.mxu0 %v1872
    %2113 = vmatpush2.msra.mxu0 %v1871
    %2114 = vmatprep.subr.mxu0 %v1866
    %2115 = vmatpush2.msra.mxu0 %v1865
    %2116 = vmatprep.subr.mxu0 %v1860
    %2117 = vmatpush2.msra.mxu0 %v1859
    %2118 = vmatprep.subr.mxu0 %v1854
    %2119 = vmatpush2.msra.mxu0 %v1853
    %2120 = vmatprep.mubr.f32.mxu0 %v1752
    %2121 = vmatmul.mubr.f32.gmra.mxu0 %v1751
    %v2122 = vpop.f32.mrf.mxu0
    %v2123 = vadd.f32 %v1960, %v2122
    %v2124 = vpop.f32.mrf.mxu0
    %v2125 = vadd.f32 %v1964, %v2124
    %2126 = vmatprep.mubr.f32.mxu0 %v1754
    %2127 = vmatmul.mubr.f32.gmra.mxu0 %v1753
    %v2128 = vpop.f32.mrf.mxu0
    %v2129 = vadd.f32 %v1960, %v2128
    %v2130 = vpop.f32.mrf.mxu0
    %v2131 = vadd.f32 %v1964, %v2130
    %2132 = vdwg.mxu0
    %2133 = vmatprep.subr.mxu0 %v1850
    %2134 = vmatpush1.msra.mxu0 %v1849
    %2135 = vmatprep.subr.mxu0 %v1844
    %2136 = vmatpush1.msra.mxu0 %v1843
    %2137 = vmatprep.subr.mxu0 %v1838
    %2138 = vmatpush1.msra.mxu0 %v1837
    %2139 = vmatprep.subr.mxu0 %v1832
    %2140 = vmatpush1.msra.mxu0 %v1831
    %2141 = vmatprep.subr.mxu0 %v1826
    %2142 = vmatpush1.msra.mxu0 %v1825
    %2143 = vmatprep.subr.mxu0 %v1820
    %2144 = vmatpush1.msra.mxu0 %v1819
    %2145 = vmatprep.subr.mxu0 %v1814
    %2146 = vmatpush1.msra.mxu0 %v1813
    %2147 = vmatprep.subr.mxu0 %v1808
    %2148 = vmatpush1.msra.mxu0 %v1807
    %2149 = vmatprep.subr.mxu0 %v1802
    %2150 = vmatpush1.msra.mxu0 %v1801
    %2151 = vmatprep.subr.mxu0 %v1796
    %2152 = vmatpush1.msra.mxu0 %v1795
    %2153 = vmatprep.subr.mxu0 %v1790
    %2154 = vmatpush1.msra.mxu0 %v1789
    %2155 = vmatprep.subr.mxu0 %v1784
    %2156 = vmatpush1.msra.mxu0 %v1783
    %2157 = vmatprep.subr.mxu0 %v1778
    %2158 = vmatpush1.msra.mxu0 %v1777
    %2159 = vmatprep.subr.mxu0 %v1772
    %2160 = vmatpush1.msra.mxu0 %v1771
    %2161 = vmatprep.subr.mxu0 %v1766
    %2162 = vmatpush1.msra.mxu0 %v1765
    %2163 = vmatprep.subr.mxu0 %v1760
    %2164 = vmatpush1.msra.mxu0 %v1759
    %2165 = vmatprep.subr.mxu0 %v1946
    %2166 = vmatpush2.msra.mxu0 %v1945
    %2167 = vmatprep.subr.mxu0 %v1940
    %2168 = vmatpush2.msra.mxu0 %v1939
    %2169 = vmatprep.subr.mxu0 %v1934
    %2170 = vmatpush2.msra.mxu0 %v1933
    %2171 = vmatprep.subr.mxu0 %v1928
    %2172 = vmatpush2.msra.mxu0 %v1927
    %2173 = vmatprep.subr.mxu0 %v1922
    %2174 = vmatpush2.msra.mxu0 %v1921
    %2175 = vmatprep.subr.mxu0 %v1916
    %2176 = vmatpush2.msra.mxu0 %v1915
    %2177 = vmatprep.subr.mxu0 %v1910
    %2178 = vmatpush2.msra.mxu0 %v1909
    %2179 = vmatprep.subr.mxu0 %v1904
    %2180 = vmatpush2.msra.mxu0 %v1903
    %2181 = vmatprep.subr.mxu0 %v1898
    %2182 = vmatpush2.msra.mxu0 %v1897
    %2183 = vmatprep.subr.mxu0 %v1892
    %2184 = vmatpush2.msra.mxu0 %v1891
    %2185 = vmatprep.subr.mxu0 %v1886
    %2186 = vmatpush2.msra.mxu0 %v1885
    %2187 = vmatprep.subr.mxu0 %v1880
    %2188 = vmatpush2.msra.mxu0 %v1879
    %2189 = vmatprep.subr.mxu0 %v1874
    %2190 = vmatpush2.msra.mxu0 %v1873
    %2191 = vmatprep.subr.mxu0 %v1868
    %2192 = vmatpush2.msra.mxu0 %v1867
    %2193 = vmatprep.subr.mxu0 %v1862
    %2194 = vmatpush2.msra.mxu0 %v1861
    %2195 = vmatprep.subr.mxu0 %v1856
    %2196 = vmatpush2.msra.mxu0 %v1855
    %2197 = vmatprep.mubr.f32.mxu0 %v1752
    %2198 = vmatmul.mubr.f32.gmra.mxu0 %v1751
    %v2199 = vpop.f32.mrf.mxu0
    %v2200 = vadd.f32 %v1968, %v2199
    %v2201 = vpop.f32.mrf.mxu0
    %v2202 = vadd.f32 %v1972, %v2201
    %2203 = vmatprep.mubr.f32.mxu0 %v1754
    %2204 = vmatmul.mubr.f32.gmra.mxu0 %v1753
    %v2205 = vpop.f32.mrf.mxu0
    %v2206 = vadd.f32 %v1968, %v2205
    %v2207 = vpop.f32.mrf.mxu0
    %v2208 = vadd.f32 %v1972, %v2207
    %2209 = vdwg.mxu0
    %2210 = vmatprep.subr.mxu0 0.0
    %2211 = vmatpush1.xpose.msra.mxu0 0.0
    %2212 = vmatprep.subr.mxu0 0.0
    %2213 = vmatpush1.xpose.msra.mxu0 0.0
    %2214 = vmatprep.subr.mxu0 0.0
    %2215 = vmatpush1.xpose.msra.mxu0 0.0
    %2216 = vmatprep.subr.mxu0 0.0
    %2217 = vmatpush1.xpose.msra.mxu0 0.0
    %2218 = vmatprep.subr.mxu0 0.0
    %2219 = vmatpush1.xpose.msra.mxu0 0.0
    %2220 = vmatprep.subr.mxu0 0.0
    %2221 = vmatpush1.xpose.msra.mxu0 0.0
    %2222 = vmatprep.subr.mxu0 0.0
    %2223 = vmatpush1.xpose.msra.mxu0 0.0
    %2224 = vmatprep.subr.mxu0 0.0
    %2225 = vmatpush1.xpose.msra.mxu0 0.0
    %2226 = vmatprep.subr.mxu0 0.0
    %2227 = vmatpush1.xpose.msra.mxu0 0.0
    %2228 = vmatprep.subr.mxu0 0.0
    %2229 = vmatpush1.xpose.msra.mxu0 0.0
    %2230 = vmatprep.subr.mxu0 0.0
    %2231 = vmatpush1.xpose.msra.mxu0 0.0
    %2232 = vmatprep.subr.mxu0 0.0
    %2233 = vmatpush1.xpose.msra.mxu0 0.0
    %2234 = vmatprep.subr.mxu0 0.0
    %2235 = vmatpush1.xpose.msra.mxu0 0.0
    %2236 = vmatprep.subr.mxu0 0.0
    %2237 = vmatpush1.xpose.msra.mxu0 0.0
    %2238 = vmatprep.subr.mxu0 %v2054
    %2239 = vmatpush1.xpose.msra.mxu0 %v2052
    %2240 = vmatprep.subr.mxu0 %v2048
    %2241 = vmatpush1.xpose.msra.mxu0 %v2046
    %2242 = vmatprep.subr.mxu0 0.0
    %2243 = vmatpush2.xpose.msra.mxu0 0.0
    %2244 = vmatprep.subr.mxu0 0.0
    %2245 = vmatpush2.xpose.msra.mxu0 0.0
    %2246 = vmatprep.subr.mxu0 0.0
    %2247 = vmatpush2.xpose.msra.mxu0 0.0
    %2248 = vmatprep.subr.mxu0 0.0
    %2249 = vmatpush2.xpose.msra.mxu0 0.0
    %2250 = vmatprep.subr.mxu0 0.0
    %2251 = vmatpush2.xpose.msra.mxu0 0.0
    %2252 = vmatprep.subr.mxu0 0.0
    %2253 = vmatpush2.xpose.msra.mxu0 0.0
    %2254 = vmatprep.subr.mxu0 0.0
    %2255 = vmatpush2.xpose.msra.mxu0 0.0
    %2256 = vmatprep.subr.mxu0 0.0
    %2257 = vmatpush2.xpose.msra.mxu0 0.0
    %2258 = vmatprep.subr.mxu0 0.0
    %2259 = vmatpush2.xpose.msra.mxu0 0.0
    %2260 = vmatprep.subr.mxu0 0.0
    %2261 = vmatpush2.xpose.msra.mxu0 0.0
    %2262 = vmatprep.subr.mxu0 0.0
    %2263 = vmatpush2.xpose.msra.mxu0 0.0
    %2264 = vmatprep.subr.mxu0 0.0
    %2265 = vmatpush2.xpose.msra.mxu0 0.0
    %2266 = vmatprep.subr.mxu0 0.0
    %2267 = vmatpush2.xpose.msra.mxu0 0.0
    %2268 = vmatprep.subr.mxu0 0.0
    %2269 = vmatpush2.xpose.msra.mxu0 0.0
    %2270 = vmatprep.subr.mxu0 0.0
    %2271 = vmatpush2.xpose.msra.mxu0 0.0
    %2272 = vmatprep.subr.mxu0 0.0
    %2273 = vmatpush2.xpose.msra.mxu0 0.0
    %2274 = vmatprep.mubr.f32.mxu0 %v1013
    %2275 = vmatmul.mubr.f32.gmra.mxu0 %v1011
    %v2276 = vpop.f32.mrf.mxu0
    %v2277 = vadd.f32 0.0, %v2276
    %v2278 = vpop.f32.mrf.mxu0
    %2279 = vmatprep.mubr.f32.mxu0 %v1019
    %2280 = vmatmul.mubr.f32.gmra.mxu0 %v1017
    %v2281 = vpop.f32.mrf.mxu0
    %v2282 = vadd.f32 0.0, %v2281
    %v2283 = vpop.f32.mrf.mxu0
    %2284 = vdwg.mxu0
    %2285 = vmatprep.subr.mxu0 0.0
    %2286 = vmatpush1.xpose.msra.mxu0 0.0
    %2287 = vmatprep.subr.mxu0 0.0
    %2288 = vmatpush1.xpose.msra.mxu0 0.0
    %2289 = vmatprep.subr.mxu0 0.0
    %2290 = vmatpush1.xpose.msra.mxu0 0.0
    %2291 = vmatprep.subr.mxu0 0.0
    %2292 = vmatpush1.xpose.msra.mxu0 0.0
    %2293 = vmatprep.subr.mxu0 0.0
    %2294 = vmatpush1.xpose.msra.mxu0 0.0
    %2295 = vmatprep.subr.mxu0 0.0
    %2296 = vmatpush1.xpose.msra.mxu0 0.0
    %2297 = vmatprep.subr.mxu0 0.0
    %2298 = vmatpush1.xpose.msra.mxu0 0.0
    %2299 = vmatprep.subr.mxu0 0.0
    %2300 = vmatpush1.xpose.msra.mxu0 0.0
    %2301 = vmatprep.subr.mxu0 0.0
    %2302 = vmatpush1.xpose.msra.mxu0 0.0
    %2303 = vmatprep.subr.mxu0 0.0
    %2304 = vmatpush1.xpose.msra.mxu0 0.0
    %2305 = vmatprep.subr.mxu0 0.0
    %2306 = vmatpush1.xpose.msra.mxu0 0.0
    %2307 = vmatprep.subr.mxu0 0.0
    %2308 = vmatpush1.xpose.msra.mxu0 0.0
    %2309 = vmatprep.subr.mxu0 0.0
    %2310 = vmatpush1.xpose.msra.mxu0 0.0
    %2311 = vmatprep.subr.mxu0 0.0
    %2312 = vmatpush1.xpose.msra.mxu0 0.0
    %2313 = vmatprep.subr.mxu0 %v2131
    %2314 = vmatpush1.xpose.msra.mxu0 %v2129
    %2315 = vmatprep.subr.mxu0 %v2125
    %2316 = vmatpush1.xpose.msra.mxu0 %v2123
    %2317 = vmatprep.subr.mxu0 0.0
    %2318 = vmatpush2.xpose.msra.mxu0 0.0
    %2319 = vmatprep.subr.mxu0 0.0
    %2320 = vmatpush2.xpose.msra.mxu0 0.0
    %2321 = vmatprep.subr.mxu0 0.0
    %2322 = vmatpush2.xpose.msra.mxu0 0.0
    %2323 = vmatprep.subr.mxu0 0.0
    %2324 = vmatpush2.xpose.msra.mxu0 0.0
    %2325 = vmatprep.subr.mxu0 0.0
    %2326 = vmatpush2.xpose.msra.mxu0 0.0
    %2327 = vmatprep.subr.mxu0 0.0
    %2328 = vmatpush2.xpose.msra.mxu0 0.0
    %2329 = vmatprep.subr.mxu0 0.0
    %2330 = vmatpush2.xpose.msra.mxu0 0.0
    %2331 = vmatprep.subr.mxu0 0.0
    %2332 = vmatpush2.xpose.msra.mxu0 0.0
    %2333 = vmatprep.subr.mxu0 0.0
    %2334 = vmatpush2.xpose.msra.mxu0 0.0
    %2335 = vmatprep.subr.mxu0 0.0
    %2336 = vmatpush2.xpose.msra.mxu0 0.0
    %2337 = vmatprep.subr.mxu0 0.0
    %2338 = vmatpush2.xpose.msra.mxu0 0.0
    %2339 = vmatprep.subr.mxu0 0.0
    %2340 = vmatpush2.xpose.msra.mxu0 0.0
    %2341 = vmatprep.subr.mxu0 0.0
    %2342 = vmatpush2.xpose.msra.mxu0 0.0
    %2343 = vmatprep.subr.mxu0 0.0
    %2344 = vmatpush2.xpose.msra.mxu0 0.0
    %2345 = vmatprep.subr.mxu0 0.0
    %2346 = vmatpush2.xpose.msra.mxu0 0.0
    %2347 = vmatprep.subr.mxu0 0.0
    %2348 = vmatpush2.xpose.msra.mxu0 0.0
    %2349 = vmatprep.mubr.f32.mxu0 %v1090
    %2350 = vmatmul.mubr.f32.gmra.mxu0 %v1088
    %v2351 = vpop.f32.mrf.mxu0
    %v2352 = vadd.f32 %v2277, %v2351
    %v2353 = vpop.f32.mrf.mxu0
    %2354 = vmatprep.mubr.f32.mxu0 %v1096
    %2355 = vmatmul.mubr.f32.gmra.mxu0 %v1094
    %v2356 = vpop.f32.mrf.mxu0
    %v2357 = vadd.f32 %v2282, %v2356
    %v2358 = vpop.f32.mrf.mxu0
    %2359 = vdwg.mxu0
    %2360 = vmatprep.subr.mxu0 0.0
    %2361 = vmatpush1.xpose.msra.mxu0 0.0
    %2362 = vmatprep.subr.mxu0 0.0
    %2363 = vmatpush1.xpose.msra.mxu0 0.0
    %2364 = vmatprep.subr.mxu0 0.0
    %2365 = vmatpush1.xpose.msra.mxu0 0.0
    %2366 = vmatprep.subr.mxu0 0.0
    %2367 = vmatpush1.xpose.msra.mxu0 0.0
    %2368 = vmatprep.subr.mxu0 0.0
    %2369 = vmatpush1.xpose.msra.mxu0 0.0
    %2370 = vmatprep.subr.mxu0 0.0
    %2371 = vmatpush1.xpose.msra.mxu0 0.0
    %2372 = vmatprep.subr.mxu0 0.0
    %2373 = vmatpush1.xpose.msra.mxu0 0.0
    %2374 = vmatprep.subr.mxu0 0.0
    %2375 = vmatpush1.xpose.msra.mxu0 0.0
    %2376 = vmatprep.subr.mxu0 0.0
    %2377 = vmatpush1.xpose.msra.mxu0 0.0
    %2378 = vmatprep.subr.mxu0 0.0
    %2379 = vmatpush1.xpose.msra.mxu0 0.0
    %2380 = vmatprep.subr.mxu0 0.0
    %2381 = vmatpush1.xpose.msra.mxu0 0.0
    %2382 = vmatprep.subr.mxu0 0.0
    %2383 = vmatpush1.xpose.msra.mxu0 0.0
    %2384 = vmatprep.subr.mxu0 0.0
    %2385 = vmatpush1.xpose.msra.mxu0 0.0
    %2386 = vmatprep.subr.mxu0 0.0
    %2387 = vmatpush1.xpose.msra.mxu0 0.0
    %2388 = vmatprep.subr.mxu0 %v2208
    %2389 = vmatpush1.xpose.msra.mxu0 %v2206
    %2390 = vmatprep.subr.mxu0 %v2202
    %2391 = vmatpush1.xpose.msra.mxu0 %v2200
    %2392 = vmatprep.subr.mxu0 0.0
    %2393 = vmatpush2.xpose.msra.mxu0 0.0
    %2394 = vmatprep.subr.mxu0 0.0
    %2395 = vmatpush2.xpose.msra.mxu0 0.0
    %2396 = vmatprep.subr.mxu0 0.0
    %2397 = vmatpush2.xpose.msra.mxu0 0.0
    %2398 = vmatprep.subr.mxu0 0.0
    %2399 = vmatpush2.xpose.msra.mxu0 0.0
    %2400 = vmatprep.subr.mxu0 0.0
    %2401 = vmatpush2.xpose.msra.mxu0 0.0
    %2402 = vmatprep.subr.mxu0 0.0
    %2403 = vmatpush2.xpose.msra.mxu0 0.0
    %2404 = vmatprep.subr.mxu0 0.0
    %2405 = vmatpush2.xpose.msra.mxu0 0.0
    %2406 = vmatprep.subr.mxu0 0.0
    %2407 = vmatpush2.xpose.msra.mxu0 0.0
    %2408 = vmatprep.subr.mxu0 0.0
    %2409 = vmatpush2.xpose.msra.mxu0 0.0
    %2410 = vmatprep.subr.mxu0 0.0
    %2411 = vmatpush2.xpose.msra.mxu0 0.0
    %2412 = vmatprep.subr.mxu0 0.0
    %2413 = vmatpush2.xpose.msra.mxu0 0.0
    %2414 = vmatprep.subr.mxu0 0.0
    %2415 = vmatpush2.xpose.msra.mxu0 0.0
    %2416 = vmatprep.subr.mxu0 0.0
    %2417 = vmatpush2.xpose.msra.mxu0 0.0
    %2418 = vmatprep.subr.mxu0 0.0
    %2419 = vmatpush2.xpose.msra.mxu0 0.0
    %2420 = vmatprep.subr.mxu0 0.0
    %2421 = vmatpush2.xpose.msra.mxu0 0.0
    %2422 = vmatprep.subr.mxu0 0.0
    %2423 = vmatpush2.xpose.msra.mxu0 0.0
    %2424 = vmatprep.mubr.f32.mxu0 %v1167
    %2425 = vmatmul.mubr.f32.gmra.mxu0 %v1165
    %v2426 = vpop.f32.mrf.mxu0
    %v2427 = vadd.f32 %v2352, %v2426
    %v2428 = vpop.f32.mrf.mxu0
    %2429 = vmatprep.mubr.f32.mxu0 %v1173
    %2430 = vmatmul.mubr.f32.gmra.mxu0 %v1171
    %v2431 = vpop.f32.mrf.mxu0
    %v2432 = vadd.f32 %v2357, %v2431
    %v2433 = vpop.f32.mrf.mxu0
    %2434 = vdwg.mxu0
    %vm2435 = vcmask 130048
    %2436 = vst.msk [vmem:[#allocation14] sm:$0xff] %vm2435, %v2427
    %2437 = vst.msk [vmem:[#allocation14 + $0x8] sm:$0xff] %vm2435, %v2432
    // Predicated region
    $region66: #{tpu_custom_call.1} parent=1 // pred_check
      _
    $region67: #{tpu_custom_call.1} parent=1 // pred_check_branch
      %2439 = sbr.rel (0) target = $region69
    $region68: #{tpu_custom_call.1} parent=1 // pred_region
      %s2441 = ssub.s32 256, 256
      %2442 = vsyncadd [#allocation4], %s2441
      %s2443 = sshll.u32 [#allocation14], 4
      %s2444 = int_to_ptr.vmem [resolvable:$true] %s2443
      %2449 = dma.vmem_to_hbm [thread:$0]  %s2444, 256, %s9, [#allocation4], 128, 128, 8
    $region69: #{tpu_custom_call.1} parent=1 // pred_fallthru
      _
    // Predicated region
    $region70: #{tpu_custom_call.1} parent=1 // pred_check
      _
    $region71: #{tpu_custom_call.1} parent=1 // pred_check_branch
      %2451 = sbr.rel (0) target = $region73
    $region72: #{tpu_custom_call.1} parent=1 // pred_region
      %2452 = dma.done [#allocation4], 256
    $region73: #{tpu_custom_call.1} parent=1 // pred_fallthru
      _
    %2453 = vsyncpa [#allocation3], 1
    %2454 = vsyncpa [#allocation6], 1
    %2455 = vsyncpa [#allocation9], 1
    %2456 = vsyncpa [#allocation12], 1
    %2457 = vsyncpa [#allocation4], 1

</llo_original>
